<compile_context>
chip_gen: v7x
topology: tpu7x:2x2x1
jax: 0.10.0
libtpu: 0.0.40
codegen_flags: <defaults>
</compile_context>

<pallas_src>
import numpy as np

import jax
import jax.numpy as jnp
from jax.experimental import pallas as pl
from jax.experimental.pallas import tpu as pltpu


# -----------------------------------------------------------------------------
# Layout constants
# -----------------------------------------------------------------------------
# conv1 output is kept per parity class (a, b) = (oh % 2, ow % 2): a 10x10 grid
# flattened with row stride 11 -> width 109 (valid p = u*11 + v, u, v <= 9).
_H1_W = 109
# conv2 output: 9x9 grid flattened with row stride 11 -> width 97
# (valid p = i*11 + j, i, j <= 8).  Remaining lanes are garbage and are masked
# exactly by zero columns in the packed fc3 weights.
_H2_W = 97


# -----------------------------------------------------------------------------
# Fused kernel: conv1 + conv2 + fc3 + output head, everything in VMEM.
# -----------------------------------------------------------------------------
def _dqn_kernel(xs_ref, w1_ref, b1_ref, w2_ref, b2_ref, w3_ref, b3_ref,
                w4_ref, b4_ref, o_ref):
    f32 = jnp.float32
    bf16 = jnp.bfloat16

    # ---- conv1 (8x8, stride 4) ------------------------------------------------
    # xs_ref: (256, 121) bf16 = space-to-depth(8) input, row = c*64 + bi*8 + bj,
    #         col = u*11 + v (block coordinates).
    # w1_ref: (4, 64, 256) bf16, one matrix per 2x2 "block tap" (di, dj); rows
    #         are (parity class)*16 + out_channel; unused entries are zero.
    # Result h1: (64, 109), row = (a*2 + b)*16 + channel, col = u*11 + v.
    xs = xs_ref[...]
    h1 = jnp.zeros((64, _H1_W), f32)
    for di in (0, 1):
        for dj in (0, 1):
            s = di * 11 + dj
            h1 = h1 + jnp.dot(w1_ref[di * 2 + dj], xs[:, s:s + _H1_W],
                              preferred_element_type=f32)
    h1 = jnp.maximum(h1 + b1_ref[...], 0.0).astype(bf16)    # (64, 109) bf16

    # ---- conv2 (4x4, stride 2) ------------------------------------------------
    # With conv1 kept per parity class, conv2 is a 2x2 / stride-1 conv over the
    # class grids: again 4 shift+matmul accumulations, no strided access.
    h2 = jnp.zeros((32, _H2_W), f32)
    for di in (0, 1):
        for dj in (0, 1):
            s = di * 11 + dj
            h2 = h2 + jnp.dot(w2_ref[di * 2 + dj], h1[:, s:s + _H2_W],
                              preferred_element_type=f32)
    h2 = jnp.maximum(h2 + b2_ref[...], 0.0)                  # (32, 97) f32

    # ---- fc3 (2592 -> 256), bf16 weights, f32 accumulation ---------------------
    # w3_ref: (32, 97, 256); column p = i*11 + j holds the PyTorch-flatten
    # column c*81 + i*9 + j, garbage lanes hold zeros (exact masking).
    # 8 independent accumulators -> no 32-deep serial dot+add chain; the MXU
    # streams the 32 weight slabs back-to-back and the partials are tree-summed.
    h2b = h2.astype(bf16)                                    # hoisted cast
    accs = []
    for c in range(32):
        p = jnp.dot(h2b[c:c + 1, :], w3_ref[c], preferred_element_type=f32)
        if c < 8:
            accs.append(p)
        else:
            accs[c % 8] = accs[c % 8] + p
    while len(accs) > 1:                                     # tree sum, depth 3
        accs = [accs[i] + accs[i + 1] for i in range(0, len(accs), 2)]
    h3 = jnp.maximum(accs[0] + b3_ref[...], 0.0).astype(bf16)   # (1, 256) bf16

    # ---- output head (256 -> 6), padded to 128 lanes for a dense store ---------
    o_ref[...] = (jnp.dot(h3, w4_ref[...], preferred_element_type=f32)
                  + b4_ref[...]).astype(o_ref.dtype)


# -----------------------------------------------------------------------------
# One-time (init) weight re-packing into the kernel's layouts.
# -----------------------------------------------------------------------------
def prepare_params(params):
    w1 = np.asarray(params["conv1_w"], np.float32)    # (16, 4, 8, 8)
    b1 = np.asarray(params["conv1_b"], np.float32)    # (16,)
    w2 = np.asarray(params["conv2_w"], np.float32)    # (32, 16, 4, 4)
    b2 = np.asarray(params["conv2_b"], np.float32)    # (32,)
    w3 = np.asarray(params["fc3_w"], np.float32)      # (256, 2592)
    b3 = np.asarray(params["fc3_b"], np.float32)      # (256,)
    w4 = np.asarray(params["out_w"], np.float32)      # (6, 256)
    b4 = np.asarray(params["out_b"], np.float32)      # (6,)

    # conv1: scatter the 8x8 kernel into 4 block-tap matrices over the
    # space-to-depth(8) channel index c256 = c*64 + bi*8 + bj, with output rows
    # grouped by output parity class (a, b) = (oh % 2, ow % 2).
    W1 = np.zeros((4, 64, 256), np.float32)
    for a in range(2):
        for b in range(2):
            blk = (a * 2 + b) * 16
            for ki in range(8):
                for kj in range(8):
                    sr, sc = 4 * a + ki, 4 * b + kj
                    di, bi = sr // 8, sr % 8
                    dj, bj = sc // 8, sc % 8
                    for c in range(4):
                        W1[di * 2 + dj, blk:blk + 16,
                           c * 64 + bi * 8 + bj] = w1[:, c, ki, kj]
    B1 = np.tile(b1, 4).reshape(64, 1)                # bias per class row block

    # conv2: group the 4x4 kernel by 2x2 block tap (di, dj); input rows are
    # (class)*16 + in_channel, matching conv1's packed output.
    W2 = np.zeros((4, 32, 64), np.float32)
    for di in range(2):
        for dj in range(2):
            for a in range(2):
                for b in range(2):
                    W2[di * 2 + dj, :, (a * 2 + b) * 16:(a * 2 + b + 1) * 16] = \
                        w2[:, :, 2 * di + a, 2 * dj + b]
    B2 = b2.reshape(32, 1)

    # fc3: permute columns once so they line up with the kernel's (32, 97)
    # channel-major / stride-11 activation layout; garbage lanes get zeros.
    w3r = w3.reshape(256, 32, 9, 9).transpose(1, 2, 3, 0)   # (32, 9, 9, 256)
    w3p = np.zeros((32, 9, 11, 256), np.float32)
    w3p[:, :, :9, :] = w3r
    W3 = w3p.reshape(32, 99, 256)[:, :_H2_W, :]             # (32, 97, 256)
    B3 = b3.reshape(1, 256)

    # output head: pre-transposed and zero-padded to 128 lanes.
    W4 = np.zeros((256, 128), np.float32)
    W4[:, :6] = w4.T
    B4 = np.zeros((1, 128), np.float32)
    B4[0, :6] = b4

    # All matmul operands stored as bf16 (f32 accumulation on the MXU);
    # biases stay f32 (added post-accumulation on the VPU).
    return {
        "W1": jnp.asarray(W1, dtype=jnp.bfloat16), "B1": jnp.asarray(B1),
        "W2": jnp.asarray(W2, dtype=jnp.bfloat16), "B2": jnp.asarray(B2),
        "W3": jnp.asarray(W3, dtype=jnp.bfloat16), "B3": jnp.asarray(B3),
        "W4": jnp.asarray(W4, dtype=jnp.bfloat16), "B4": jnp.asarray(B4),
    }


# -----------------------------------------------------------------------------
# Forward pass
# -----------------------------------------------------------------------------
def _dqn_forward(packed, x):
    assert x.shape == (1, 4, 84, 84)
    # Single cheap per-call layout op (~62 KB in bf16): pad 84->88 and
    # space-to-depth by 8, flattened to (256, 121), cast to bf16.
    # TODO(synk): move this pad + space-to-depth (and the final 6-lane slice)
    # into the kernel with strided sublane copies in VMEM to drop the separate
    # XLA fusion from the critical path.
    xp = jnp.pad(x[0], ((0, 0), (0, 4), (0, 4)))                       # (4, 88, 88)
    xs = xp.reshape(4, 11, 8, 11, 8).transpose(0, 2, 4, 1, 3)          # (4,8,8,11,11)
    xs = xs.reshape(256, 121).astype(jnp.bfloat16)

    vmem = pl.BlockSpec(memory_space=pltpu.MemorySpace.VMEM)
    out = pl.pallas_call(
        _dqn_kernel,
        out_shape=jax.ShapeDtypeStruct((1, 128), jnp.float32),
        in_specs=[vmem] * 9,
        out_specs=vmem,
        cost_estimate=pl.CostEstimate(flops=18_000_000, transcendentals=0,
                                      bytes_accessed=2_000_000),
    )(xs, packed["W1"], packed["B1"], packed["W2"], packed["B2"],
      packed["W3"], packed["B3"], packed["W4"], packed["B4"])
    # TODO(synk): for batch>1 acting loops, add a 'parallel' batch grid axis
    # (fills MXU rows, engages v7x's second TensorCore) and keep the ~1.8 MB
    # of weights resident / prefetched across calls to amortize the DMA.
    return out[:, :6]


dqn_forward = jax.jit(_dqn_forward)


# -----------------------------------------------------------------------------
# Reference init + pure-JAX reference forward (for correctness check)
# -----------------------------------------------------------------------------
def init_params(key):
    """Deterministic PyTorch-default-style init (uniform +-1/sqrt(fan_in))."""
    ks = jax.random.split(key, 8)

    def u(k, shape, fan_in):
        bound = 1.0 / jnp.sqrt(jnp.float32(fan_in))
        return jax.random.uniform(k, shape, jnp.float32, -bound, bound)

    return {
        "conv1_w": u(ks[0], (16, 4, 8, 8), 4 * 8 * 8),
        "conv1_b": u(ks[1], (16,), 4 * 8 * 8),
        "conv2_w": u(ks[2], (32, 16, 4, 4), 16 * 4 * 4),
        "conv2_b": u(ks[3], (32,), 16 * 4 * 4),
        "fc3_w":   u(ks[4], (256, 2592), 2592),
        "fc3_b":   u(ks[5], (256,), 2592),
        "out_w":   u(ks[6], (6, 256), 256),
        "out_b":   u(ks[7], (6,), 256),
    }


def dqn_reference(params, x):
    """Pure-JAX reference with the kernel's precision model: bf16 matmul
    operands (weights and activations), f32 accumulation."""
    dn = ("NCHW", "OIHW", "NCHW")
    hp = jax.lax.Precision.HIGHEST

    def b(v):  # bf16-round operands, keep math in f32 (matches MXU bf16/f32)
        return v.astype(jnp.bfloat16).astype(jnp.float32)

    h1 = jax.lax.conv_general_dilated(b(x), b(params["conv1_w"]), (4, 4), "VALID",
                                      dimension_numbers=dn, precision=hp)
    h1 = jax.nn.relu(h1 + params["conv1_b"][None, :, None, None])
    h2 = jax.lax.conv_general_dilated(b(h1), b(params["conv2_w"]), (2, 2), "VALID",
                                      dimension_numbers=dn, precision=hp)
    h2 = jax.nn.relu(h2 + params["conv2_b"][None, :, None, None])
    flat = h2.reshape(1, 2592)
    h3 = jax.nn.relu(jnp.dot(b(flat), b(params["fc3_w"]).T, precision=hp)
                     + params["fc3_b"][None, :])
    return (jnp.dot(b(h3), b(params["out_w"]).T, precision=hp)
            + params["out_b"][None, :])


if __name__ == "__main__":
    key = jax.random.PRNGKey(0)
    pkey, xkey = jax.random.split(key)
    params = init_params(pkey)
    packed = prepare_params(params)      # one-time weight re-layout

    # fc3 hard-codes 2592 = 32*9*9, which forces input (1, 4, 84, 84).
    x = jax.random.normal(xkey, (1, 4, 84, 84), jnp.float32)

    y = dqn_forward(packed, x)
    jax.block_until_ready(y)

    y_ref = dqn_reference(params, x)
    assert y.shape == (1, 6) and y.dtype == jnp.float32
    assert jnp.allclose(y, y_ref, atol=5e-3, rtol=5e-2), (y, y_ref)
    print("KERNEL_OK")
</pallas_src>

<mosaic_0001>
module attributes {stable_mosaic.version = 11 : i64} {
  func.func @_dqn_kernel(%arg0: memref<256x121xbf16, #tpu.memory_space<vmem>>, %arg1: memref<4x64x256xbf16, #tpu.memory_space<vmem>>, %arg2: memref<64x1xf32, #tpu.memory_space<vmem>>, %arg3: memref<4x32x64xbf16, #tpu.memory_space<vmem>>, %arg4: memref<32x1xf32, #tpu.memory_space<vmem>>, %arg5: memref<32x97x256xbf16, #tpu.memory_space<vmem>>, %arg6: memref<1x256xf32, #tpu.memory_space<vmem>>, %arg7: memref<256x128xbf16, #tpu.memory_space<vmem>>, %arg8: memref<1x128xf32, #tpu.memory_space<vmem>>, %arg9: memref<1x128xf32, #tpu.memory_space<vmem>>) attributes {dimension_semantics = [], scalar_prefetch = 0 : i64, scratch_operands = 0 : i64, tpu.core_type = #tpu.core_type<tc>} {
    %c0 = arith.constant 0 : index
    %c0_0 = arith.constant 0 : index
    %0 = vector.load %arg0[%c0, %c0_0] : memref<256x121xbf16, #tpu.memory_space<vmem>>, vector<256x121xbf16>
    %cst = arith.constant 0.000000e+00 : f32
    %1 = vector.broadcast %cst : f32 to vector<64x109xf32>
    %c0_1 = arith.constant 0 : index
    %c0_2 = arith.constant 0 : index
    %c0_3 = arith.constant 0 : index
    %2 = vector.load %arg1[%c0_1, %c0_2, %c0_3] : memref<4x64x256xbf16, #tpu.memory_space<vmem>>, vector<1x64x256xbf16>
    %3 = vector.shape_cast %2 : vector<1x64x256xbf16> to vector<64x256xbf16>
    %4 = vector.extract_strided_slice %0 {offsets = [0, 0], sizes = [256, 109], strides = [1, 1]} : vector<256x121xbf16> to vector<256x109xbf16>
    %cst_4 = arith.constant dense<0.000000e+00> : vector<64x109xf32>
    %5 = tpu.matmul %3, %4, %cst_4 {dimension_numbers = #tpu.dot_dimension_numbers<[1], [0], [0], [1], [0, 0, 1, 1], [], []>} : vector<64x256xbf16>, vector<256x109xbf16>, vector<64x109xf32> -> vector<64x109xf32>
    %6 = arith.addf %1, %5 : vector<64x109xf32>
    %c1 = arith.constant 1 : index
    %c0_5 = arith.constant 0 : index
    %c0_6 = arith.constant 0 : index
    %7 = vector.load %arg1[%c1, %c0_5, %c0_6] : memref<4x64x256xbf16, #tpu.memory_space<vmem>>, vector<1x64x256xbf16>
    %8 = vector.shape_cast %7 : vector<1x64x256xbf16> to vector<64x256xbf16>
    %9 = vector.extract_strided_slice %0 {offsets = [0, 1], sizes = [256, 109], strides = [1, 1]} : vector<256x121xbf16> to vector<256x109xbf16>
    %cst_7 = arith.constant dense<0.000000e+00> : vector<64x109xf32>
    %10 = tpu.matmul %8, %9, %cst_7 {dimension_numbers = #tpu.dot_dimension_numbers<[1], [0], [0], [1], [0, 0, 1, 1], [], []>} : vector<64x256xbf16>, vector<256x109xbf16>, vector<64x109xf32> -> vector<64x109xf32>
    %11 = arith.addf %6, %10 : vector<64x109xf32>
    %c2 = arith.constant 2 : index
    %c0_8 = arith.constant 0 : index
    %c0_9 = arith.constant 0 : index
    %12 = vector.load %arg1[%c2, %c0_8, %c0_9] : memref<4x64x256xbf16, #tpu.memory_space<vmem>>, vector<1x64x256xbf16>
    %13 = vector.shape_cast %12 : vector<1x64x256xbf16> to vector<64x256xbf16>
    %14 = vector.extract_strided_slice %0 {offsets = [0, 11], sizes = [256, 109], strides = [1, 1]} : vector<256x121xbf16> to vector<256x109xbf16>
    %cst_10 = arith.constant dense<0.000000e+00> : vector<64x109xf32>
    %15 = tpu.matmul %13, %14, %cst_10 {dimension_numbers = #tpu.dot_dimension_numbers<[1], [0], [0], [1], [0, 0, 1, 1], [], []>} : vector<64x256xbf16>, vector<256x109xbf16>, vector<64x109xf32> -> vector<64x109xf32>
    %16 = arith.addf %11, %15 : vector<64x109xf32>
    %c3 = arith.constant 3 : index
    %c0_11 = arith.constant 0 : index
    %c0_12 = arith.constant 0 : index
    %17 = vector.load %arg1[%c3, %c0_11, %c0_12] : memref<4x64x256xbf16, #tpu.memory_space<vmem>>, vector<1x64x256xbf16>
    %18 = vector.shape_cast %17 : vector<1x64x256xbf16> to vector<64x256xbf16>
    %19 = vector.extract_strided_slice %0 {offsets = [0, 12], sizes = [256, 109], strides = [1, 1]} : vector<256x121xbf16> to vector<256x109xbf16>
    %cst_13 = arith.constant dense<0.000000e+00> : vector<64x109xf32>
    %20 = tpu.matmul %18, %19, %cst_13 {dimension_numbers = #tpu.dot_dimension_numbers<[1], [0], [0], [1], [0, 0, 1, 1], [], []>} : vector<64x256xbf16>, vector<256x109xbf16>, vector<64x109xf32> -> vector<64x109xf32>
    %21 = arith.addf %16, %20 : vector<64x109xf32>
    %c0_14 = arith.constant 0 : index
    %c0_15 = arith.constant 0 : index
    %22 = vector.load %arg2[%c0_14, %c0_15] : memref<64x1xf32, #tpu.memory_space<vmem>>, vector<64x1xf32>
    %23 = vector.broadcast %22 : vector<64x1xf32> to vector<64x109xf32>
    %24 = arith.addf %21, %23 : vector<64x109xf32>
    %cst_16 = arith.constant 0.000000e+00 : f32
    %25 = vector.broadcast %cst_16 : f32 to vector<64x109xf32>
    %26 = arith.maximumf %24, %25 : vector<64x109xf32>
    %27 = arith.truncf %26 : vector<64x109xf32> to vector<64x109xbf16>
    %cst_17 = arith.constant 0.000000e+00 : f32
    %28 = vector.broadcast %cst_17 : f32 to vector<32x97xf32>
    %c0_18 = arith.constant 0 : index
    %c0_19 = arith.constant 0 : index
    %c0_20 = arith.constant 0 : index
    %29 = vector.load %arg3[%c0_18, %c0_19, %c0_20] : memref<4x32x64xbf16, #tpu.memory_space<vmem>>, vector<1x32x64xbf16>
    %30 = vector.shape_cast %29 : vector<1x32x64xbf16> to vector<32x64xbf16>
    %31 = vector.extract_strided_slice %27 {offsets = [0, 0], sizes = [64, 97], strides = [1, 1]} : vector<64x109xbf16> to vector<64x97xbf16>
    %cst_21 = arith.constant dense<0.000000e+00> : vector<32x97xf32>
    %32 = tpu.matmul %30, %31, %cst_21 {dimension_numbers = #tpu.dot_dimension_numbers<[1], [0], [0], [1], [0, 0, 1, 1], [], []>} : vector<32x64xbf16>, vector<64x97xbf16>, vector<32x97xf32> -> vector<32x97xf32>
    %33 = arith.addf %28, %32 : vector<32x97xf32>
    %c1_22 = arith.constant 1 : index
    %c0_23 = arith.constant 0 : index
    %c0_24 = arith.constant 0 : index
    %34 = vector.load %arg3[%c1_22, %c0_23, %c0_24] : memref<4x32x64xbf16, #tpu.memory_space<vmem>>, vector<1x32x64xbf16>
    %35 = vector.shape_cast %34 : vector<1x32x64xbf16> to vector<32x64xbf16>
    %36 = vector.extract_strided_slice %27 {offsets = [0, 1], sizes = [64, 97], strides = [1, 1]} : vector<64x109xbf16> to vector<64x97xbf16>
    %cst_25 = arith.constant dense<0.000000e+00> : vector<32x97xf32>
    %37 = tpu.matmul %35, %36, %cst_25 {dimension_numbers = #tpu.dot_dimension_numbers<[1], [0], [0], [1], [0, 0, 1, 1], [], []>} : vector<32x64xbf16>, vector<64x97xbf16>, vector<32x97xf32> -> vector<32x97xf32>
    %38 = arith.addf %33, %37 : vector<32x97xf32>
    %c2_26 = arith.constant 2 : index
    %c0_27 = arith.constant 0 : index
    %c0_28 = arith.constant 0 : index
    %39 = vector.load %arg3[%c2_26, %c0_27, %c0_28] : memref<4x32x64xbf16, #tpu.memory_space<vmem>>, vector<1x32x64xbf16>
    %40 = vector.shape_cast %39 : vector<1x32x64xbf16> to vector<32x64xbf16>
    %41 = vector.extract_strided_slice %27 {offsets = [0, 11], sizes = [64, 97], strides = [1, 1]} : vector<64x109xbf16> to vector<64x97xbf16>
    %cst_29 = arith.constant dense<0.000000e+00> : vector<32x97xf32>
    %42 = tpu.matmul %40, %41, %cst_29 {dimension_numbers = #tpu.dot_dimension_numbers<[1], [0], [0], [1], [0, 0, 1, 1], [], []>} : vector<32x64xbf16>, vector<64x97xbf16>, vector<32x97xf32> -> vector<32x97xf32>
    %43 = arith.addf %38, %42 : vector<32x97xf32>
    %c3_30 = arith.constant 3 : index
    %c0_31 = arith.constant 0 : index
    %c0_32 = arith.constant 0 : index
    %44 = vector.load %arg3[%c3_30, %c0_31, %c0_32] : memref<4x32x64xbf16, #tpu.memory_space<vmem>>, vector<1x32x64xbf16>
    %45 = vector.shape_cast %44 : vector<1x32x64xbf16> to vector<32x64xbf16>
    %46 = vector.extract_strided_slice %27 {offsets = [0, 12], sizes = [64, 97], strides = [1, 1]} : vector<64x109xbf16> to vector<64x97xbf16>
    %cst_33 = arith.constant dense<0.000000e+00> : vector<32x97xf32>
    %47 = tpu.matmul %45, %46, %cst_33 {dimension_numbers = #tpu.dot_dimension_numbers<[1], [0], [0], [1], [0, 0, 1, 1], [], []>} : vector<32x64xbf16>, vector<64x97xbf16>, vector<32x97xf32> -> vector<32x97xf32>
    %48 = arith.addf %43, %47 : vector<32x97xf32>
    %c0_34 = arith.constant 0 : index
    %c0_35 = arith.constant 0 : index
    %49 = vector.load %arg4[%c0_34, %c0_35] : memref<32x1xf32, #tpu.memory_space<vmem>>, vector<32x1xf32>
    %50 = vector.broadcast %49 : vector<32x1xf32> to vector<32x97xf32>
    %51 = arith.addf %48, %50 : vector<32x97xf32>
    %cst_36 = arith.constant 0.000000e+00 : f32
    %52 = vector.broadcast %cst_36 : f32 to vector<32x97xf32>
    %53 = arith.maximumf %51, %52 : vector<32x97xf32>
    %54 = arith.truncf %53 : vector<32x97xf32> to vector<32x97xbf16>
    %55 = vector.extract_strided_slice %54 {offsets = [0, 0], sizes = [1, 97], strides = [1, 1]} : vector<32x97xbf16> to vector<1x97xbf16>
    %c0_37 = arith.constant 0 : index
    %c0_38 = arith.constant 0 : index
    %c0_39 = arith.constant 0 : index
    %56 = vector.load %arg5[%c0_37, %c0_38, %c0_39] : memref<32x97x256xbf16, #tpu.memory_space<vmem>>, vector<1x97x256xbf16>
    %57 = vector.shape_cast %56 : vector<1x97x256xbf16> to vector<97x256xbf16>
    %cst_40 = arith.constant dense<0.000000e+00> : vector<1x256xf32>
    %58 = tpu.matmul %55, %57, %cst_40 {dimension_numbers = #tpu.dot_dimension_numbers<[1], [0], [0], [1], [0, 0, 1, 1], [], []>} : vector<1x97xbf16>, vector<97x256xbf16>, vector<1x256xf32> -> vector<1x256xf32>
    %59 = vector.extract_strided_slice %54 {offsets = [1, 0], sizes = [1, 97], strides = [1, 1]} : vector<32x97xbf16> to vector<1x97xbf16>
    %c1_41 = arith.constant 1 : index
    %c0_42 = arith.constant 0 : index
    %c0_43 = arith.constant 0 : index
    %60 = vector.load %arg5[%c1_41, %c0_42, %c0_43] : memref<32x97x256xbf16, #tpu.memory_space<vmem>>, vector<1x97x256xbf16>
    %61 = vector.shape_cast %60 : vector<1x97x256xbf16> to vector<97x256xbf16>
    %cst_44 = arith.constant dense<0.000000e+00> : vector<1x256xf32>
    %62 = tpu.matmul %59, %61, %cst_44 {dimension_numbers = #tpu.dot_dimension_numbers<[1], [0], [0], [1], [0, 0, 1, 1], [], []>} : vector<1x97xbf16>, vector<97x256xbf16>, vector<1x256xf32> -> vector<1x256xf32>
    %63 = vector.extract_strided_slice %54 {offsets = [2, 0], sizes = [1, 97], strides = [1, 1]} : vector<32x97xbf16> to vector<1x97xbf16>
    %c2_45 = arith.constant 2 : index
    %c0_46 = arith.constant 0 : index
    %c0_47 = arith.constant 0 : index
    %64 = vector.load %arg5[%c2_45, %c0_46, %c0_47] : memref<32x97x256xbf16, #tpu.memory_space<vmem>>, vector<1x97x256xbf16>
    %65 = vector.shape_cast %64 : vector<1x97x256xbf16> to vector<97x256xbf16>
    %cst_48 = arith.constant dense<0.000000e+00> : vector<1x256xf32>
    %66 = tpu.matmul %63, %65, %cst_48 {dimension_numbers = #tpu.dot_dimension_numbers<[1], [0], [0], [1], [0, 0, 1, 1], [], []>} : vector<1x97xbf16>, vector<97x256xbf16>, vector<1x256xf32> -> vector<1x256xf32>
    %67 = vector.extract_strided_slice %54 {offsets = [3, 0], sizes = [1, 97], strides = [1, 1]} : vector<32x97xbf16> to vector<1x97xbf16>
    %c3_49 = arith.constant 3 : index
    %c0_50 = arith.constant 0 : index
    %c0_51 = arith.constant 0 : index
    %68 = vector.load %arg5[%c3_49, %c0_50, %c0_51] : memref<32x97x256xbf16, #tpu.memory_space<vmem>>, vector<1x97x256xbf16>
    %69 = vector.shape_cast %68 : vector<1x97x256xbf16> to vector<97x256xbf16>
    %cst_52 = arith.constant dense<0.000000e+00> : vector<1x256xf32>
    %70 = tpu.matmul %67, %69, %cst_52 {dimension_numbers = #tpu.dot_dimension_numbers<[1], [0], [0], [1], [0, 0, 1, 1], [], []>} : vector<1x97xbf16>, vector<97x256xbf16>, vector<1x256xf32> -> vector<1x256xf32>
    %71 = vector.extract_strided_slice %54 {offsets = [4, 0], sizes = [1, 97], strides = [1, 1]} : vector<32x97xbf16> to vector<1x97xbf16>
    %c4 = arith.constant 4 : index
    %c0_53 = arith.constant 0 : index
    %c0_54 = arith.constant 0 : index
    %72 = vector.load %arg5[%c4, %c0_53, %c0_54] : memref<32x97x256xbf16, #tpu.memory_space<vmem>>, vector<1x97x256xbf16>
    %73 = vector.shape_cast %72 : vector<1x97x256xbf16> to vector<97x256xbf16>
    %cst_55 = arith.constant dense<0.000000e+00> : vector<1x256xf32>
    %74 = tpu.matmul %71, %73, %cst_55 {dimension_numbers = #tpu.dot_dimension_numbers<[1], [0], [0], [1], [0, 0, 1, 1], [], []>} : vector<1x97xbf16>, vector<97x256xbf16>, vector<1x256xf32> -> vector<1x256xf32>
    %75 = vector.extract_strided_slice %54 {offsets = [5, 0], sizes = [1, 97], strides = [1, 1]} : vector<32x97xbf16> to vector<1x97xbf16>
    %c5 = arith.constant 5 : index
    %c0_56 = arith.constant 0 : index
    %c0_57 = arith.constant 0 : index
    %76 = vector.load %arg5[%c5, %c0_56, %c0_57] : memref<32x97x256xbf16, #tpu.memory_space<vmem>>, vector<1x97x256xbf16>
    %77 = vector.shape_cast %76 : vector<1x97x256xbf16> to vector<97x256xbf16>
    %cst_58 = arith.constant dense<0.000000e+00> : vector<1x256xf32>
    %78 = tpu.matmul %75, %77, %cst_58 {dimension_numbers = #tpu.dot_dimension_numbers<[1], [0], [0], [1], [0, 0, 1, 1], [], []>} : vector<1x97xbf16>, vector<97x256xbf16>, vector<1x256xf32> -> vector<1x256xf32>
    %79 = vector.extract_strided_slice %54 {offsets = [6, 0], sizes = [1, 97], strides = [1, 1]} : vector<32x97xbf16> to vector<1x97xbf16>
    %c6 = arith.constant 6 : index
    %c0_59 = arith.constant 0 : index
    %c0_60 = arith.constant 0 : index
    %80 = vector.load %arg5[%c6, %c0_59, %c0_60] : memref<32x97x256xbf16, #tpu.memory_space<vmem>>, vector<1x97x256xbf16>
    %81 = vector.shape_cast %80 : vector<1x97x256xbf16> to vector<97x256xbf16>
    %cst_61 = arith.constant dense<0.000000e+00> : vector<1x256xf32>
    %82 = tpu.matmul %79, %81, %cst_61 {dimension_numbers = #tpu.dot_dimension_numbers<[1], [0], [0], [1], [0, 0, 1, 1], [], []>} : vector<1x97xbf16>, vector<97x256xbf16>, vector<1x256xf32> -> vector<1x256xf32>
    %83 = vector.extract_strided_slice %54 {offsets = [7, 0], sizes = [1, 97], strides = [1, 1]} : vector<32x97xbf16> to vector<1x97xbf16>
    %c7 = arith.constant 7 : index
    %c0_62 = arith.constant 0 : index
    %c0_63 = arith.constant 0 : index
    %84 = vector.load %arg5[%c7, %c0_62, %c0_63] : memref<32x97x256xbf16, #tpu.memory_space<vmem>>, vector<1x97x256xbf16>
    %85 = vector.shape_cast %84 : vector<1x97x256xbf16> to vector<97x256xbf16>
    %cst_64 = arith.constant dense<0.000000e+00> : vector<1x256xf32>
    %86 = tpu.matmul %83, %85, %cst_64 {dimension_numbers = #tpu.dot_dimension_numbers<[1], [0], [0], [1], [0, 0, 1, 1], [], []>} : vector<1x97xbf16>, vector<97x256xbf16>, vector<1x256xf32> -> vector<1x256xf32>
    %87 = vector.extract_strided_slice %54 {offsets = [8, 0], sizes = [1, 97], strides = [1, 1]} : vector<32x97xbf16> to vector<1x97xbf16>
    %c8 = arith.constant 8 : index
    %c0_65 = arith.constant 0 : index
    %c0_66 = arith.constant 0 : index
    %88 = vector.load %arg5[%c8, %c0_65, %c0_66] : memref<32x97x256xbf16, #tpu.memory_space<vmem>>, vector<1x97x256xbf16>
    %89 = vector.shape_cast %88 : vector<1x97x256xbf16> to vector<97x256xbf16>
    %cst_67 = arith.constant dense<0.000000e+00> : vector<1x256xf32>
    %90 = tpu.matmul %87, %89, %cst_67 {dimension_numbers = #tpu.dot_dimension_numbers<[1], [0], [0], [1], [0, 0, 1, 1], [], []>} : vector<1x97xbf16>, vector<97x256xbf16>, vector<1x256xf32> -> vector<1x256xf32>
    %91 = arith.addf %58, %90 : vector<1x256xf32>
    %92 = vector.extract_strided_slice %54 {offsets = [9, 0], sizes = [1, 97], strides = [1, 1]} : vector<32x97xbf16> to vector<1x97xbf16>
    %c9 = arith.constant 9 : index
    %c0_68 = arith.constant 0 : index
    %c0_69 = arith.constant 0 : index
    %93 = vector.load %arg5[%c9, %c0_68, %c0_69] : memref<32x97x256xbf16, #tpu.memory_space<vmem>>, vector<1x97x256xbf16>
    %94 = vector.shape_cast %93 : vector<1x97x256xbf16> to vector<97x256xbf16>
    %cst_70 = arith.constant dense<0.000000e+00> : vector<1x256xf32>
    %95 = tpu.matmul %92, %94, %cst_70 {dimension_numbers = #tpu.dot_dimension_numbers<[1], [0], [0], [1], [0, 0, 1, 1], [], []>} : vector<1x97xbf16>, vector<97x256xbf16>, vector<1x256xf32> -> vector<1x256xf32>
    %96 = arith.addf %62, %95 : vector<1x256xf32>
    %97 = vector.extract_strided_slice %54 {offsets = [10, 0], sizes = [1, 97], strides = [1, 1]} : vector<32x97xbf16> to vector<1x97xbf16>
    %c10 = arith.constant 10 : index
    %c0_71 = arith.constant 0 : index
    %c0_72 = arith.constant 0 : index
    %98 = vector.load %arg5[%c10, %c0_71, %c0_72] : memref<32x97x256xbf16, #tpu.memory_space<vmem>>, vector<1x97x256xbf16>
    %99 = vector.shape_cast %98 : vector<1x97x256xbf16> to vector<97x256xbf16>
    %cst_73 = arith.constant dense<0.000000e+00> : vector<1x256xf32>
    %100 = tpu.matmul %97, %99, %cst_73 {dimension_numbers = #tpu.dot_dimension_numbers<[1], [0], [0], [1], [0, 0, 1, 1], [], []>} : vector<1x97xbf16>, vector<97x256xbf16>, vector<1x256xf32> -> vector<1x256xf32>
    %101 = arith.addf %66, %100 : vector<1x256xf32>
    %102 = vector.extract_strided_slice %54 {offsets = [11, 0], sizes = [1, 97], strides = [1, 1]} : vector<32x97xbf16> to vector<1x97xbf16>
    %c11 = arith.constant 11 : index
    %c0_74 = arith.constant 0 : index
    %c0_75 = arith.constant 0 : index
    %103 = vector.load %arg5[%c11, %c0_74, %c0_75] : memref<32x97x256xbf16, #tpu.memory_space<vmem>>, vector<1x97x256xbf16>
    %104 = vector.shape_cast %103 : vector<1x97x256xbf16> to vector<97x256xbf16>
    %cst_76 = arith.constant dense<0.000000e+00> : vector<1x256xf32>
    %105 = tpu.matmul %102, %104, %cst_76 {dimension_numbers = #tpu.dot_dimension_numbers<[1], [0], [0], [1], [0, 0, 1, 1], [], []>} : vector<1x97xbf16>, vector<97x256xbf16>, vector<1x256xf32> -> vector<1x256xf32>
    %106 = arith.addf %70, %105 : vector<1x256xf32>
    %107 = vector.extract_strided_slice %54 {offsets = [12, 0], sizes = [1, 97], strides = [1, 1]} : vector<32x97xbf16> to vector<1x97xbf16>
    %c12 = arith.constant 12 : index
    %c0_77 = arith.constant 0 : index
    %c0_78 = arith.constant 0 : index
    %108 = vector.load %arg5[%c12, %c0_77, %c0_78] : memref<32x97x256xbf16, #tpu.memory_space<vmem>>, vector<1x97x256xbf16>
    %109 = vector.shape_cast %108 : vector<1x97x256xbf16> to vector<97x256xbf16>
    %cst_79 = arith.constant dense<0.000000e+00> : vector<1x256xf32>
    %110 = tpu.matmul %107, %109, %cst_79 {dimension_numbers = #tpu.dot_dimension_numbers<[1], [0], [0], [1], [0, 0, 1, 1], [], []>} : vector<1x97xbf16>, vector<97x256xbf16>, vector<1x256xf32> -> vector<1x256xf32>
    %111 = arith.addf %74, %110 : vector<1x256xf32>
    %112 = vector.extract_strided_slice %54 {offsets = [13, 0], sizes = [1, 97], strides = [1, 1]} : vector<32x97xbf16> to vector<1x97xbf16>
    %c13 = arith.constant 13 : index
    %c0_80 = arith.constant 0 : index
    %c0_81 = arith.constant 0 : index
    %113 = vector.load %arg5[%c13, %c0_80, %c0_81] : memref<32x97x256xbf16, #tpu.memory_space<vmem>>, vector<1x97x256xbf16>
    %114 = vector.shape_cast %113 : vector<1x97x256xbf16> to vector<97x256xbf16>
    %cst_82 = arith.constant dense<0.000000e+00> : vector<1x256xf32>
    %115 = tpu.matmul %112, %114, %cst_82 {dimension_numbers = #tpu.dot_dimension_numbers<[1], [0], [0], [1], [0, 0, 1, 1], [], []>} : vector<1x97xbf16>, vector<97x256xbf16>, vector<1x256xf32> -> vector<1x256xf32>
    %116 = arith.addf %78, %115 : vector<1x256xf32>
    %117 = vector.extract_strided_slice %54 {offsets = [14, 0], sizes = [1, 97], strides = [1, 1]} : vector<32x97xbf16> to vector<1x97xbf16>
    %c14 = arith.constant 14 : index
    %c0_83 = arith.constant 0 : index
    %c0_84 = arith.constant 0 : index
    %118 = vector.load %arg5[%c14, %c0_83, %c0_84] : memref<32x97x256xbf16, #tpu.memory_space<vmem>>, vector<1x97x256xbf16>
    %119 = vector.shape_cast %118 : vector<1x97x256xbf16> to vector<97x256xbf16>
    %cst_85 = arith.constant dense<0.000000e+00> : vector<1x256xf32>
    %120 = tpu.matmul %117, %119, %cst_85 {dimension_numbers = #tpu.dot_dimension_numbers<[1], [0], [0], [1], [0, 0, 1, 1], [], []>} : vector<1x97xbf16>, vector<97x256xbf16>, vector<1x256xf32> -> vector<1x256xf32>
    %121 = arith.addf %82, %120 : vector<1x256xf32>
    %122 = vector.extract_strided_slice %54 {offsets = [15, 0], sizes = [1, 97], strides = [1, 1]} : vector<32x97xbf16> to vector<1x97xbf16>
    %c15 = arith.constant 15 : index
    %c0_86 = arith.constant 0 : index
    %c0_87 = arith.constant 0 : index
    %123 = vector.load %arg5[%c15, %c0_86, %c0_87] : memref<32x97x256xbf16, #tpu.memory_space<vmem>>, vector<1x97x256xbf16>
    %124 = vector.shape_cast %123 : vector<1x97x256xbf16> to vector<97x256xbf16>
    %cst_88 = arith.constant dense<0.000000e+00> : vector<1x256xf32>
    %125 = tpu.matmul %122, %124, %cst_88 {dimension_numbers = #tpu.dot_dimension_numbers<[1], [0], [0], [1], [0, 0, 1, 1], [], []>} : vector<1x97xbf16>, vector<97x256xbf16>, vector<1x256xf32> -> vector<1x256xf32>
    %126 = arith.addf %86, %125 : vector<1x256xf32>
    %127 = vector.extract_strided_slice %54 {offsets = [16, 0], sizes = [1, 97], strides = [1, 1]} : vector<32x97xbf16> to vector<1x97xbf16>
    %c16 = arith.constant 16 : index
    %c0_89 = arith.constant 0 : index
    %c0_90 = arith.constant 0 : index
    %128 = vector.load %arg5[%c16, %c0_89, %c0_90] : memref<32x97x256xbf16, #tpu.memory_space<vmem>>, vector<1x97x256xbf16>
    %129 = vector.shape_cast %128 : vector<1x97x256xbf16> to vector<97x256xbf16>
    %cst_91 = arith.constant dense<0.000000e+00> : vector<1x256xf32>
    %130 = tpu.matmul %127, %129, %cst_91 {dimension_numbers = #tpu.dot_dimension_numbers<[1], [0], [0], [1], [0, 0, 1, 1], [], []>} : vector<1x97xbf16>, vector<97x256xbf16>, vector<1x256xf32> -> vector<1x256xf32>
    %131 = arith.addf %91, %130 : vector<1x256xf32>
    %132 = vector.extract_strided_slice %54 {offsets = [17, 0], sizes = [1, 97], strides = [1, 1]} : vector<32x97xbf16> to vector<1x97xbf16>
    %c17 = arith.constant 17 : index
    %c0_92 = arith.constant 0 : index
    %c0_93 = arith.constant 0 : index
    %133 = vector.load %arg5[%c17, %c0_92, %c0_93] : memref<32x97x256xbf16, #tpu.memory_space<vmem>>, vector<1x97x256xbf16>
    %134 = vector.shape_cast %133 : vector<1x97x256xbf16> to vector<97x256xbf16>
    %cst_94 = arith.constant dense<0.000000e+00> : vector<1x256xf32>
    %135 = tpu.matmul %132, %134, %cst_94 {dimension_numbers = #tpu.dot_dimension_numbers<[1], [0], [0], [1], [0, 0, 1, 1], [], []>} : vector<1x97xbf16>, vector<97x256xbf16>, vector<1x256xf32> -> vector<1x256xf32>
    %136 = arith.addf %96, %135 : vector<1x256xf32>
    %137 = vector.extract_strided_slice %54 {offsets = [18, 0], sizes = [1, 97], strides = [1, 1]} : vector<32x97xbf16> to vector<1x97xbf16>
    %c18 = arith.constant 18 : index
    %c0_95 = arith.constant 0 : index
    %c0_96 = arith.constant 0 : index
    %138 = vector.load %arg5[%c18, %c0_95, %c0_96] : memref<32x97x256xbf16, #tpu.memory_space<vmem>>, vector<1x97x256xbf16>
    %139 = vector.shape_cast %138 : vector<1x97x256xbf16> to vector<97x256xbf16>
    %cst_97 = arith.constant dense<0.000000e+00> : vector<1x256xf32>
    %140 = tpu.matmul %137, %139, %cst_97 {dimension_numbers = #tpu.dot_dimension_numbers<[1], [0], [0], [1], [0, 0, 1, 1], [], []>} : vector<1x97xbf16>, vector<97x256xbf16>, vector<1x256xf32> -> vector<1x256xf32>
    %141 = arith.addf %101, %140 : vector<1x256xf32>
    %142 = vector.extract_strided_slice %54 {offsets = [19, 0], sizes = [1, 97], strides = [1, 1]} : vector<32x97xbf16> to vector<1x97xbf16>
    %c19 = arith.constant 19 : index
    %c0_98 = arith.constant 0 : index
    %c0_99 = arith.constant 0 : index
    %143 = vector.load %arg5[%c19, %c0_98, %c0_99] : memref<32x97x256xbf16, #tpu.memory_space<vmem>>, vector<1x97x256xbf16>
    %144 = vector.shape_cast %143 : vector<1x97x256xbf16> to vector<97x256xbf16>
    %cst_100 = arith.constant dense<0.000000e+00> : vector<1x256xf32>
    %145 = tpu.matmul %142, %144, %cst_100 {dimension_numbers = #tpu.dot_dimension_numbers<[1], [0], [0], [1], [0, 0, 1, 1], [], []>} : vector<1x97xbf16>, vector<97x256xbf16>, vector<1x256xf32> -> vector<1x256xf32>
    %146 = arith.addf %106, %145 : vector<1x256xf32>
    %147 = vector.extract_strided_slice %54 {offsets = [20, 0], sizes = [1, 97], strides = [1, 1]} : vector<32x97xbf16> to vector<1x97xbf16>
    %c20 = arith.constant 20 : index
    %c0_101 = arith.constant 0 : index
    %c0_102 = arith.constant 0 : index
    %148 = vector.load %arg5[%c20, %c0_101, %c0_102] : memref<32x97x256xbf16, #tpu.memory_space<vmem>>, vector<1x97x256xbf16>
    %149 = vector.shape_cast %148 : vector<1x97x256xbf16> to vector<97x256xbf16>
    %cst_103 = arith.constant dense<0.000000e+00> : vector<1x256xf32>
    %150 = tpu.matmul %147, %149, %cst_103 {dimension_numbers = #tpu.dot_dimension_numbers<[1], [0], [0], [1], [0, 0, 1, 1], [], []>} : vector<1x97xbf16>, vector<97x256xbf16>, vector<1x256xf32> -> vector<1x256xf32>
    %151 = arith.addf %111, %150 : vector<1x256xf32>
    %152 = vector.extract_strided_slice %54 {offsets = [21, 0], sizes = [1, 97], strides = [1, 1]} : vector<32x97xbf16> to vector<1x97xbf16>
    %c21 = arith.constant 21 : index
    %c0_104 = arith.constant 0 : index
    %c0_105 = arith.constant 0 : index
    %153 = vector.load %arg5[%c21, %c0_104, %c0_105] : memref<32x97x256xbf16, #tpu.memory_space<vmem>>, vector<1x97x256xbf16>
    %154 = vector.shape_cast %153 : vector<1x97x256xbf16> to vector<97x256xbf16>
    %cst_106 = arith.constant dense<0.000000e+00> : vector<1x256xf32>
    %155 = tpu.matmul %152, %154, %cst_106 {dimension_numbers = #tpu.dot_dimension_numbers<[1], [0], [0], [1], [0, 0, 1, 1], [], []>} : vector<1x97xbf16>, vector<97x256xbf16>, vector<1x256xf32> -> vector<1x256xf32>
    %156 = arith.addf %116, %155 : vector<1x256xf32>
    %157 = vector.extract_strided_slice %54 {offsets = [22, 0], sizes = [1, 97], strides = [1, 1]} : vector<32x97xbf16> to vector<1x97xbf16>
    %c22 = arith.constant 22 : index
    %c0_107 = arith.constant 0 : index
    %c0_108 = arith.constant 0 : index
    %158 = vector.load %arg5[%c22, %c0_107, %c0_108] : memref<32x97x256xbf16, #tpu.memory_space<vmem>>, vector<1x97x256xbf16>
    %159 = vector.shape_cast %158 : vector<1x97x256xbf16> to vector<97x256xbf16>
    %cst_109 = arith.constant dense<0.000000e+00> : vector<1x256xf32>
    %160 = tpu.matmul %157, %159, %cst_109 {dimension_numbers = #tpu.dot_dimension_numbers<[1], [0], [0], [1], [0, 0, 1, 1], [], []>} : vector<1x97xbf16>, vector<97x256xbf16>, vector<1x256xf32> -> vector<1x256xf32>
    %161 = arith.addf %121, %160 : vector<1x256xf32>
    %162 = vector.extract_strided_slice %54 {offsets = [23, 0], sizes = [1, 97], strides = [1, 1]} : vector<32x97xbf16> to vector<1x97xbf16>
    %c23 = arith.constant 23 : index
    %c0_110 = arith.constant 0 : index
    %c0_111 = arith.constant 0 : index
    %163 = vector.load %arg5[%c23, %c0_110, %c0_111] : memref<32x97x256xbf16, #tpu.memory_space<vmem>>, vector<1x97x256xbf16>
    %164 = vector.shape_cast %163 : vector<1x97x256xbf16> to vector<97x256xbf16>
    %cst_112 = arith.constant dense<0.000000e+00> : vector<1x256xf32>
    %165 = tpu.matmul %162, %164, %cst_112 {dimension_numbers = #tpu.dot_dimension_numbers<[1], [0], [0], [1], [0, 0, 1, 1], [], []>} : vector<1x97xbf16>, vector<97x256xbf16>, vector<1x256xf32> -> vector<1x256xf32>
    %166 = arith.addf %126, %165 : vector<1x256xf32>
    %167 = vector.extract_strided_slice %54 {offsets = [24, 0], sizes = [1, 97], strides = [1, 1]} : vector<32x97xbf16> to vector<1x97xbf16>
    %c24 = arith.constant 24 : index
    %c0_113 = arith.constant 0 : index
    %c0_114 = arith.constant 0 : index
    %168 = vector.load %arg5[%c24, %c0_113, %c0_114] : memref<32x97x256xbf16, #tpu.memory_space<vmem>>, vector<1x97x256xbf16>
    %169 = vector.shape_cast %168 : vector<1x97x256xbf16> to vector<97x256xbf16>
    %cst_115 = arith.constant dense<0.000000e+00> : vector<1x256xf32>
    %170 = tpu.matmul %167, %169, %cst_115 {dimension_numbers = #tpu.dot_dimension_numbers<[1], [0], [0], [1], [0, 0, 1, 1], [], []>} : vector<1x97xbf16>, vector<97x256xbf16>, vector<1x256xf32> -> vector<1x256xf32>
    %171 = arith.addf %131, %170 : vector<1x256xf32>
    %172 = vector.extract_strided_slice %54 {offsets = [25, 0], sizes = [1, 97], strides = [1, 1]} : vector<32x97xbf16> to vector<1x97xbf16>
    %c25 = arith.constant 25 : index
    %c0_116 = arith.constant 0 : index
    %c0_117 = arith.constant 0 : index
    %173 = vector.load %arg5[%c25, %c0_116, %c0_117] : memref<32x97x256xbf16, #tpu.memory_space<vmem>>, vector<1x97x256xbf16>
    %174 = vector.shape_cast %173 : vector<1x97x256xbf16> to vector<97x256xbf16>
    %cst_118 = arith.constant dense<0.000000e+00> : vector<1x256xf32>
    %175 = tpu.matmul %172, %174, %cst_118 {dimension_numbers = #tpu.dot_dimension_numbers<[1], [0], [0], [1], [0, 0, 1, 1], [], []>} : vector<1x97xbf16>, vector<97x256xbf16>, vector<1x256xf32> -> vector<1x256xf32>
    %176 = arith.addf %136, %175 : vector<1x256xf32>
    %177 = vector.extract_strided_slice %54 {offsets = [26, 0], sizes = [1, 97], strides = [1, 1]} : vector<32x97xbf16> to vector<1x97xbf16>
    %c26 = arith.constant 26 : index
    %c0_119 = arith.constant 0 : index
    %c0_120 = arith.constant 0 : index
    %178 = vector.load %arg5[%c26, %c0_119, %c0_120] : memref<32x97x256xbf16, #tpu.memory_space<vmem>>, vector<1x97x256xbf16>
    %179 = vector.shape_cast %178 : vector<1x97x256xbf16> to vector<97x256xbf16>
    %cst_121 = arith.constant dense<0.000000e+00> : vector<1x256xf32>
    %180 = tpu.matmul %177, %179, %cst_121 {dimension_numbers = #tpu.dot_dimension_numbers<[1], [0], [0], [1], [0, 0, 1, 1], [], []>} : vector<1x97xbf16>, vector<97x256xbf16>, vector<1x256xf32> -> vector<1x256xf32>
    %181 = arith.addf %141, %180 : vector<1x256xf32>
    %182 = vector.extract_strided_slice %54 {offsets = [27, 0], sizes = [1, 97], strides = [1, 1]} : vector<32x97xbf16> to vector<1x97xbf16>
    %c27 = arith.constant 27 : index
    %c0_122 = arith.constant 0 : index
    %c0_123 = arith.constant 0 : index
    %183 = vector.load %arg5[%c27, %c0_122, %c0_123] : memref<32x97x256xbf16, #tpu.memory_space<vmem>>, vector<1x97x256xbf16>
    %184 = vector.shape_cast %183 : vector<1x97x256xbf16> to vector<97x256xbf16>
    %cst_124 = arith.constant dense<0.000000e+00> : vector<1x256xf32>
    %185 = tpu.matmul %182, %184, %cst_124 {dimension_numbers = #tpu.dot_dimension_numbers<[1], [0], [0], [1], [0, 0, 1, 1], [], []>} : vector<1x97xbf16>, vector<97x256xbf16>, vector<1x256xf32> -> vector<1x256xf32>
    %186 = arith.addf %146, %185 : vector<1x256xf32>
    %187 = vector.extract_strided_slice %54 {offsets = [28, 0], sizes = [1, 97], strides = [1, 1]} : vector<32x97xbf16> to vector<1x97xbf16>
    %c28 = arith.constant 28 : index
    %c0_125 = arith.constant 0 : index
    %c0_126 = arith.constant 0 : index
    %188 = vector.load %arg5[%c28, %c0_125, %c0_126] : memref<32x97x256xbf16, #tpu.memory_space<vmem>>, vector<1x97x256xbf16>
    %189 = vector.shape_cast %188 : vector<1x97x256xbf16> to vector<97x256xbf16>
    %cst_127 = arith.constant dense<0.000000e+00> : vector<1x256xf32>
    %190 = tpu.matmul %187, %189, %cst_127 {dimension_numbers = #tpu.dot_dimension_numbers<[1], [0], [0], [1], [0, 0, 1, 1], [], []>} : vector<1x97xbf16>, vector<97x256xbf16>, vector<1x256xf32> -> vector<1x256xf32>
    %191 = arith.addf %151, %190 : vector<1x256xf32>
    %192 = vector.extract_strided_slice %54 {offsets = [29, 0], sizes = [1, 97], strides = [1, 1]} : vector<32x97xbf16> to vector<1x97xbf16>
    %c29 = arith.constant 29 : index
    %c0_128 = arith.constant 0 : index
    %c0_129 = arith.constant 0 : index
    %193 = vector.load %arg5[%c29, %c0_128, %c0_129] : memref<32x97x256xbf16, #tpu.memory_space<vmem>>, vector<1x97x256xbf16>
    %194 = vector.shape_cast %193 : vector<1x97x256xbf16> to vector<97x256xbf16>
    %cst_130 = arith.constant dense<0.000000e+00> : vector<1x256xf32>
    %195 = tpu.matmul %192, %194, %cst_130 {dimension_numbers = #tpu.dot_dimension_numbers<[1], [0], [0], [1], [0, 0, 1, 1], [], []>} : vector<1x97xbf16>, vector<97x256xbf16>, vector<1x256xf32> -> vector<1x256xf32>
    %196 = arith.addf %156, %195 : vector<1x256xf32>
    %197 = vector.extract_strided_slice %54 {offsets = [30, 0], sizes = [1, 97], strides = [1, 1]} : vector<32x97xbf16> to vector<1x97xbf16>
    %c30 = arith.constant 30 : index
    %c0_131 = arith.constant 0 : index
    %c0_132 = arith.constant 0 : index
    %198 = vector.load %arg5[%c30, %c0_131, %c0_132] : memref<32x97x256xbf16, #tpu.memory_space<vmem>>, vector<1x97x256xbf16>
    %199 = vector.shape_cast %198 : vector<1x97x256xbf16> to vector<97x256xbf16>
    %cst_133 = arith.constant dense<0.000000e+00> : vector<1x256xf32>
    %200 = tpu.matmul %197, %199, %cst_133 {dimension_numbers = #tpu.dot_dimension_numbers<[1], [0], [0], [1], [0, 0, 1, 1], [], []>} : vector<1x97xbf16>, vector<97x256xbf16>, vector<1x256xf32> -> vector<1x256xf32>
    %201 = arith.addf %161, %200 : vector<1x256xf32>
    %202 = vector.extract_strided_slice %54 {offsets = [31, 0], sizes = [1, 97], strides = [1, 1]} : vector<32x97xbf16> to vector<1x97xbf16>
    %c31 = arith.constant 31 : index
    %c0_134 = arith.constant 0 : index
    %c0_135 = arith.constant 0 : index
    %203 = vector.load %arg5[%c31, %c0_134, %c0_135] : memref<32x97x256xbf16, #tpu.memory_space<vmem>>, vector<1x97x256xbf16>
    %204 = vector.shape_cast %203 : vector<1x97x256xbf16> to vector<97x256xbf16>
    %cst_136 = arith.constant dense<0.000000e+00> : vector<1x256xf32>
    %205 = tpu.matmul %202, %204, %cst_136 {dimension_numbers = #tpu.dot_dimension_numbers<[1], [0], [0], [1], [0, 0, 1, 1], [], []>} : vector<1x97xbf16>, vector<97x256xbf16>, vector<1x256xf32> -> vector<1x256xf32>
    %206 = arith.addf %166, %205 : vector<1x256xf32>
    %207 = arith.addf %171, %176 : vector<1x256xf32>
    %208 = arith.addf %181, %186 : vector<1x256xf32>
    %209 = arith.addf %191, %196 : vector<1x256xf32>
    %210 = arith.addf %201, %206 : vector<1x256xf32>
    %211 = arith.addf %207, %208 : vector<1x256xf32>
    %212 = arith.addf %209, %210 : vector<1x256xf32>
    %213 = arith.addf %211, %212 : vector<1x256xf32>
    %c0_137 = arith.constant 0 : index
    %c0_138 = arith.constant 0 : index
    %214 = vector.load %arg6[%c0_137, %c0_138] : memref<1x256xf32, #tpu.memory_space<vmem>>, vector<1x256xf32>
    %215 = arith.addf %213, %214 : vector<1x256xf32>
    %cst_139 = arith.constant 0.000000e+00 : f32
    %216 = vector.broadcast %cst_139 : f32 to vector<1x256xf32>
    %217 = arith.maximumf %215, %216 : vector<1x256xf32>
    %218 = arith.truncf %217 : vector<1x256xf32> to vector<1x256xbf16>
    %c0_140 = arith.constant 0 : index
    %c0_141 = arith.constant 0 : index
    %219 = vector.load %arg7[%c0_140, %c0_141] : memref<256x128xbf16, #tpu.memory_space<vmem>>, vector<256x128xbf16>
    %cst_142 = arith.constant dense<0.000000e+00> : vector<1x128xf32>
    %220 = tpu.matmul %218, %219, %cst_142 {dimension_numbers = #tpu.dot_dimension_numbers<[1], [0], [0], [1], [0, 0, 1, 1], [], []>} : vector<1x256xbf16>, vector<256x128xbf16>, vector<1x128xf32> -> vector<1x128xf32>
    %c0_143 = arith.constant 0 : index
    %c0_144 = arith.constant 0 : index
    %221 = vector.load %arg8[%c0_143, %c0_144] : memref<1x128xf32, #tpu.memory_space<vmem>>, vector<1x128xf32>
    %222 = arith.addf %220, %221 : vector<1x128xf32>
    %c0_145 = arith.constant 0 : index
    %c0_146 = arith.constant 0 : index
    %223 = vector.load %arg9[%c0_145, %c0_146] : memref<1x128xf32, #tpu.memory_space<vmem>>, vector<1x128xf32>
    tpu.vector_store %arg9[%c0_145, %c0_146], %222 {strides = array<i32>} : memref<1x128xf32, #tpu.memory_space<vmem>>, vector<1x128xf32>,
    return
  }
}

</mosaic_0001>

<llo_original>
// kernel: _dqn_forward.1
$region0: #{_dqn_forward.1}
  #allocation0 [shape = 'u32[]', space=smem, size = 0x4, offset = 0x4, fixed_abs, tag = 'smem constant byte address 0x4 - core index']
  #allocation1 [shape = 'u32[144,128]{1,0:T(1,128)}', space=vmem, size = 0x12000, scoped, tag = 'internal scratch']
  %s0 = inlined_call_operand.vmem [shape: bf16[256,121], index: 0, kind: input, shape index: {}]
  %s1 = inlined_call_operand.vmem [shape: bf16[4,64,256], index: 1, kind: input, shape index: {}]
  %s2 = inlined_call_operand.vmem [shape: f32[64,1], index: 2, kind: input, shape index: {}]
  %s3 = inlined_call_operand.vmem [shape: bf16[4,32,64], index: 3, kind: input, shape index: {}]
  %s4 = inlined_call_operand.vmem [shape: f32[32,1], index: 4, kind: input, shape index: {}]
  %s5 = inlined_call_operand.vmem [shape: bf16[32,97,256], index: 5, kind: input, shape index: {}]
  %s6 = inlined_call_operand.vmem [shape: f32[1,256], index: 6, kind: input, shape index: {}]
  %s7 = inlined_call_operand.vmem [shape: bf16[256,128], index: 7, kind: input, shape index: {}]
  %s8 = inlined_call_operand.vmem [shape: f32[1,128], index: 8, kind: input, shape index: {}]
  %s9 = inlined_call_operand.hbm [shape: f32[1,128], index: 9, kind: output, shape index: {}]
  %s10 = sld [smem:[#allocation0]]
  $region46: #{_dqn_forward.1} parent=0
    _
  %s12 = ssub.s32 1, %s10
  %s13 = scalar_select 0, %s12, %s10
  $region1: #{_dqn_forward.1} parent=0
    #allocation2 [shape = 'u8[512]{0}', space=vmem, size = 0x400, scoped, tag = 'output window, operand 0, single buffered']
    #allocation3 [shape = 's32[1]{0}', space=sflag, size = 0x4, scoped, tag = 'scoped memory for _dqn_forward.1']
    %14 = vsyncpa [#allocation3], 0
    // Predicated region
    $region2: #{_dqn_forward.1} parent=1 // pred_check
      _
    $region3: #{_dqn_forward.1} parent=1 // pred_check_branch
      %16 = sbr.rel (0) target = $region5
    $region4: #{_dqn_forward.1} parent=1 // pred_region
      _
    $region5: #{_dqn_forward.1} parent=1 // pred_fallthru
      _
    // Predicated region
    $region6: #{_dqn_forward.1} parent=1 // pred_check
      _
    $region7: #{_dqn_forward.1} parent=1 // pred_check_branch
      %18 = sbr.rel (0) target = $region9
    $region8: #{_dqn_forward.1} parent=1 // pred_region
      _
    $region9: #{_dqn_forward.1} parent=1 // pred_fallthru
      _
    // Predicated region
    $region10: #{_dqn_forward.1} parent=1 // pred_check
      _
    $region11: #{_dqn_forward.1} parent=1 // pred_check_branch
      %20 = sbr.rel (0) target = $region13
    $region12: #{_dqn_forward.1} parent=1 // pred_region
      _
    $region13: #{_dqn_forward.1} parent=1 // pred_fallthru
      _
    // Predicated region
    $region14: #{_dqn_forward.1} parent=1 // pred_check
      _
    $region15: #{_dqn_forward.1} parent=1 // pred_check_branch
      %22 = sbr.rel (0) target = $region17
    $region16: #{_dqn_forward.1} parent=1 // pred_region
      _
    $region17: #{_dqn_forward.1} parent=1 // pred_fallthru
      _
    // Predicated region
    $region18: #{_dqn_forward.1} parent=1 // pred_check
      _
    $region19: #{_dqn_forward.1} parent=1 // pred_check_branch
      %24 = sbr.rel (0) target = $region21
    $region20: #{_dqn_forward.1} parent=1 // pred_region
      _
    $region21: #{_dqn_forward.1} parent=1 // pred_fallthru
      _
    // Predicated region
    $region22: #{_dqn_forward.1} parent=1 // pred_check
      _
    $region23: #{_dqn_forward.1} parent=1 // pred_check_branch
      %26 = sbr.rel (0) target = $region25
    $region24: #{_dqn_forward.1} parent=1 // pred_region
      _
    $region25: #{_dqn_forward.1} parent=1 // pred_fallthru
      _
    // Predicated region
    $region26: #{_dqn_forward.1} parent=1 // pred_check
      _
    $region27: #{_dqn_forward.1} parent=1 // pred_check_branch
      %28 = sbr.rel (0) target = $region29
    $region28: #{_dqn_forward.1} parent=1 // pred_region
      _
    $region29: #{_dqn_forward.1} parent=1 // pred_fallthru
      _
    // Predicated region
    $region30: #{_dqn_forward.1} parent=1 // pred_check
      _
    $region31: #{_dqn_forward.1} parent=1 // pred_check_branch
      %30 = sbr.rel (0) target = $region33
    $region32: #{_dqn_forward.1} parent=1 // pred_region
      _
    $region33: #{_dqn_forward.1} parent=1 // pred_fallthru
      _
    // Predicated region
    $region34: #{_dqn_forward.1} parent=1 // pred_check
      _
    $region35: #{_dqn_forward.1} parent=1 // pred_check_branch
      %32 = sbr.rel (0) target = $region37
    $region36: #{_dqn_forward.1} parent=1 // pred_region
      _
    $region37: #{_dqn_forward.1} parent=1 // pred_fallthru
      _
    %v34 = vld [vmem:[%s0] sm:$0xf]
    %v35 = vld [vmem:[%s0 + $0x4] sm:$0xf]
    %v36 = vld [vmem:[%s0 + $0x8] sm:$0xf]
    %v37 = vld [vmem:[%s0 + $0xc] sm:$0xf]
    %v38 = vld [vmem:[%s0 + $0x10] sm:$0xf]
    %v39 = vld [vmem:[%s0 + $0x14] sm:$0xf]
    %v40 = vld [vmem:[%s0 + $0x18] sm:$0xf]
    %v41 = vld [vmem:[%s0 + $0x1c] sm:$0xf]
    %v42 = vld [vmem:[%s0 + $0x20] sm:$0xf]
    %v43 = vld [vmem:[%s0 + $0x24] sm:$0xf]
    %v44 = vld [vmem:[%s0 + $0x28] sm:$0xf]
    %v45 = vld [vmem:[%s0 + $0x2c] sm:$0xf]
    %v46 = vld [vmem:[%s0 + $0x30] sm:$0xf]
    %v47 = vld [vmem:[%s0 + $0x34] sm:$0xf]
    %v48 = vld [vmem:[%s0 + $0x38] sm:$0xf]
    %v49 = vld [vmem:[%s0 + $0x3c] sm:$0xf]
    %v50 = vld [vmem:[%s0 + $0x40] sm:$0xf]
    %v51 = vld [vmem:[%s0 + $0x44] sm:$0xf]
    %v52 = vld [vmem:[%s0 + $0x48] sm:$0xf]
    %v53 = vld [vmem:[%s0 + $0x4c] sm:$0xf]
    %v54 = vld [vmem:[%s0 + $0x50] sm:$0xf]
    %v55 = vld [vmem:[%s0 + $0x54] sm:$0xf]
    %v56 = vld [vmem:[%s0 + $0x58] sm:$0xf]
    %v57 = vld [vmem:[%s0 + $0x5c] sm:$0xf]
    %v58 = vld [vmem:[%s0 + $0x60] sm:$0xf]
    %v59 = vld [vmem:[%s0 + $0x64] sm:$0xf]
    %v60 = vld [vmem:[%s0 + $0x68] sm:$0xf]
    %v61 = vld [vmem:[%s0 + $0x6c] sm:$0xf]
    %v62 = vld [vmem:[%s0 + $0x70] sm:$0xf]
    %v63 = vld [vmem:[%s0 + $0x74] sm:$0xf]
    %v64 = vld [vmem:[%s0 + $0x78] sm:$0xf]
    %v65 = vld [vmem:[%s0 + $0x7c] sm:$0xf]
    %v66 = vld [vmem:[%s1] sm:$0xff]
    %v67 = vld [vmem:[%s1 + $0x8] sm:$0xff]
    %v68 = vld [vmem:[%s1 + $0x10] sm:$0xff]
    %v69 = vld [vmem:[%s1 + $0x18] sm:$0xff]
    %v70 = vld [vmem:[%s1 + $0x20] sm:$0xff]
    %v71 = vld [vmem:[%s1 + $0x28] sm:$0xff]
    %v72 = vld [vmem:[%s1 + $0x30] sm:$0xff]
    %v73 = vld [vmem:[%s1 + $0x38] sm:$0xff]
    %s74 = scalar_lea.vmem %s1, 64
    %v75 = vld [vmem:[%s74] sm:$0xff]
    %v76 = vld [vmem:[%s74 + $0x8] sm:$0xff]
    %v77 = vld [vmem:[%s74 + $0x10] sm:$0xff]
    %v78 = vld [vmem:[%s74 + $0x18] sm:$0xff]
    %v79 = vld [vmem:[%s74 + $0x20] sm:$0xff]
    %v80 = vld [vmem:[%s74 + $0x28] sm:$0xff]
    %v81 = vld [vmem:[%s74 + $0x30] sm:$0xff]
    %v82 = vld [vmem:[%s74 + $0x38] sm:$0xff]
    %v91 = vunpack.c.l.b16 %v75
    %v92 = vunpack.c.h.b16 %v75
    %v93 = vunpack.c.l.b16 %v76
    %v94 = vunpack.c.h.b16 %v76
    %v95 = vunpack.c.l.b16 %v77
    %v96 = vunpack.c.h.b16 %v77
    %v97 = vunpack.c.l.b16 %v78
    %v98 = vunpack.c.h.b16 %v78
    %v99 = vunpack.c.l.b16 %v79
    %v100 = vunpack.c.h.b16 %v79
    %v101 = vunpack.c.l.b16 %v80
    %v102 = vunpack.c.h.b16 %v80
    %v103 = vunpack.c.l.b16 %v81
    %v104 = vunpack.c.h.b16 %v81
    %v105 = vunpack.c.l.b16 %v82
    %v106 = vunpack.c.h.b16 %v82
    %v107 = vpack.c.b16 %v93, %v91
    %v108 = vpack.c.b16 %v94, %v92
    %v109 = vpack.c.b16 %v97, %v95
    %v110 = vpack.c.b16 %v98, %v96
    %v111 = vpack.c.b16 %v101, %v99
    %v112 = vpack.c.b16 %v102, %v100
    %v113 = vpack.c.b16 %v105, %v103
    %v114 = vpack.c.b16 %v106, %v104
    %v155 = vunpack.c.l.b16 %v34
    %v156 = vunpack.c.l.b16 %v35
    %v157 = vunpack.c.l.b16 %v36
    %v158 = vunpack.c.l.b16 %v37
    %v159 = vunpack.c.l.b16 %v38
    %v160 = vunpack.c.l.b16 %v39
    %v161 = vunpack.c.l.b16 %v40
    %v162 = vunpack.c.l.b16 %v41
    %v163 = vunpack.c.l.b16 %v42
    %v164 = vunpack.c.l.b16 %v43
    %v165 = vunpack.c.l.b16 %v44
    %v166 = vunpack.c.l.b16 %v45
    %v167 = vunpack.c.l.b16 %v46
    %v168 = vunpack.c.l.b16 %v47
    %v169 = vunpack.c.l.b16 %v48
    %v170 = vunpack.c.l.b16 %v49
    %v171 = vunpack.c.l.b16 %v50
    %v172 = vunpack.c.l.b16 %v51
    %v173 = vunpack.c.l.b16 %v52
    %v174 = vunpack.c.l.b16 %v53
    %v175 = vunpack.c.l.b16 %v54
    %v176 = vunpack.c.l.b16 %v55
    %v177 = vunpack.c.l.b16 %v56
    %v178 = vunpack.c.l.b16 %v57
    %v179 = vunpack.c.l.b16 %v58
    %v180 = vunpack.c.l.b16 %v59
    %v181 = vunpack.c.l.b16 %v60
    %v182 = vunpack.c.l.b16 %v61
    %v183 = vunpack.c.l.b16 %v62
    %v184 = vunpack.c.l.b16 %v63
    %v185 = vunpack.c.l.b16 %v64
    %v186 = vunpack.c.l.b16 %v65
    %v187 = vpack.c.b16 %v156, %v155
    %v188 = vpack.c.b16 %v158, %v157
    %v189 = vpack.c.b16 %v160, %v159
    %v190 = vpack.c.b16 %v162, %v161
    %v191 = vpack.c.b16 %v164, %v163
    %v192 = vpack.c.b16 %v166, %v165
    %v193 = vpack.c.b16 %v168, %v167
    %v194 = vpack.c.b16 %v170, %v169
    %v195 = vpack.c.b16 %v172, %v171
    %v196 = vpack.c.b16 %v174, %v173
    %v197 = vpack.c.b16 %v176, %v175
    %v198 = vpack.c.b16 %v178, %v177
    %v199 = vpack.c.b16 %v180, %v179
    %v200 = vpack.c.b16 %v182, %v181
    %v201 = vpack.c.b16 %v184, %v183
    %v202 = vpack.c.b16 %v186, %v185
    %203 = vrot.lane.b32.xlu0 %v187, 127
    %v204 = vpop.permute.xlu0 %203
    %205 = vrot.lane.b32.xlu0 %v188, 127
    %v206 = vpop.permute.xlu0 %205
    %207 = vrot.lane.b32.xlu0 %v189, 127
    %v208 = vpop.permute.xlu0 %207
    %209 = vrot.lane.b32.xlu0 %v190, 127
    %v210 = vpop.permute.xlu0 %209
    %211 = vrot.lane.b32.xlu0 %v191, 127
    %v212 = vpop.permute.xlu0 %211
    %213 = vrot.lane.b32.xlu0 %v192, 127
    %v214 = vpop.permute.xlu0 %213
    %215 = vrot.lane.b32.xlu0 %v193, 127
    %v216 = vpop.permute.xlu0 %215
    %217 = vrot.lane.b32.xlu0 %v194, 127
    %v218 = vpop.permute.xlu0 %217
    %219 = vrot.lane.b32.xlu0 %v195, 127
    %v220 = vpop.permute.xlu0 %219
    %221 = vrot.lane.b32.xlu0 %v196, 127
    %v222 = vpop.permute.xlu0 %221
    %223 = vrot.lane.b32.xlu0 %v197, 127
    %v224 = vpop.permute.xlu0 %223
    %225 = vrot.lane.b32.xlu0 %v198, 127
    %v226 = vpop.permute.xlu0 %225
    %227 = vrot.lane.b32.xlu0 %v199, 127
    %v228 = vpop.permute.xlu0 %227
    %229 = vrot.lane.b32.xlu0 %v200, 127
    %v230 = vpop.permute.xlu0 %229
    %231 = vrot.lane.b32.xlu0 %v201, 127
    %v232 = vpop.permute.xlu0 %231
    %233 = vrot.lane.b32.xlu0 %v202, 127
    %v234 = vpop.permute.xlu0 %233
    %251 = vmatprep.subr.bf16.mxu0 0
    %252 = vmatpush1.bf16.msra.mxu0 %v204
    %253 = vmatprep.subr.bf16.mxu0 0
    %254 = vmatpush1.bf16.msra.mxu0 %v206
    %255 = vmatprep.subr.bf16.mxu0 0
    %256 = vmatpush1.bf16.msra.mxu0 %v208
    %257 = vmatprep.subr.bf16.mxu0 0
    %258 = vmatpush1.bf16.msra.mxu0 %v210
    %259 = vmatprep.subr.bf16.mxu0 0
    %260 = vmatpush1.bf16.msra.mxu0 %v212
    %261 = vmatprep.subr.bf16.mxu0 0
    %262 = vmatpush1.bf16.msra.mxu0 %v214
    %263 = vmatprep.subr.bf16.mxu0 0
    %264 = vmatpush1.bf16.msra.mxu0 %v216
    %265 = vmatprep.subr.bf16.mxu0 0
    %266 = vmatpush1.bf16.msra.mxu0 %v218
    %267 = vmatprep.subr.bf16.mxu0 0
    %268 = vmatpush1.bf16.msra.mxu0 %v220
    %269 = vmatprep.subr.bf16.mxu0 0
    %270 = vmatpush1.bf16.msra.mxu0 %v222
    %271 = vmatprep.subr.bf16.mxu0 0
    %272 = vmatpush1.bf16.msra.mxu0 %v224
    %273 = vmatprep.subr.bf16.mxu0 0
    %274 = vmatpush1.bf16.msra.mxu0 %v226
    %275 = vmatprep.subr.bf16.mxu0 0
    %276 = vmatpush1.bf16.msra.mxu0 %v228
    %277 = vmatprep.subr.bf16.mxu0 0
    %278 = vmatpush1.bf16.msra.mxu0 %v230
    %279 = vmatprep.subr.bf16.mxu0 0
    %280 = vmatpush1.bf16.msra.mxu0 %v232
    %281 = vmatprep.subr.bf16.mxu0 0
    %282 = vmatpush1.bf16.msra.mxu0 %v234
    %283 = vmatprep.mubr.bf16.mxu0 %v108
    %284 = vmatmul.mubr.bf16.gmra.mrb[0].mxu0 %v107
    %v285 = vpop.f32.mrb[0].mxu0
    %v286 = vadd.f32 0.0, %v285
    %v287 = vpop.f32.mrb[0].mxu0
    %v288 = vpop.f32.mrb[0].mxu0
    %v289 = vadd.f32 0.0, %v288
    %v290 = vpop.f32.mrb[0].mxu0
    %291 = vmatprep.mubr.bf16.mxu0 %v110
    %292 = vmatmul.mubr.bf16.gmra.mrb[0].mxu0 %v109
    %v293 = vpop.f32.mrb[0].mxu0
    %v294 = vadd.f32 0.0, %v293
    %v295 = vpop.f32.mrb[0].mxu0
    %v296 = vpop.f32.mrb[0].mxu0
    %v297 = vadd.f32 0.0, %v296
    %v298 = vpop.f32.mrb[0].mxu0
    %299 = vmatprep.mubr.bf16.mxu0 %v112
    %300 = vmatmul.mubr.bf16.gmra.mrb[0].mxu0 %v111
    %v301 = vpop.f32.mrb[0].mxu0
    %v302 = vadd.f32 0.0, %v301
    %v303 = vpop.f32.mrb[0].mxu0
    %v304 = vpop.f32.mrb[0].mxu0
    %v305 = vadd.f32 0.0, %v304
    %v306 = vpop.f32.mrb[0].mxu0
    %307 = vmatprep.mubr.bf16.mxu0 %v114
    %308 = vmatmul.mubr.bf16.gmra.mrb[0].mxu0 %v113
    %v309 = vpop.f32.mrb[0].mxu0
    %v310 = vadd.f32 0.0, %v309
    %v311 = vpop.f32.mrb[0].mxu0
    %v312 = vpop.f32.mrb[0].mxu0
    %v313 = vadd.f32 0.0, %v312
    %v314 = vpop.f32.mrb[0].mxu0
    %315 = vdwg.mxu0
    %v324 = vunpack.c.l.b16 %v66
    %v325 = vunpack.c.h.b16 %v66
    %v326 = vunpack.c.l.b16 %v67
    %v327 = vunpack.c.h.b16 %v67
    %v328 = vunpack.c.l.b16 %v68
    %v329 = vunpack.c.h.b16 %v68
    %v330 = vunpack.c.l.b16 %v69
    %v331 = vunpack.c.h.b16 %v69
    %v332 = vunpack.c.l.b16 %v70
    %v333 = vunpack.c.h.b16 %v70
    %v334 = vunpack.c.l.b16 %v71
    %v335 = vunpack.c.h.b16 %v71
    %v336 = vunpack.c.l.b16 %v72
    %v337 = vunpack.c.h.b16 %v72
    %v338 = vunpack.c.l.b16 %v73
    %v339 = vunpack.c.h.b16 %v73
    %v340 = vpack.c.b16 %v326, %v324
    %v341 = vpack.c.b16 %v327, %v325
    %v342 = vpack.c.b16 %v330, %v328
    %v343 = vpack.c.b16 %v331, %v329
    %v344 = vpack.c.b16 %v334, %v332
    %v345 = vpack.c.b16 %v335, %v333
    %v346 = vpack.c.b16 %v338, %v336
    %v347 = vpack.c.b16 %v339, %v337
    %372 = vmatprep.subr.bf16.mxu0 0
    %373 = vmatpush1.bf16.msra.mxu0 %v187
    %374 = vmatprep.subr.bf16.mxu0 0
    %375 = vmatpush1.bf16.msra.mxu0 %v188
    %376 = vmatprep.subr.bf16.mxu0 0
    %377 = vmatpush1.bf16.msra.mxu0 %v189
    %378 = vmatprep.subr.bf16.mxu0 0
    %379 = vmatpush1.bf16.msra.mxu0 %v190
    %380 = vmatprep.subr.bf16.mxu0 0
    %381 = vmatpush1.bf16.msra.mxu0 %v191
    %382 = vmatprep.subr.bf16.mxu0 0
    %383 = vmatpush1.bf16.msra.mxu0 %v192
    %384 = vmatprep.subr.bf16.mxu0 0
    %385 = vmatpush1.bf16.msra.mxu0 %v193
    %386 = vmatprep.subr.bf16.mxu0 0
    %387 = vmatpush1.bf16.msra.mxu0 %v194
    %388 = vmatprep.subr.bf16.mxu0 0
    %389 = vmatpush1.bf16.msra.mxu0 %v195
    %390 = vmatprep.subr.bf16.mxu0 0
    %391 = vmatpush1.bf16.msra.mxu0 %v196
    %392 = vmatprep.subr.bf16.mxu0 0
    %393 = vmatpush1.bf16.msra.mxu0 %v197
    %394 = vmatprep.subr.bf16.mxu0 0
    %395 = vmatpush1.bf16.msra.mxu0 %v198
    %396 = vmatprep.subr.bf16.mxu0 0
    %397 = vmatpush1.bf16.msra.mxu0 %v199
    %398 = vmatprep.subr.bf16.mxu0 0
    %399 = vmatpush1.bf16.msra.mxu0 %v200
    %400 = vmatprep.subr.bf16.mxu0 0
    %401 = vmatpush1.bf16.msra.mxu0 %v201
    %402 = vmatprep.subr.bf16.mxu0 0
    %403 = vmatpush1.bf16.msra.mxu0 %v202
    %404 = vmatprep.mubr.bf16.mxu0 %v341
    %405 = vmatmul.mubr.bf16.gmra.mrb[0].mxu0 %v340
    %v406 = vpop.f32.mrb[0].mxu0
    %v407 = vadd.f32 %v286, %v406
    %v408 = vpop.f32.mrb[0].mxu0
    %v409 = vpop.f32.mrb[0].mxu0
    %v410 = vadd.f32 %v289, %v409
    %v411 = vpop.f32.mrb[0].mxu0
    %412 = vmatprep.mubr.bf16.mxu0 %v343
    %413 = vmatmul.mubr.bf16.gmra.mrb[0].mxu0 %v342
    %v414 = vpop.f32.mrb[0].mxu0
    %v415 = vadd.f32 %v294, %v414
    %v416 = vpop.f32.mrb[0].mxu0
    %v417 = vpop.f32.mrb[0].mxu0
    %v418 = vadd.f32 %v297, %v417
    %v419 = vpop.f32.mrb[0].mxu0
    %420 = vmatprep.mubr.bf16.mxu0 %v345
    %421 = vmatmul.mubr.bf16.gmra.mrb[0].mxu0 %v344
    %v422 = vpop.f32.mrb[0].mxu0
    %v423 = vadd.f32 %v302, %v422
    %v424 = vpop.f32.mrb[0].mxu0
    %v425 = vpop.f32.mrb[0].mxu0
    %v426 = vadd.f32 %v305, %v425
    %v427 = vpop.f32.mrb[0].mxu0
    %428 = vmatprep.mubr.bf16.mxu0 %v347
    %429 = vmatmul.mubr.bf16.gmra.mrb[0].mxu0 %v346
    %v430 = vpop.f32.mrb[0].mxu0
    %v431 = vadd.f32 %v310, %v430
    %v432 = vpop.f32.mrb[0].mxu0
    %v433 = vpop.f32.mrb[0].mxu0
    %v434 = vadd.f32 %v313, %v433
    %v435 = vpop.f32.mrb[0].mxu0
    %436 = vdwg.mxu0
    %s437 = scalar_lea.vmem %s1, 128
    %v438 = vld [vmem:[%s437] sm:$0xff]
    %v439 = vld [vmem:[%s437 + $0x8] sm:$0xff]
    %v440 = vld [vmem:[%s437 + $0x10] sm:$0xff]
    %v441 = vld [vmem:[%s437 + $0x18] sm:$0xff]
    %v442 = vld [vmem:[%s437 + $0x20] sm:$0xff]
    %v443 = vld [vmem:[%s437 + $0x28] sm:$0xff]
    %v444 = vld [vmem:[%s437 + $0x30] sm:$0xff]
    %v445 = vld [vmem:[%s437 + $0x38] sm:$0xff]
    %v454 = vunpack.c.l.b16 %v438
    %v455 = vunpack.c.h.b16 %v438
    %v456 = vunpack.c.l.b16 %v439
    %v457 = vunpack.c.h.b16 %v439
    %v458 = vunpack.c.l.b16 %v440
    %v459 = vunpack.c.h.b16 %v440
    %v460 = vunpack.c.l.b16 %v441
    %v461 = vunpack.c.h.b16 %v441
    %v462 = vunpack.c.l.b16 %v442
    %v463 = vunpack.c.h.b16 %v442
    %v464 = vunpack.c.l.b16 %v443
    %v465 = vunpack.c.h.b16 %v443
    %v466 = vunpack.c.l.b16 %v444
    %v467 = vunpack.c.h.b16 %v444
    %v468 = vunpack.c.l.b16 %v445
    %v469 = vunpack.c.h.b16 %v445
    %v470 = vpack.c.b16 %v456, %v454
    %v471 = vpack.c.b16 %v457, %v455
    %v472 = vpack.c.b16 %v460, %v458
    %v473 = vpack.c.b16 %v461, %v459
    %v474 = vpack.c.b16 %v464, %v462
    %v475 = vpack.c.b16 %v465, %v463
    %v476 = vpack.c.b16 %v468, %v466
    %v477 = vpack.c.b16 %v469, %v467
    %486 = vrot.lane.b32.xlu0 %v187, 117
    %v487 = vpop.permute.xlu0 %486
    %488 = vrot.lane.b32.xlu0 %v188, 117
    %v489 = vpop.permute.xlu0 %488
    %490 = vrot.lane.b32.xlu0 %v189, 117
    %v491 = vpop.permute.xlu0 %490
    %492 = vrot.lane.b32.xlu0 %v190, 117
    %v493 = vpop.permute.xlu0 %492
    %494 = vrot.lane.b32.xlu0 %v191, 117
    %v495 = vpop.permute.xlu0 %494
    %496 = vrot.lane.b32.xlu0 %v192, 117
    %v497 = vpop.permute.xlu0 %496
    %498 = vrot.lane.b32.xlu0 %v193, 117
    %v499 = vpop.permute.xlu0 %498
    %500 = vrot.lane.b32.xlu0 %v194, 117
    %v501 = vpop.permute.xlu0 %500
    %502 = vrot.lane.b32.xlu0 %v195, 117
    %v503 = vpop.permute.xlu0 %502
    %504 = vrot.lane.b32.xlu0 %v196, 117
    %v505 = vpop.permute.xlu0 %504
    %506 = vrot.lane.b32.xlu0 %v197, 117
    %v507 = vpop.permute.xlu0 %506
    %508 = vrot.lane.b32.xlu0 %v198, 117
    %v509 = vpop.permute.xlu0 %508
    %510 = vrot.lane.b32.xlu0 %v199, 117
    %v511 = vpop.permute.xlu0 %510
    %512 = vrot.lane.b32.xlu0 %v200, 117
    %v513 = vpop.permute.xlu0 %512
    %514 = vrot.lane.b32.xlu0 %v201, 117
    %v515 = vpop.permute.xlu0 %514
    %516 = vrot.lane.b32.xlu0 %v202, 117
    %v517 = vpop.permute.xlu0 %516
    %534 = vmatprep.subr.bf16.mxu0 0
    %535 = vmatpush1.bf16.msra.mxu0 %v487
    %536 = vmatprep.subr.bf16.mxu0 0
    %537 = vmatpush1.bf16.msra.mxu0 %v489
    %538 = vmatprep.subr.bf16.mxu0 0
    %539 = vmatpush1.bf16.msra.mxu0 %v491
    %540 = vmatprep.subr.bf16.mxu0 0
    %541 = vmatpush1.bf16.msra.mxu0 %v493
    %542 = vmatprep.subr.bf16.mxu0 0
    %543 = vmatpush1.bf16.msra.mxu0 %v495
    %544 = vmatprep.subr.bf16.mxu0 0
    %545 = vmatpush1.bf16.msra.mxu0 %v497
    %546 = vmatprep.subr.bf16.mxu0 0
    %547 = vmatpush1.bf16.msra.mxu0 %v499
    %548 = vmatprep.subr.bf16.mxu0 0
    %549 = vmatpush1.bf16.msra.mxu0 %v501
    %550 = vmatprep.subr.bf16.mxu0 0
    %551 = vmatpush1.bf16.msra.mxu0 %v503
    %552 = vmatprep.subr.bf16.mxu0 0
    %553 = vmatpush1.bf16.msra.mxu0 %v505
    %554 = vmatprep.subr.bf16.mxu0 0
    %555 = vmatpush1.bf16.msra.mxu0 %v507
    %556 = vmatprep.subr.bf16.mxu0 0
    %557 = vmatpush1.bf16.msra.mxu0 %v509
    %558 = vmatprep.subr.bf16.mxu0 0
    %559 = vmatpush1.bf16.msra.mxu0 %v511
    %560 = vmatprep.subr.bf16.mxu0 0
    %561 = vmatpush1.bf16.msra.mxu0 %v513
    %562 = vmatprep.subr.bf16.mxu0 0
    %563 = vmatpush1.bf16.msra.mxu0 %v515
    %564 = vmatprep.subr.bf16.mxu0 0
    %565 = vmatpush1.bf16.msra.mxu0 %v517
    %566 = vmatprep.mubr.bf16.mxu0 %v471
    %567 = vmatmul.mubr.bf16.gmra.mrb[0].mxu0 %v470
    %v568 = vpop.f32.mrb[0].mxu0
    %v569 = vadd.f32 0.0, %v568
    %v570 = vpop.f32.mrb[0].mxu0
    %v571 = vpop.f32.mrb[0].mxu0
    %v572 = vadd.f32 0.0, %v571
    %v573 = vpop.f32.mrb[0].mxu0
    %574 = vmatprep.mubr.bf16.mxu0 %v473
    %575 = vmatmul.mubr.bf16.gmra.mrb[0].mxu0 %v472
    %v576 = vpop.f32.mrb[0].mxu0
    %v577 = vadd.f32 0.0, %v576
    %v578 = vpop.f32.mrb[0].mxu0
    %v579 = vpop.f32.mrb[0].mxu0
    %v580 = vadd.f32 0.0, %v579
    %v581 = vpop.f32.mrb[0].mxu0
    %582 = vmatprep.mubr.bf16.mxu0 %v475
    %583 = vmatmul.mubr.bf16.gmra.mrb[0].mxu0 %v474
    %v584 = vpop.f32.mrb[0].mxu0
    %v585 = vadd.f32 0.0, %v584
    %v586 = vpop.f32.mrb[0].mxu0
    %v587 = vpop.f32.mrb[0].mxu0
    %v588 = vadd.f32 0.0, %v587
    %v589 = vpop.f32.mrb[0].mxu0
    %590 = vmatprep.mubr.bf16.mxu0 %v477
    %591 = vmatmul.mubr.bf16.gmra.mrb[0].mxu0 %v476
    %v592 = vpop.f32.mrb[0].mxu0
    %v593 = vadd.f32 0.0, %v592
    %v594 = vpop.f32.mrb[0].mxu0
    %v595 = vpop.f32.mrb[0].mxu0
    %v596 = vadd.f32 0.0, %v595
    %v597 = vpop.f32.mrb[0].mxu0
    %598 = vdwg.mxu0
    %v599 = vadd.f32 %v407, %v569
    %v600 = vadd.f32 %v410, %v572
    %v601 = vadd.f32 %v415, %v577
    %v602 = vadd.f32 %v418, %v580
    %v603 = vadd.f32 %v423, %v585
    %v604 = vadd.f32 %v426, %v588
    %v605 = vadd.f32 %v431, %v593
    %v606 = vadd.f32 %v434, %v596
    %s607 = scalar_lea.vmem %s1, 192
    %v608 = vld [vmem:[%s607] sm:$0xff]
    %v609 = vld [vmem:[%s607 + $0x8] sm:$0xff]
    %v610 = vld [vmem:[%s607 + $0x10] sm:$0xff]
    %v611 = vld [vmem:[%s607 + $0x18] sm:$0xff]
    %v612 = vld [vmem:[%s607 + $0x20] sm:$0xff]
    %v613 = vld [vmem:[%s607 + $0x28] sm:$0xff]
    %v614 = vld [vmem:[%s607 + $0x30] sm:$0xff]
    %v615 = vld [vmem:[%s607 + $0x38] sm:$0xff]
    %v624 = vunpack.c.l.b16 %v608
    %v625 = vunpack.c.h.b16 %v608
    %v626 = vunpack.c.l.b16 %v609
    %v627 = vunpack.c.h.b16 %v609
    %v628 = vunpack.c.l.b16 %v610
    %v629 = vunpack.c.h.b16 %v610
    %v630 = vunpack.c.l.b16 %v611
    %v631 = vunpack.c.h.b16 %v611
    %v632 = vunpack.c.l.b16 %v612
    %v633 = vunpack.c.h.b16 %v612
    %v634 = vunpack.c.l.b16 %v613
    %v635 = vunpack.c.h.b16 %v613
    %v636 = vunpack.c.l.b16 %v614
    %v637 = vunpack.c.h.b16 %v614
    %v638 = vunpack.c.l.b16 %v615
    %v639 = vunpack.c.h.b16 %v615
    %v640 = vpack.c.b16 %v626, %v624
    %v641 = vpack.c.b16 %v627, %v625
    %v642 = vpack.c.b16 %v630, %v628
    %v643 = vpack.c.b16 %v631, %v629
    %v644 = vpack.c.b16 %v634, %v632
    %v645 = vpack.c.b16 %v635, %v633
    %v646 = vpack.c.b16 %v638, %v636
    %v647 = vpack.c.b16 %v639, %v637
    %656 = vrot.lane.b32.xlu0 %v187, 116
    %v657 = vpop.permute.xlu0 %656
    %658 = vrot.lane.b32.xlu0 %v188, 116
    %v659 = vpop.permute.xlu0 %658
    %660 = vrot.lane.b32.xlu0 %v189, 116
    %v661 = vpop.permute.xlu0 %660
    %662 = vrot.lane.b32.xlu0 %v190, 116
    %v663 = vpop.permute.xlu0 %662
    %664 = vrot.lane.b32.xlu0 %v191, 116
    %v665 = vpop.permute.xlu0 %664
    %666 = vrot.lane.b32.xlu0 %v192, 116
    %v667 = vpop.permute.xlu0 %666
    %668 = vrot.lane.b32.xlu0 %v193, 116
    %v669 = vpop.permute.xlu0 %668
    %670 = vrot.lane.b32.xlu0 %v194, 116
    %v671 = vpop.permute.xlu0 %670
    %672 = vrot.lane.b32.xlu0 %v195, 116
    %v673 = vpop.permute.xlu0 %672
    %674 = vrot.lane.b32.xlu0 %v196, 116
    %v675 = vpop.permute.xlu0 %674
    %676 = vrot.lane.b32.xlu0 %v197, 116
    %v677 = vpop.permute.xlu0 %676
    %678 = vrot.lane.b32.xlu0 %v198, 116
    %v679 = vpop.permute.xlu0 %678
    %680 = vrot.lane.b32.xlu0 %v199, 116
    %v681 = vpop.permute.xlu0 %680
    %682 = vrot.lane.b32.xlu0 %v200, 116
    %v683 = vpop.permute.xlu0 %682
    %684 = vrot.lane.b32.xlu0 %v201, 116
    %v685 = vpop.permute.xlu0 %684
    %686 = vrot.lane.b32.xlu0 %v202, 116
    %v687 = vpop.permute.xlu0 %686
    %704 = vmatprep.subr.bf16.mxu0 0
    %705 = vmatpush1.bf16.msra.mxu0 %v657
    %706 = vmatprep.subr.bf16.mxu0 0
    %707 = vmatpush1.bf16.msra.mxu0 %v659
    %708 = vmatprep.subr.bf16.mxu0 0
    %709 = vmatpush1.bf16.msra.mxu0 %v661
    %710 = vmatprep.subr.bf16.mxu0 0
    %711 = vmatpush1.bf16.msra.mxu0 %v663
    %712 = vmatprep.subr.bf16.mxu0 0
    %713 = vmatpush1.bf16.msra.mxu0 %v665
    %714 = vmatprep.subr.bf16.mxu0 0
    %715 = vmatpush1.bf16.msra.mxu0 %v667
    %716 = vmatprep.subr.bf16.mxu0 0
    %717 = vmatpush1.bf16.msra.mxu0 %v669
    %718 = vmatprep.subr.bf16.mxu0 0
    %719 = vmatpush1.bf16.msra.mxu0 %v671
    %720 = vmatprep.subr.bf16.mxu0 0
    %721 = vmatpush1.bf16.msra.mxu0 %v673
    %722 = vmatprep.subr.bf16.mxu0 0
    %723 = vmatpush1.bf16.msra.mxu0 %v675
    %724 = vmatprep.subr.bf16.mxu0 0
    %725 = vmatpush1.bf16.msra.mxu0 %v677
    %726 = vmatprep.subr.bf16.mxu0 0
    %727 = vmatpush1.bf16.msra.mxu0 %v679
    %728 = vmatprep.subr.bf16.mxu0 0
    %729 = vmatpush1.bf16.msra.mxu0 %v681
    %730 = vmatprep.subr.bf16.mxu0 0
    %731 = vmatpush1.bf16.msra.mxu0 %v683
    %732 = vmatprep.subr.bf16.mxu0 0
    %733 = vmatpush1.bf16.msra.mxu0 %v685
    %734 = vmatprep.subr.bf16.mxu0 0
    %735 = vmatpush1.bf16.msra.mxu0 %v687
    %736 = vmatprep.mubr.bf16.mxu0 %v641
    %737 = vmatmul.mubr.bf16.gmra.mrb[0].mxu0 %v640
    %v738 = vpop.f32.mrb[0].mxu0
    %v739 = vadd.f32 0.0, %v738
    %v740 = vpop.f32.mrb[0].mxu0
    %v741 = vpop.f32.mrb[0].mxu0
    %v742 = vadd.f32 0.0, %v741
    %v743 = vpop.f32.mrb[0].mxu0
    %744 = vmatprep.mubr.bf16.mxu0 %v643
    %745 = vmatmul.mubr.bf16.gmra.mrb[0].mxu0 %v642
    %v746 = vpop.f32.mrb[0].mxu0
    %v747 = vadd.f32 0.0, %v746
    %v748 = vpop.f32.mrb[0].mxu0
    %v749 = vpop.f32.mrb[0].mxu0
    %v750 = vadd.f32 0.0, %v749
    %v751 = vpop.f32.mrb[0].mxu0
    %752 = vmatprep.mubr.bf16.mxu0 %v645
    %753 = vmatmul.mubr.bf16.gmra.mrb[0].mxu0 %v644
    %v754 = vpop.f32.mrb[0].mxu0
    %v755 = vadd.f32 0.0, %v754
    %v756 = vpop.f32.mrb[0].mxu0
    %v757 = vpop.f32.mrb[0].mxu0
    %v758 = vadd.f32 0.0, %v757
    %v759 = vpop.f32.mrb[0].mxu0
    %760 = vmatprep.mubr.bf16.mxu0 %v647
    %761 = vmatmul.mubr.bf16.gmra.mrb[0].mxu0 %v646
    %v762 = vpop.f32.mrb[0].mxu0
    %v763 = vadd.f32 0.0, %v762
    %v764 = vpop.f32.mrb[0].mxu0
    %v765 = vpop.f32.mrb[0].mxu0
    %v766 = vadd.f32 0.0, %v765
    %v767 = vpop.f32.mrb[0].mxu0
    %768 = vdwg.mxu0
    %v769 = vadd.f32 %v599, %v739
    %v770 = vadd.f32 %v600, %v742
    %v771 = vadd.f32 %v601, %v747
    %v772 = vadd.f32 %v602, %v750
    %v773 = vadd.f32 %v603, %v755
    %v774 = vadd.f32 %v604, %v758
    %v775 = vadd.f32 %v605, %v763
    %v776 = vadd.f32 %v606, %v766
    %v777 = vld [vmem:[%s2] sm:$0xff]
    %v778 = vld [vmem:[%s2 + $0x8] sm:$0xff]
    %v779 = vld [vmem:[%s2 + $0x10] sm:$0xff]
    %v780 = vld [vmem:[%s2 + $0x18] sm:$0xff]
    %v781 = vld [vmem:[%s2 + $0x20] sm:$0xff]
    %v782 = vld [vmem:[%s2 + $0x28] sm:$0xff]
    %v783 = vld [vmem:[%s2 + $0x30] sm:$0xff]
    %v784 = vld [vmem:[%s2 + $0x38] sm:$0xff]
    %786 = vset.pattern.permute.xlu0 0
    %787 = vperm.xlu0 %786, %v777
    %v788 = vpop.permute.xlu0 %787
    %791 = vset.pattern.permute.xlu0 0
    %792 = vperm.xlu0 %791, %v778
    %v793 = vpop.permute.xlu0 %792
    %796 = vset.pattern.permute.xlu0 0
    %797 = vperm.xlu0 %796, %v779
    %v798 = vpop.permute.xlu0 %797
    %801 = vset.pattern.permute.xlu0 0
    %802 = vperm.xlu0 %801, %v780
    %v803 = vpop.permute.xlu0 %802
    %806 = vset.pattern.permute.xlu0 0
    %807 = vperm.xlu0 %806, %v781
    %v808 = vpop.permute.xlu0 %807
    %811 = vset.pattern.permute.xlu0 0
    %812 = vperm.xlu0 %811, %v782
    %v813 = vpop.permute.xlu0 %812
    %816 = vset.pattern.permute.xlu0 0
    %817 = vperm.xlu0 %816, %v783
    %v818 = vpop.permute.xlu0 %817
    %821 = vset.pattern.permute.xlu0 0
    %822 = vperm.xlu0 %821, %v784
    %v823 = vpop.permute.xlu0 %822
    %v825 = vadd.f32 %v769, %v788
    %v826 = vadd.f32 %v770, %v793
    %v827 = vadd.f32 %v771, %v798
    %v828 = vadd.f32 %v772, %v803
    %v829 = vadd.f32 %v773, %v808
    %v830 = vadd.f32 %v774, %v813
    %v831 = vadd.f32 %v775, %v818
    %v832 = vadd.f32 %v776, %v823
    %v833 = vmax.f32 %v825, 0.0
    %v834 = vmax.f32 %v826, 0.0
    %v835 = vmax.f32 %v827, 0.0
    %v836 = vmax.f32 %v828, 0.0
    %v837 = vmax.f32 %v829, 0.0
    %v838 = vmax.f32 %v830, 0.0
    %v839 = vmax.f32 %v831, 0.0
    %v840 = vmax.f32 %v832, 0.0
    %v841 = vpack.c.bf16 %v834, %v833
    %v842 = vpack.c.bf16 %v836, %v835
    %v843 = vpack.c.bf16 %v838, %v837
    %v844 = vpack.c.bf16 %v840, %v839
    %v845 = vld [vmem:[%s3] sm:$0xf]
    %v846 = vld [vmem:[%s3 + $0x4] sm:$0xf]
    %v847 = vld [vmem:[%s3 + $0x8] sm:$0xf]
    %v848 = vld [vmem:[%s3 + $0xc] sm:$0xf]
    %s849 = scalar_lea.vmem %s3, 16
    %v850 = vld [vmem:[%s849] sm:$0xf]
    %v851 = vld [vmem:[%s849 + $0x4] sm:$0xf]
    %v852 = vld [vmem:[%s849 + $0x8] sm:$0xf]
    %v853 = vld [vmem:[%s849 + $0xc] sm:$0xf]
    %v858 = vunpack.c.l.b16 %v850
    %v859 = vunpack.c.l.b16 %v851
    %v860 = vunpack.c.l.b16 %v852
    %v861 = vunpack.c.l.b16 %v853
    %v862 = vpack.c.b16 %v859, %v858
    %v863 = vpack.c.b16 %v861, %v860
    %868 = vrot.lane.b32.xlu0 %v841, 127
    %v869 = vpop.permute.xlu0 %868
    %870 = vrot.lane.b32.xlu0 %v842, 127
    %v871 = vpop.permute.xlu0 %870
    %872 = vrot.lane.b32.xlu0 %v843, 127
    %v873 = vpop.permute.xlu0 %872
    %874 = vrot.lane.b32.xlu0 %v844, 127
    %v875 = vpop.permute.xlu0 %874
    %vm880 = vcmask 523264
    %v882 = vsel %vm880, %v862, 0
    %v885 = vsel %vm880, %v863, 0
    %887 = vmatprep.subr.bf16.mxu0 0
    %888 = vmatpush1.bf16.msra.mxu0 %v869
    %889 = vmatprep.subr.bf16.mxu0 0
    %890 = vmatpush1.bf16.msra.mxu0 %v871
    %891 = vmatprep.subr.bf16.mxu0 0
    %892 = vmatpush1.bf16.msra.mxu0 %v873
    %893 = vmatprep.subr.bf16.mxu0 0
    %894 = vmatpush1.bf16.msra.mxu0 %v875
    %895 = vmatprep.subr.bf16.mxu0 0
    %896 = vmatpush1.bf16.msra.mxu0 0
    %897 = vmatprep.subr.bf16.mxu0 0
    %898 = vmatpush1.bf16.msra.mxu0 0
    %899 = vmatprep.subr.bf16.mxu0 0
    %900 = vmatpush1.bf16.msra.mxu0 0
    %901 = vmatprep.subr.bf16.mxu0 0
    %902 = vmatpush1.bf16.msra.mxu0 0
    %903 = vmatprep.subr.bf16.mxu0 0
    %904 = vmatpush1.bf16.msra.mxu0 0
    %905 = vmatprep.subr.bf16.mxu0 0
    %906 = vmatpush1.bf16.msra.mxu0 0
    %907 = vmatprep.subr.bf16.mxu0 0
    %908 = vmatpush1.bf16.msra.mxu0 0
    %909 = vmatprep.subr.bf16.mxu0 0
    %910 = vmatpush1.bf16.msra.mxu0 0
    %911 = vmatprep.subr.bf16.mxu0 0
    %912 = vmatpush1.bf16.msra.mxu0 0
    %913 = vmatprep.subr.bf16.mxu0 0
    %914 = vmatpush1.bf16.msra.mxu0 0
    %915 = vmatprep.subr.bf16.mxu0 0
    %916 = vmatpush1.bf16.msra.mxu0 0
    %917 = vmatprep.subr.bf16.mxu0 0
    %918 = vmatpush1.bf16.msra.mxu0 0
    %919 = vmatprep.mubr.bf16.mxu0 0
    %920 = vmatmul.mubr.bf16.gmra.mrb[0].mxu0 %v882
    %v921 = vpop.f32.mrb[0].mxu0
    %v922 = vadd.f32 0.0, %v921
    %v923 = vpop.f32.mrb[0].mxu0
    %v924 = vpop.f32.mrb[0].mxu0
    %v925 = vadd.f32 0.0, %v924
    %v926 = vpop.f32.mrb[0].mxu0
    %927 = vmatprep.mubr.bf16.mxu0 0
    %928 = vmatmul.mubr.bf16.gmra.mrb[0].mxu0 %v885
    %v929 = vpop.f32.mrb[0].mxu0
    %v930 = vadd.f32 0.0, %v929
    %v931 = vpop.f32.mrb[0].mxu0
    %v932 = vpop.f32.mrb[0].mxu0
    %v933 = vadd.f32 0.0, %v932
    %v934 = vpop.f32.mrb[0].mxu0
    %935 = vdwg.mxu0
    %v940 = vunpack.c.l.b16 %v845
    %v941 = vunpack.c.l.b16 %v846
    %v942 = vunpack.c.l.b16 %v847
    %v943 = vunpack.c.l.b16 %v848
    %v944 = vpack.c.b16 %v941, %v940
    %v945 = vpack.c.b16 %v943, %v942
    %v947 = vsel %vm880, %v944, 0
    %v950 = vsel %vm880, %v945, 0
    %952 = vmatprep.subr.bf16.mxu0 0
    %953 = vmatpush1.bf16.msra.mxu0 %v841
    %954 = vmatprep.subr.bf16.mxu0 0
    %955 = vmatpush1.bf16.msra.mxu0 %v842
    %956 = vmatprep.subr.bf16.mxu0 0
    %957 = vmatpush1.bf16.msra.mxu0 %v843
    %958 = vmatprep.subr.bf16.mxu0 0
    %959 = vmatpush1.bf16.msra.mxu0 %v844
    %960 = vmatprep.subr.bf16.mxu0 0
    %961 = vmatpush1.bf16.msra.mxu0 0
    %962 = vmatprep.subr.bf16.mxu0 0
    %963 = vmatpush1.bf16.msra.mxu0 0
    %964 = vmatprep.subr.bf16.mxu0 0
    %965 = vmatpush1.bf16.msra.mxu0 0
    %966 = vmatprep.subr.bf16.mxu0 0
    %967 = vmatpush1.bf16.msra.mxu0 0
    %968 = vmatprep.subr.bf16.mxu0 0
    %969 = vmatpush1.bf16.msra.mxu0 0
    %970 = vmatprep.subr.bf16.mxu0 0
    %971 = vmatpush1.bf16.msra.mxu0 0
    %972 = vmatprep.subr.bf16.mxu0 0
    %973 = vmatpush1.bf16.msra.mxu0 0
    %974 = vmatprep.subr.bf16.mxu0 0
    %975 = vmatpush1.bf16.msra.mxu0 0
    %976 = vmatprep.subr.bf16.mxu0 0
    %977 = vmatpush1.bf16.msra.mxu0 0
    %978 = vmatprep.subr.bf16.mxu0 0
    %979 = vmatpush1.bf16.msra.mxu0 0
    %980 = vmatprep.subr.bf16.mxu0 0
    %981 = vmatpush1.bf16.msra.mxu0 0
    %982 = vmatprep.subr.bf16.mxu0 0
    %983 = vmatpush1.bf16.msra.mxu0 0
    %984 = vmatprep.mubr.bf16.mxu0 0
    %985 = vmatmul.mubr.bf16.gmra.mrb[0].mxu0 %v947
    %v986 = vpop.f32.mrb[0].mxu0
    %v987 = vadd.f32 %v922, %v986
    %v988 = vpop.f32.mrb[0].mxu0
    %v989 = vpop.f32.mrb[0].mxu0
    %v990 = vadd.f32 %v925, %v989
    %v991 = vpop.f32.mrb[0].mxu0
    %992 = vmatprep.mubr.bf16.mxu0 0
    %993 = vmatmul.mubr.bf16.gmra.mrb[0].mxu0 %v950
    %v994 = vpop.f32.mrb[0].mxu0
    %v995 = vadd.f32 %v930, %v994
    %v996 = vpop.f32.mrb[0].mxu0
    %v997 = vpop.f32.mrb[0].mxu0
    %v998 = vadd.f32 %v933, %v997
    %v999 = vpop.f32.mrb[0].mxu0
    %1000 = vdwg.mxu0
    %s1001 = scalar_lea.vmem %s3, 32
    %v1002 = vld [vmem:[%s1001] sm:$0xf]
    %v1003 = vld [vmem:[%s1001 + $0x4] sm:$0xf]
    %v1004 = vld [vmem:[%s1001 + $0x8] sm:$0xf]
    %v1005 = vld [vmem:[%s1001 + $0xc] sm:$0xf]
    %v1010 = vunpack.c.l.b16 %v1002
    %v1011 = vunpack.c.l.b16 %v1003
    %v1012 = vunpack.c.l.b16 %v1004
    %v1013 = vunpack.c.l.b16 %v1005
    %v1014 = vpack.c.b16 %v1011, %v1010
    %v1015 = vpack.c.b16 %v1013, %v1012
    %1016 = vrot.lane.b32.xlu0 %v841, 117
    %v1017 = vpop.permute.xlu0 %1016
    %1018 = vrot.lane.b32.xlu0 %v842, 117
    %v1019 = vpop.permute.xlu0 %1018
    %1020 = vrot.lane.b32.xlu0 %v843, 117
    %v1021 = vpop.permute.xlu0 %1020
    %1022 = vrot.lane.b32.xlu0 %v844, 117
    %v1023 = vpop.permute.xlu0 %1022
    %v1029 = vsel %vm880, %v1014, 0
    %v1032 = vsel %vm880, %v1015, 0
    %1034 = vmatprep.subr.bf16.mxu0 0
    %1035 = vmatpush1.bf16.msra.mxu0 %v1017
    %1036 = vmatprep.subr.bf16.mxu0 0
    %1037 = vmatpush1.bf16.msra.mxu0 %v1019
    %1038 = vmatprep.subr.bf16.mxu0 0
    %1039 = vmatpush1.bf16.msra.mxu0 %v1021
    %1040 = vmatprep.subr.bf16.mxu0 0
    %1041 = vmatpush1.bf16.msra.mxu0 %v1023
    %1042 = vmatprep.subr.bf16.mxu0 0
    %1043 = vmatpush1.bf16.msra.mxu0 0
    %1044 = vmatprep.subr.bf16.mxu0 0
    %1045 = vmatpush1.bf16.msra.mxu0 0
    %1046 = vmatprep.subr.bf16.mxu0 0
    %1047 = vmatpush1.bf16.msra.mxu0 0
    %1048 = vmatprep.subr.bf16.mxu0 0
    %1049 = vmatpush1.bf16.msra.mxu0 0
    %1050 = vmatprep.subr.bf16.mxu0 0
    %1051 = vmatpush1.bf16.msra.mxu0 0
    %1052 = vmatprep.subr.bf16.mxu0 0
    %1053 = vmatpush1.bf16.msra.mxu0 0
    %1054 = vmatprep.subr.bf16.mxu0 0
    %1055 = vmatpush1.bf16.msra.mxu0 0
    %1056 = vmatprep.subr.bf16.mxu0 0
    %1057 = vmatpush1.bf16.msra.mxu0 0
    %1058 = vmatprep.subr.bf16.mxu0 0
    %1059 = vmatpush1.bf16.msra.mxu0 0
    %1060 = vmatprep.subr.bf16.mxu0 0
    %1061 = vmatpush1.bf16.msra.mxu0 0
    %1062 = vmatprep.subr.bf16.mxu0 0
    %1063 = vmatpush1.bf16.msra.mxu0 0
    %1064 = vmatprep.subr.bf16.mxu0 0
    %1065 = vmatpush1.bf16.msra.mxu0 0
    %1066 = vmatprep.mubr.bf16.mxu0 0
    %1067 = vmatmul.mubr.bf16.gmra.mrb[0].mxu0 %v1029
    %v1068 = vpop.f32.mrb[0].mxu0
    %v1069 = vadd.f32 0.0, %v1068
    %v1070 = vpop.f32.mrb[0].mxu0
    %v1071 = vpop.f32.mrb[0].mxu0
    %v1072 = vadd.f32 0.0, %v1071
    %v1073 = vpop.f32.mrb[0].mxu0
    %1074 = vmatprep.mubr.bf16.mxu0 0
    %1075 = vmatmul.mubr.bf16.gmra.mrb[0].mxu0 %v1032
    %v1076 = vpop.f32.mrb[0].mxu0
    %v1077 = vadd.f32 0.0, %v1076
    %v1078 = vpop.f32.mrb[0].mxu0
    %v1079 = vpop.f32.mrb[0].mxu0
    %v1080 = vadd.f32 0.0, %v1079
    %v1081 = vpop.f32.mrb[0].mxu0
    %1082 = vdwg.mxu0
    %v1083 = vadd.f32 %v987, %v1069
    %v1084 = vadd.f32 %v990, %v1072
    %v1085 = vadd.f32 %v995, %v1077
    %v1086 = vadd.f32 %v998, %v1080
    %s1087 = scalar_lea.vmem %s3, 48
    %v1088 = vld [vmem:[%s1087] sm:$0xf]
    %v1089 = vld [vmem:[%s1087 + $0x4] sm:$0xf]
    %v1090 = vld [vmem:[%s1087 + $0x8] sm:$0xf]
    %v1091 = vld [vmem:[%s1087 + $0xc] sm:$0xf]
    %v1096 = vunpack.c.l.b16 %v1088
    %v1097 = vunpack.c.l.b16 %v1089
    %v1098 = vunpack.c.l.b16 %v1090
    %v1099 = vunpack.c.l.b16 %v1091
    %v1100 = vpack.c.b16 %v1097, %v1096
    %v1101 = vpack.c.b16 %v1099, %v1098
    %1102 = vrot.lane.b32.xlu0 %v841, 116
    %v1103 = vpop.permute.xlu0 %1102
    %1104 = vrot.lane.b32.xlu0 %v842, 116
    %v1105 = vpop.permute.xlu0 %1104
    %1106 = vrot.lane.b32.xlu0 %v843, 116
    %v1107 = vpop.permute.xlu0 %1106
    %1108 = vrot.lane.b32.xlu0 %v844, 116
    %v1109 = vpop.permute.xlu0 %1108
    %v1115 = vsel %vm880, %v1100, 0
    %v1118 = vsel %vm880, %v1101, 0
    %1120 = vmatprep.subr.bf16.mxu0 0
    %1121 = vmatpush1.bf16.msra.mxu0 %v1103
    %1122 = vmatprep.subr.bf16.mxu0 0
    %1123 = vmatpush1.bf16.msra.mxu0 %v1105
    %1124 = vmatprep.subr.bf16.mxu0 0
    %1125 = vmatpush1.bf16.msra.mxu0 %v1107
    %1126 = vmatprep.subr.bf16.mxu0 0
    %1127 = vmatpush1.bf16.msra.mxu0 %v1109
    %1128 = vmatprep.subr.bf16.mxu0 0
    %1129 = vmatpush1.bf16.msra.mxu0 0
    %1130 = vmatprep.subr.bf16.mxu0 0
    %1131 = vmatpush1.bf16.msra.mxu0 0
    %1132 = vmatprep.subr.bf16.mxu0 0
    %1133 = vmatpush1.bf16.msra.mxu0 0
    %1134 = vmatprep.subr.bf16.mxu0 0
    %1135 = vmatpush1.bf16.msra.mxu0 0
    %1136 = vmatprep.subr.bf16.mxu0 0
    %1137 = vmatpush1.bf16.msra.mxu0 0
    %1138 = vmatprep.subr.bf16.mxu0 0
    %1139 = vmatpush1.bf16.msra.mxu0 0
    %1140 = vmatprep.subr.bf16.mxu0 0
    %1141 = vmatpush1.bf16.msra.mxu0 0
    %1142 = vmatprep.subr.bf16.mxu0 0
    %1143 = vmatpush1.bf16.msra.mxu0 0
    %1144 = vmatprep.subr.bf16.mxu0 0
    %1145 = vmatpush1.bf16.msra.mxu0 0
    %1146 = vmatprep.subr.bf16.mxu0 0
    %1147 = vmatpush1.bf16.msra.mxu0 0
    %1148 = vmatprep.subr.bf16.mxu0 0
    %1149 = vmatpush1.bf16.msra.mxu0 0
    %1150 = vmatprep.subr.bf16.mxu0 0
    %1151 = vmatpush1.bf16.msra.mxu0 0
    %1152 = vmatprep.mubr.bf16.mxu0 0
    %1153 = vmatmul.mubr.bf16.gmra.mrb[0].mxu0 %v1115
    %v1154 = vpop.f32.mrb[0].mxu0
    %v1155 = vadd.f32 0.0, %v1154
    %v1156 = vpop.f32.mrb[0].mxu0
    %v1157 = vpop.f32.mrb[0].mxu0
    %v1158 = vadd.f32 0.0, %v1157
    %v1159 = vpop.f32.mrb[0].mxu0
    %1160 = vmatprep.mubr.bf16.mxu0 0
    %1161 = vmatmul.mubr.bf16.gmra.mrb[0].mxu0 %v1118
    %v1162 = vpop.f32.mrb[0].mxu0
    %v1163 = vadd.f32 0.0, %v1162
    %v1164 = vpop.f32.mrb[0].mxu0
    %v1165 = vpop.f32.mrb[0].mxu0
    %v1166 = vadd.f32 0.0, %v1165
    %v1167 = vpop.f32.mrb[0].mxu0
    %1168 = vdwg.mxu0
    %v1169 = vadd.f32 %v1083, %v1155
    %v1170 = vadd.f32 %v1084, %v1158
    %v1171 = vadd.f32 %v1085, %v1163
    %v1172 = vadd.f32 %v1086, %v1166
    %v1173 = vld [vmem:[%s4] sm:$0xff]
    %v1174 = vld [vmem:[%s4 + $0x8] sm:$0xff]
    %v1175 = vld [vmem:[%s4 + $0x10] sm:$0xff]
    %v1176 = vld [vmem:[%s4 + $0x18] sm:$0xff]
    %1178 = vset.pattern.permute.xlu0 0
    %1179 = vperm.xlu0 %1178, %v1173
    %v1180 = vpop.permute.xlu0 %1179
    %1183 = vset.pattern.permute.xlu0 0
    %1184 = vperm.xlu0 %1183, %v1174
    %v1185 = vpop.permute.xlu0 %1184
    %1188 = vset.pattern.permute.xlu0 0
    %1189 = vperm.xlu0 %1188, %v1175
    %v1190 = vpop.permute.xlu0 %1189
    %1193 = vset.pattern.permute.xlu0 0
    %1194 = vperm.xlu0 %1193, %v1176
    %v1195 = vpop.permute.xlu0 %1194
    %v1197 = vadd.f32 %v1169, %v1180
    %v1198 = vadd.f32 %v1170, %v1185
    %v1199 = vadd.f32 %v1171, %v1190
    %v1200 = vadd.f32 %v1172, %v1195
    %v1201 = vmax.f32 %v1197, 0.0
    %v1202 = vmax.f32 %v1198, 0.0
    %v1203 = vmax.f32 %v1199, 0.0
    %v1204 = vmax.f32 %v1200, 0.0
    %v1205 = vpack.c.bf16 %v1202, %v1201
    %v1206 = vpack.c.bf16 %v1204, %v1203
    %v1207 = vld [vmem:[%s5] sm:$0xff]
    %v1208 = vld [vmem:[%s5 + $0x8] sm:$0xff]
    %v1209 = vld [vmem:[%s5 + $0x10] sm:$0xff]
    %v1210 = vld [vmem:[%s5 + $0x18] sm:$0xff]
    %v1211 = vld [vmem:[%s5 + $0x20] sm:$0xff]
    %v1212 = vld [vmem:[%s5 + $0x28] sm:$0xff]
    %v1213 = vld [vmem:[%s5 + $0x30] sm:$0xff]
    %v1214 = vld [vmem:[%s5 + $0x38] sm:$0xff]
    %v1215 = vld [vmem:[%s5 + $0x40] sm:$0xff]
    %v1216 = vld [vmem:[%s5 + $0x48] sm:$0xff]
    %v1217 = vld [vmem:[%s5 + $0x50] sm:$0xff]
    %v1218 = vld [vmem:[%s5 + $0x58] sm:$0xff]
    %v1219 = vld [vmem:[%s5 + $0x60] sm:$0x11]
    %s1220 = scalar_lea.vmem %s5, 104
    %v1221 = vld [vmem:[%s1220] sm:$0xff]
    %v1222 = vld [vmem:[%s1220 + $0x8] sm:$0xff]
    %v1223 = vld [vmem:[%s1220 + $0x10] sm:$0xff]
    %v1224 = vld [vmem:[%s1220 + $0x18] sm:$0xff]
    %v1225 = vld [vmem:[%s1220 + $0x20] sm:$0xff]
    %v1226 = vld [vmem:[%s1220 + $0x28] sm:$0xff]
    %v1227 = vld [vmem:[%s1220 + $0x30] sm:$0xff]
    %v1228 = vld [vmem:[%s1220 + $0x38] sm:$0xff]
    %v1229 = vld [vmem:[%s1220 + $0x40] sm:$0xff]
    %v1230 = vld [vmem:[%s1220 + $0x48] sm:$0xff]
    %v1231 = vld [vmem:[%s1220 + $0x50] sm:$0xff]
    %v1232 = vld [vmem:[%s1220 + $0x58] sm:$0xff]
    %v1233 = vld [vmem:[%s1220 + $0x60] sm:$0x11]
    %s1234 = scalar_lea.vmem %s5, 208
    %v1235 = vld [vmem:[%s1234] sm:$0xff]
    %v1236 = vld [vmem:[%s1234 + $0x8] sm:$0xff]
    %v1237 = vld [vmem:[%s1234 + $0x10] sm:$0xff]
    %v1238 = vld [vmem:[%s1234 + $0x18] sm:$0xff]
    %v1239 = vld [vmem:[%s1234 + $0x20] sm:$0xff]
    %v1240 = vld [vmem:[%s1234 + $0x28] sm:$0xff]
    %v1241 = vld [vmem:[%s1234 + $0x30] sm:$0xff]
    %v1242 = vld [vmem:[%s1234 + $0x38] sm:$0xff]
    %v1243 = vld [vmem:[%s1234 + $0x40] sm:$0xff]
    %v1244 = vld [vmem:[%s1234 + $0x48] sm:$0xff]
    %v1245 = vld [vmem:[%s1234 + $0x50] sm:$0xff]
    %v1246 = vld [vmem:[%s1234 + $0x58] sm:$0xff]
    %v1247 = vld [vmem:[%s1234 + $0x60] sm:$0x11]
    %s1248 = scalar_lea.vmem %s5, 312
    %v1249 = vld [vmem:[%s1248] sm:$0xff]
    %v1250 = vld [vmem:[%s1248 + $0x8] sm:$0xff]
    %v1251 = vld [vmem:[%s1248 + $0x10] sm:$0xff]
    %v1252 = vld [vmem:[%s1248 + $0x18] sm:$0xff]
    %v1253 = vld [vmem:[%s1248 + $0x20] sm:$0xff]
    %v1254 = vld [vmem:[%s1248 + $0x28] sm:$0xff]
    %v1255 = vld [vmem:[%s1248 + $0x30] sm:$0xff]
    %v1256 = vld [vmem:[%s1248 + $0x38] sm:$0xff]
    %v1257 = vld [vmem:[%s1248 + $0x40] sm:$0xff]
    %v1258 = vld [vmem:[%s1248 + $0x48] sm:$0xff]
    %v1259 = vld [vmem:[%s1248 + $0x50] sm:$0xff]
    %v1260 = vld [vmem:[%s1248 + $0x58] sm:$0xff]
    %v1261 = vld [vmem:[%s1248 + $0x60] sm:$0x11]
    %s1262 = scalar_lea.vmem %s5, 416
    %v1263 = vld [vmem:[%s1262] sm:$0xff]
    %v1264 = vld [vmem:[%s1262 + $0x8] sm:$0xff]
    %v1265 = vld [vmem:[%s1262 + $0x10] sm:$0xff]
    %v1266 = vld [vmem:[%s1262 + $0x18] sm:$0xff]
    %v1267 = vld [vmem:[%s1262 + $0x20] sm:$0xff]
    %v1268 = vld [vmem:[%s1262 + $0x28] sm:$0xff]
    %v1269 = vld [vmem:[%s1262 + $0x30] sm:$0xff]
    %v1270 = vld [vmem:[%s1262 + $0x38] sm:$0xff]
    %v1271 = vld [vmem:[%s1262 + $0x40] sm:$0xff]
    %v1272 = vld [vmem:[%s1262 + $0x48] sm:$0xff]
    %v1273 = vld [vmem:[%s1262 + $0x50] sm:$0xff]
    %v1274 = vld [vmem:[%s1262 + $0x58] sm:$0xff]
    %v1275 = vld [vmem:[%s1262 + $0x60] sm:$0x11]
    %s1276 = scalar_lea.vmem %s5, 520
    %v1277 = vld [vmem:[%s1276] sm:$0xff]
    %v1278 = vld [vmem:[%s1276 + $0x8] sm:$0xff]
    %v1279 = vld [vmem:[%s1276 + $0x10] sm:$0xff]
    %v1280 = vld [vmem:[%s1276 + $0x18] sm:$0xff]
    %v1281 = vld [vmem:[%s1276 + $0x20] sm:$0xff]
    %v1282 = vld [vmem:[%s1276 + $0x28] sm:$0xff]
    %v1283 = vld [vmem:[%s1276 + $0x30] sm:$0xff]
    %v1284 = vld [vmem:[%s1276 + $0x38] sm:$0xff]
    %v1285 = vld [vmem:[%s1276 + $0x40] sm:$0xff]
    %v1286 = vld [vmem:[%s1276 + $0x48] sm:$0xff]
    %v1287 = vld [vmem:[%s1276 + $0x50] sm:$0xff]
    %v1288 = vld [vmem:[%s1276 + $0x58] sm:$0xff]
    %v1289 = vld [vmem:[%s1276 + $0x60] sm:$0x11]
    %s1290 = scalar_lea.vmem %s5, 624
    %v1291 = vld [vmem:[%s1290] sm:$0xff]
    %v1292 = vld [vmem:[%s1290 + $0x8] sm:$0xff]
    %v1293 = vld [vmem:[%s1290 + $0x10] sm:$0xff]
    %v1294 = vld [vmem:[%s1290 + $0x18] sm:$0xff]
    %v1295 = vld [vmem:[%s1290 + $0x20] sm:$0xff]
    %v1296 = vld [vmem:[%s1290 + $0x28] sm:$0xff]
    %v1297 = vld [vmem:[%s1290 + $0x30] sm:$0xff]
    %v1298 = vld [vmem:[%s1290 + $0x38] sm:$0xff]
    %v1299 = vld [vmem:[%s1290 + $0x40] sm:$0xff]
    %v1300 = vld [vmem:[%s1290 + $0x48] sm:$0xff]
    %v1301 = vld [vmem:[%s1290 + $0x50] sm:$0xff]
    %v1302 = vld [vmem:[%s1290 + $0x58] sm:$0xff]
    %v1303 = vld [vmem:[%s1290 + $0x60] sm:$0x11]
    %s1304 = scalar_lea.vmem %s5, 728
    %v1305 = vld [vmem:[%s1304] sm:$0xff]
    %v1306 = vld [vmem:[%s1304 + $0x8] sm:$0xff]
    %v1307 = vld [vmem:[%s1304 + $0x10] sm:$0xff]
    %v1308 = vld [vmem:[%s1304 + $0x18] sm:$0xff]
    %v1309 = vld [vmem:[%s1304 + $0x20] sm:$0xff]
    %v1310 = vld [vmem:[%s1304 + $0x28] sm:$0xff]
    %v1311 = vld [vmem:[%s1304 + $0x30] sm:$0xff]
    %v1312 = vld [vmem:[%s1304 + $0x38] sm:$0xff]
    %v1313 = vld [vmem:[%s1304 + $0x40] sm:$0xff]
    %v1314 = vld [vmem:[%s1304 + $0x48] sm:$0xff]
    %v1315 = vld [vmem:[%s1304 + $0x50] sm:$0xff]
    %v1316 = vld [vmem:[%s1304 + $0x58] sm:$0xff]
    %v1317 = vld [vmem:[%s1304 + $0x60] sm:$0x11]
    %s1318 = scalar_lea.vmem %s5, 832
    %v1319 = vld [vmem:[%s1318] sm:$0xff]
    %v1320 = vld [vmem:[%s1318 + $0x8] sm:$0xff]
    %v1321 = vld [vmem:[%s1318 + $0x10] sm:$0xff]
    %v1322 = vld [vmem:[%s1318 + $0x18] sm:$0xff]
    %v1323 = vld [vmem:[%s1318 + $0x20] sm:$0xff]
    %v1324 = vld [vmem:[%s1318 + $0x28] sm:$0xff]
    %v1325 = vld [vmem:[%s1318 + $0x30] sm:$0xff]
    %v1326 = vld [vmem:[%s1318 + $0x38] sm:$0xff]
    %v1327 = vld [vmem:[%s1318 + $0x40] sm:$0xff]
    %v1328 = vld [vmem:[%s1318 + $0x48] sm:$0xff]
    %v1329 = vld [vmem:[%s1318 + $0x50] sm:$0xff]
    %v1330 = vld [vmem:[%s1318 + $0x58] sm:$0xff]
    %v1331 = vld [vmem:[%s1318 + $0x60] sm:$0x11]
    %v1333 = vrot.slane %v1205, 4
    %v1347 = vunpack.c.l.b16 %v1319
    %v1348 = vunpack.c.h.b16 %v1319
    %v1349 = vunpack.c.l.b16 %v1320
    %v1350 = vunpack.c.h.b16 %v1320
    %v1351 = vunpack.c.l.b16 %v1321
    %v1352 = vunpack.c.h.b16 %v1321
    %v1353 = vunpack.c.l.b16 %v1322
    %v1354 = vunpack.c.h.b16 %v1322
    %v1355 = vunpack.c.l.b16 %v1323
    %v1356 = vunpack.c.h.b16 %v1323
    %v1357 = vunpack.c.l.b16 %v1324
    %v1358 = vunpack.c.h.b16 %v1324
    %v1359 = vunpack.c.l.b16 %v1325
    %v1360 = vunpack.c.h.b16 %v1325
    %v1361 = vunpack.c.l.b16 %v1326
    %v1362 = vunpack.c.h.b16 %v1326
    %v1363 = vunpack.c.l.b16 %v1327
    %v1364 = vunpack.c.h.b16 %v1327
    %v1365 = vunpack.c.l.b16 %v1328
    %v1366 = vunpack.c.h.b16 %v1328
    %v1367 = vunpack.c.l.b16 %v1329
    %v1368 = vunpack.c.h.b16 %v1329
    %v1369 = vunpack.c.l.b16 %v1330
    %v1370 = vunpack.c.h.b16 %v1330
    %v1371 = vunpack.c.l.b16 %v1331
    %v1372 = vunpack.c.h.b16 %v1331
    %v1373 = vpack.c.b16 %v1349, %v1347
    %v1374 = vpack.c.b16 %v1350, %v1348
    %v1375 = vpack.c.b16 %v1353, %v1351
    %v1376 = vpack.c.b16 %v1354, %v1352
    %v1377 = vpack.c.b16 %v1357, %v1355
    %v1378 = vpack.c.b16 %v1358, %v1356
    %v1379 = vpack.c.b16 %v1361, %v1359
    %v1380 = vpack.c.b16 %v1362, %v1360
    %v1381 = vpack.c.b16 %v1365, %v1363
    %v1382 = vpack.c.b16 %v1366, %v1364
    %v1383 = vpack.c.b16 %v1369, %v1367
    %v1384 = vpack.c.b16 %v1370, %v1368
    %v1385 = vpack.c.b16 %v1371, %v1371
    %v1386 = vpack.c.b16 %v1372, %v1372
    %vm1399 = vcmask 793600
    %v1401 = vsel %vm1399, %v1333, 0
    %vm1403 = vcmask 1040384
    %v1404 = vsel 0, 4294967295, 65535
    %v1405 = vsel %vm1403, %v1404, 0
    %v1407 = vand.u32 %v1385, %v1405
    %v1410 = vand.u32 %v1386, %v1405
    %1412 = vmatprep.subr.bf16.mxu0 %v1374
    %1413 = vmatpush1.bf16.msra.mxu0 %v1373
    %1414 = vmatprep.subr.bf16.mxu0 %v1376
    %1415 = vmatpush1.bf16.msra.mxu0 %v1375
    %1416 = vmatprep.subr.bf16.mxu0 %v1378
    %1417 = vmatpush1.bf16.msra.mxu0 %v1377
    %1418 = vmatprep.subr.bf16.mxu0 %v1380
    %1419 = vmatpush1.bf16.msra.mxu0 %v1379
    %1420 = vmatprep.subr.bf16.mxu0 %v1382
    %1421 = vmatpush1.bf16.msra.mxu0 %v1381
    %1422 = vmatprep.subr.bf16.mxu0 %v1384
    %1423 = vmatpush1.bf16.msra.mxu0 %v1383
    %1424 = vmatprep.subr.bf16.mxu0 %v1410
    %1425 = vmatpush1.bf16.msra.mxu0 %v1407
    %1426 = vmatprep.subr.bf16.mxu0 0
    %1427 = vmatpush1.bf16.msra.mxu0 0
    %1428 = vmatprep.subr.bf16.mxu0 0
    %1429 = vmatpush1.bf16.msra.mxu0 0
    %1430 = vmatprep.subr.bf16.mxu0 0
    %1431 = vmatpush1.bf16.msra.mxu0 0
    %1432 = vmatprep.subr.bf16.mxu0 0
    %1433 = vmatpush1.bf16.msra.mxu0 0
    %1434 = vmatprep.subr.bf16.mxu0 0
    %1435 = vmatpush1.bf16.msra.mxu0 0
    %1436 = vmatprep.subr.bf16.mxu0 0
    %1437 = vmatpush1.bf16.msra.mxu0 0
    %1438 = vmatprep.subr.bf16.mxu0 0
    %1439 = vmatpush1.bf16.msra.mxu0 0
    %1440 = vmatprep.subr.bf16.mxu0 0
    %1441 = vmatpush1.bf16.msra.mxu0 0
    %1442 = vmatprep.subr.bf16.mxu0 0
    %1443 = vmatpush1.bf16.msra.mxu0 0
    %1444 = vmatprep.mubr.bf16.mxu0 0
    %1445 = vmatmul.mubr.bf16.gmra.mrb[0].mxu0 %v1401
    %v1446 = vpop.f32.mrb[0].mxu0
    %v1447 = vadd.f32 0.0, %v1446
    %v1448 = vpop.f32.mrb[0].mxu0
    %v1449 = vadd.f32 0.0, %v1448
    %v1450 = vpop.f32.mrb[0].mxu0
    %v1451 = vpop.f32.mrb[0].mxu0
    %1452 = vdwg.mxu0
    %v1466 = vunpack.c.l.b16 %v1207
    %v1467 = vunpack.c.h.b16 %v1207
    %v1468 = vunpack.c.l.b16 %v1208
    %v1469 = vunpack.c.h.b16 %v1208
    %v1470 = vunpack.c.l.b16 %v1209
    %v1471 = vunpack.c.h.b16 %v1209
    %v1472 = vunpack.c.l.b16 %v1210
    %v1473 = vunpack.c.h.b16 %v1210
    %v1474 = vunpack.c.l.b16 %v1211
    %v1475 = vunpack.c.h.b16 %v1211
    %v1476 = vunpack.c.l.b16 %v1212
    %v1477 = vunpack.c.h.b16 %v1212
    %v1478 = vunpack.c.l.b16 %v1213
    %v1479 = vunpack.c.h.b16 %v1213
    %v1480 = vunpack.c.l.b16 %v1214
    %v1481 = vunpack.c.h.b16 %v1214
    %v1482 = vunpack.c.l.b16 %v1215
    %v1483 = vunpack.c.h.b16 %v1215
    %v1484 = vunpack.c.l.b16 %v1216
    %v1485 = vunpack.c.h.b16 %v1216
    %v1486 = vunpack.c.l.b16 %v1217
    %v1487 = vunpack.c.h.b16 %v1217
    %v1488 = vunpack.c.l.b16 %v1218
    %v1489 = vunpack.c.h.b16 %v1218
    %v1490 = vunpack.c.l.b16 %v1219
    %v1491 = vunpack.c.h.b16 %v1219
    %v1492 = vpack.c.b16 %v1468, %v1466
    %v1493 = vpack.c.b16 %v1469, %v1467
    %v1494 = vpack.c.b16 %v1472, %v1470
    %v1495 = vpack.c.b16 %v1473, %v1471
    %v1496 = vpack.c.b16 %v1476, %v1474
    %v1497 = vpack.c.b16 %v1477, %v1475
    %v1498 = vpack.c.b16 %v1480, %v1478
    %v1499 = vpack.c.b16 %v1481, %v1479
    %v1500 = vpack.c.b16 %v1484, %v1482
    %v1501 = vpack.c.b16 %v1485, %v1483
    %v1502 = vpack.c.b16 %v1488, %v1486
    %v1503 = vpack.c.b16 %v1489, %v1487
    %v1504 = vpack.c.b16 %v1490, %v1490
    %v1505 = vpack.c.b16 %v1491, %v1491
    %v1519 = vsel %vm1399, %v1205, 0
    %v1522 = vand.u32 %v1504, %v1405
    %v1525 = vand.u32 %v1505, %v1405
    %1527 = vmatprep.subr.bf16.mxu0 %v1493
    %1528 = vmatpush1.bf16.msra.mxu0 %v1492
    %1529 = vmatprep.subr.bf16.mxu0 %v1495
    %1530 = vmatpush1.bf16.msra.mxu0 %v1494
    %1531 = vmatprep.subr.bf16.mxu0 %v1497
    %1532 = vmatpush1.bf16.msra.mxu0 %v1496
    %1533 = vmatprep.subr.bf16.mxu0 %v1499
    %1534 = vmatpush1.bf16.msra.mxu0 %v1498
    %1535 = vmatprep.subr.bf16.mxu0 %v1501
    %1536 = vmatpush1.bf16.msra.mxu0 %v1500
    %1537 = vmatprep.subr.bf16.mxu0 %v1503
    %1538 = vmatpush1.bf16.msra.mxu0 %v1502
    %1539 = vmatprep.subr.bf16.mxu0 %v1525
    %1540 = vmatpush1.bf16.msra.mxu0 %v1522
    %1541 = vmatprep.subr.bf16.mxu0 0
    %1542 = vmatpush1.bf16.msra.mxu0 0
    %1543 = vmatprep.subr.bf16.mxu0 0
    %1544 = vmatpush1.bf16.msra.mxu0 0
    %1545 = vmatprep.subr.bf16.mxu0 0
    %1546 = vmatpush1.bf16.msra.mxu0 0
    %1547 = vmatprep.subr.bf16.mxu0 0
    %1548 = vmatpush1.bf16.msra.mxu0 0
    %1549 = vmatprep.subr.bf16.mxu0 0
    %1550 = vmatpush1.bf16.msra.mxu0 0
    %1551 = vmatprep.subr.bf16.mxu0 0
    %1552 = vmatpush1.bf16.msra.mxu0 0
    %1553 = vmatprep.subr.bf16.mxu0 0
    %1554 = vmatpush1.bf16.msra.mxu0 0
    %1555 = vmatprep.subr.bf16.mxu0 0
    %1556 = vmatpush1.bf16.msra.mxu0 0
    %1557 = vmatprep.subr.bf16.mxu0 0
    %1558 = vmatpush1.bf16.msra.mxu0 0
    %1559 = vmatprep.mubr.bf16.mxu0 0
    %1560 = vmatmul.mubr.bf16.gmra.mrb[0].mxu0 %v1519
    %v1561 = vpop.f32.mrb[0].mxu0
    %v1562 = vadd.f32 %v1447, %v1561
    %v1563 = vpop.f32.mrb[0].mxu0
    %v1564 = vadd.f32 %v1449, %v1563
    %v1565 = vpop.f32.mrb[0].mxu0
    %v1566 = vpop.f32.mrb[0].mxu0
    %1567 = vdwg.mxu0
    %s1568 = scalar_lea.vmem %s5, 936
    %v1569 = vld [vmem:[%s1568] sm:$0xff]
    %v1570 = vld [vmem:[%s1568 + $0x8] sm:$0xff]
    %v1571 = vld [vmem:[%s1568 + $0x10] sm:$0xff]
    %v1572 = vld [vmem:[%s1568 + $0x18] sm:$0xff]
    %v1573 = vld [vmem:[%s1568 + $0x20] sm:$0xff]
    %v1574 = vld [vmem:[%s1568 + $0x28] sm:$0xff]
    %v1575 = vld [vmem:[%s1568 + $0x30] sm:$0xff]
    %v1576 = vld [vmem:[%s1568 + $0x38] sm:$0xff]
    %v1577 = vld [vmem:[%s1568 + $0x40] sm:$0xff]
    %v1578 = vld [vmem:[%s1568 + $0x48] sm:$0xff]
    %v1579 = vld [vmem:[%s1568 + $0x50] sm:$0xff]
    %v1580 = vld [vmem:[%s1568 + $0x58] sm:$0xff]
    %v1581 = vld [vmem:[%s1568 + $0x60] sm:$0x11]
    %v1582 = vshrl.u32 %v1205, 16
    %v1584 = vrot.slane %v1582, 4
    %v1598 = vunpack.c.l.b16 %v1569
    %v1599 = vunpack.c.h.b16 %v1569
    %v1600 = vunpack.c.l.b16 %v1570
    %v1601 = vunpack.c.h.b16 %v1570
    %v1602 = vunpack.c.l.b16 %v1571
    %v1603 = vunpack.c.h.b16 %v1571
    %v1604 = vunpack.c.l.b16 %v1572
    %v1605 = vunpack.c.h.b16 %v1572
    %v1606 = vunpack.c.l.b16 %v1573
    %v1607 = vunpack.c.h.b16 %v1573
    %v1608 = vunpack.c.l.b16 %v1574
    %v1609 = vunpack.c.h.b16 %v1574
    %v1610 = vunpack.c.l.b16 %v1575
    %v1611 = vunpack.c.h.b16 %v1575
    %v1612 = vunpack.c.l.b16 %v1576
    %v1613 = vunpack.c.h.b16 %v1576
    %v1614 = vunpack.c.l.b16 %v1577
    %v1615 = vunpack.c.h.b16 %v1577
    %v1616 = vunpack.c.l.b16 %v1578
    %v1617 = vunpack.c.h.b16 %v1578
    %v1618 = vunpack.c.l.b16 %v1579
    %v1619 = vunpack.c.h.b16 %v1579
    %v1620 = vunpack.c.l.b16 %v1580
    %v1621 = vunpack.c.h.b16 %v1580
    %v1622 = vunpack.c.l.b16 %v1581
    %v1623 = vunpack.c.h.b16 %v1581
    %v1624 = vpack.c.b16 %v1600, %v1598
    %v1625 = vpack.c.b16 %v1601, %v1599
    %v1626 = vpack.c.b16 %v1604, %v1602
    %v1627 = vpack.c.b16 %v1605, %v1603
    %v1628 = vpack.c.b16 %v1608, %v1606
    %v1629 = vpack.c.b16 %v1609, %v1607
    %v1630 = vpack.c.b16 %v1612, %v1610
    %v1631 = vpack.c.b16 %v1613, %v1611
    %v1632 = vpack.c.b16 %v1616, %v1614
    %v1633 = vpack.c.b16 %v1617, %v1615
    %v1634 = vpack.c.b16 %v1620, %v1618
    %v1635 = vpack.c.b16 %v1621, %v1619
    %v1636 = vpack.c.b16 %v1622, %v1622
    %v1637 = vpack.c.b16 %v1623, %v1623
    %v1651 = vsel %vm1399, %v1584, 0
    %v1654 = vand.u32 %v1636, %v1405
    %v1657 = vand.u32 %v1637, %v1405
    %1659 = vmatprep.subr.bf16.mxu0 %v1625
    %1660 = vmatpush1.bf16.msra.mxu0 %v1624
    %1661 = vmatprep.subr.bf16.mxu0 %v1627
    %1662 = vmatpush1.bf16.msra.mxu0 %v1626
    %1663 = vmatprep.subr.bf16.mxu0 %v1629
    %1664 = vmatpush1.bf16.msra.mxu0 %v1628
    %1665 = vmatprep.subr.bf16.mxu0 %v1631
    %1666 = vmatpush1.bf16.msra.mxu0 %v1630
    %1667 = vmatprep.subr.bf16.mxu0 %v1633
    %1668 = vmatpush1.bf16.msra.mxu0 %v1632
    %1669 = vmatprep.subr.bf16.mxu0 %v1635
    %1670 = vmatpush1.bf16.msra.mxu0 %v1634
    %1671 = vmatprep.subr.bf16.mxu0 %v1657
    %1672 = vmatpush1.bf16.msra.mxu0 %v1654
    %1673 = vmatprep.subr.bf16.mxu0 0
    %1674 = vmatpush1.bf16.msra.mxu0 0
    %1675 = vmatprep.subr.bf16.mxu0 0
    %1676 = vmatpush1.bf16.msra.mxu0 0
    %1677 = vmatprep.subr.bf16.mxu0 0
    %1678 = vmatpush1.bf16.msra.mxu0 0
    %1679 = vmatprep.subr.bf16.mxu0 0
    %1680 = vmatpush1.bf16.msra.mxu0 0
    %1681 = vmatprep.subr.bf16.mxu0 0
    %1682 = vmatpush1.bf16.msra.mxu0 0
    %1683 = vmatprep.subr.bf16.mxu0 0
    %1684 = vmatpush1.bf16.msra.mxu0 0
    %1685 = vmatprep.subr.bf16.mxu0 0
    %1686 = vmatpush1.bf16.msra.mxu0 0
    %1687 = vmatprep.subr.bf16.mxu0 0
    %1688 = vmatpush1.bf16.msra.mxu0 0
    %1689 = vmatprep.subr.bf16.mxu0 0
    %1690 = vmatpush1.bf16.msra.mxu0 0
    %1691 = vmatprep.mubr.bf16.mxu0 0
    %1692 = vmatmul.mubr.bf16.gmra.mrb[0].mxu0 %v1651
    %v1693 = vpop.f32.mrb[0].mxu0
    %v1694 = vadd.f32 0.0, %v1693
    %v1695 = vpop.f32.mrb[0].mxu0
    %v1696 = vadd.f32 0.0, %v1695
    %v1697 = vpop.f32.mrb[0].mxu0
    %v1698 = vpop.f32.mrb[0].mxu0
    %1699 = vdwg.mxu0
    %v1713 = vunpack.c.l.b16 %v1221
    %v1714 = vunpack.c.h.b16 %v1221
    %v1715 = vunpack.c.l.b16 %v1222
    %v1716 = vunpack.c.h.b16 %v1222
    %v1717 = vunpack.c.l.b16 %v1223
    %v1718 = vunpack.c.h.b16 %v1223
    %v1719 = vunpack.c.l.b16 %v1224
    %v1720 = vunpack.c.h.b16 %v1224
    %v1721 = vunpack.c.l.b16 %v1225
    %v1722 = vunpack.c.h.b16 %v1225
    %v1723 = vunpack.c.l.b16 %v1226
    %v1724 = vunpack.c.h.b16 %v1226
    %v1725 = vunpack.c.l.b16 %v1227
    %v1726 = vunpack.c.h.b16 %v1227
    %v1727 = vunpack.c.l.b16 %v1228
    %v1728 = vunpack.c.h.b16 %v1228
    %v1729 = vunpack.c.l.b16 %v1229
    %v1730 = vunpack.c.h.b16 %v1229
    %v1731 = vunpack.c.l.b16 %v1230
    %v1732 = vunpack.c.h.b16 %v1230
    %v1733 = vunpack.c.l.b16 %v1231
    %v1734 = vunpack.c.h.b16 %v1231
    %v1735 = vunpack.c.l.b16 %v1232
    %v1736 = vunpack.c.h.b16 %v1232
    %v1737 = vunpack.c.l.b16 %v1233
    %v1738 = vunpack.c.h.b16 %v1233
    %v1739 = vpack.c.b16 %v1715, %v1713
    %v1740 = vpack.c.b16 %v1716, %v1714
    %v1741 = vpack.c.b16 %v1719, %v1717
    %v1742 = vpack.c.b16 %v1720, %v1718
    %v1743 = vpack.c.b16 %v1723, %v1721
    %v1744 = vpack.c.b16 %v1724, %v1722
    %v1745 = vpack.c.b16 %v1727, %v1725
    %v1746 = vpack.c.b16 %v1728, %v1726
    %v1747 = vpack.c.b16 %v1731, %v1729
    %v1748 = vpack.c.b16 %v1732, %v1730
    %v1749 = vpack.c.b16 %v1735, %v1733
    %v1750 = vpack.c.b16 %v1736, %v1734
    %v1751 = vpack.c.b16 %v1737, %v1737
    %v1752 = vpack.c.b16 %v1738, %v1738
    %v1766 = vsel %vm1399, %v1582, 0
    %v1769 = vand.u32 %v1751, %v1405
    %v1772 = vand.u32 %v1752, %v1405
    %1774 = vmatprep.subr.bf16.mxu0 %v1740
    %1775 = vmatpush1.bf16.msra.mxu0 %v1739
    %1776 = vmatprep.subr.bf16.mxu0 %v1742
    %1777 = vmatpush1.bf16.msra.mxu0 %v1741
    %1778 = vmatprep.subr.bf16.mxu0 %v1744
    %1779 = vmatpush1.bf16.msra.mxu0 %v1743
    %1780 = vmatprep.subr.bf16.mxu0 %v1746
    %1781 = vmatpush1.bf16.msra.mxu0 %v1745
    %1782 = vmatprep.subr.bf16.mxu0 %v1748
    %1783 = vmatpush1.bf16.msra.mxu0 %v1747
    %1784 = vmatprep.subr.bf16.mxu0 %v1750
    %1785 = vmatpush1.bf16.msra.mxu0 %v1749
    %1786 = vmatprep.subr.bf16.mxu0 %v1772
    %1787 = vmatpush1.bf16.msra.mxu0 %v1769
    %1788 = vmatprep.subr.bf16.mxu0 0
    %1789 = vmatpush1.bf16.msra.mxu0 0
    %1790 = vmatprep.subr.bf16.mxu0 0
    %1791 = vmatpush1.bf16.msra.mxu0 0
    %1792 = vmatprep.subr.bf16.mxu0 0
    %1793 = vmatpush1.bf16.msra.mxu0 0
    %1794 = vmatprep.subr.bf16.mxu0 0
    %1795 = vmatpush1.bf16.msra.mxu0 0
    %1796 = vmatprep.subr.bf16.mxu0 0
    %1797 = vmatpush1.bf16.msra.mxu0 0
    %1798 = vmatprep.subr.bf16.mxu0 0
    %1799 = vmatpush1.bf16.msra.mxu0 0
    %1800 = vmatprep.subr.bf16.mxu0 0
    %1801 = vmatpush1.bf16.msra.mxu0 0
    %1802 = vmatprep.subr.bf16.mxu0 0
    %1803 = vmatpush1.bf16.msra.mxu0 0
    %1804 = vmatprep.subr.bf16.mxu0 0
    %1805 = vmatpush1.bf16.msra.mxu0 0
    %1806 = vmatprep.mubr.bf16.mxu0 0
    %1807 = vmatmul.mubr.bf16.gmra.mrb[0].mxu0 %v1766
    %v1808 = vpop.f32.mrb[0].mxu0
    %v1809 = vadd.f32 %v1694, %v1808
    %v1810 = vpop.f32.mrb[0].mxu0
    %v1811 = vadd.f32 %v1696, %v1810
    %v1812 = vpop.f32.mrb[0].mxu0
    %v1813 = vpop.f32.mrb[0].mxu0
    %1814 = vdwg.mxu0
    %s1815 = scalar_lea.vmem %s5, 1040
    %v1816 = vld [vmem:[%s1815] sm:$0xff]
    %v1817 = vld [vmem:[%s1815 + $0x8] sm:$0xff]
    %v1818 = vld [vmem:[%s1815 + $0x10] sm:$0xff]
    %v1819 = vld [vmem:[%s1815 + $0x18] sm:$0xff]
    %v1820 = vld [vmem:[%s1815 + $0x20] sm:$0xff]
    %v1821 = vld [vmem:[%s1815 + $0x28] sm:$0xff]
    %v1822 = vld [vmem:[%s1815 + $0x30] sm:$0xff]
    %v1823 = vld [vmem:[%s1815 + $0x38] sm:$0xff]
    %v1824 = vld [vmem:[%s1815 + $0x40] sm:$0xff]
    %v1825 = vld [vmem:[%s1815 + $0x48] sm:$0xff]
    %v1826 = vld [vmem:[%s1815 + $0x50] sm:$0xff]
    %v1827 = vld [vmem:[%s1815 + $0x58] sm:$0xff]
    %v1828 = vld [vmem:[%s1815 + $0x60] sm:$0x11]
    %v1829 = vrot.slane %v1205, 5
    %v1843 = vunpack.c.l.b16 %v1816
    %v1844 = vunpack.c.h.b16 %v1816
    %v1845 = vunpack.c.l.b16 %v1817
    %v1846 = vunpack.c.h.b16 %v1817
    %v1847 = vunpack.c.l.b16 %v1818
    %v1848 = vunpack.c.h.b16 %v1818
    %v1849 = vunpack.c.l.b16 %v1819
    %v1850 = vunpack.c.h.b16 %v1819
    %v1851 = vunpack.c.l.b16 %v1820
    %v1852 = vunpack.c.h.b16 %v1820
    %v1853 = vunpack.c.l.b16 %v1821
    %v1854 = vunpack.c.h.b16 %v1821
    %v1855 = vunpack.c.l.b16 %v1822
    %v1856 = vunpack.c.h.b16 %v1822
    %v1857 = vunpack.c.l.b16 %v1823
    %v1858 = vunpack.c.h.b16 %v1823
    %v1859 = vunpack.c.l.b16 %v1824
    %v1860 = vunpack.c.h.b16 %v1824
    %v1861 = vunpack.c.l.b16 %v1825
    %v1862 = vunpack.c.h.b16 %v1825
    %v1863 = vunpack.c.l.b16 %v1826
    %v1864 = vunpack.c.h.b16 %v1826
    %v1865 = vunpack.c.l.b16 %v1827
    %v1866 = vunpack.c.h.b16 %v1827
    %v1867 = vunpack.c.l.b16 %v1828
    %v1868 = vunpack.c.h.b16 %v1828
    %v1869 = vpack.c.b16 %v1845, %v1843
    %v1870 = vpack.c.b16 %v1846, %v1844
    %v1871 = vpack.c.b16 %v1849, %v1847
    %v1872 = vpack.c.b16 %v1850, %v1848
    %v1873 = vpack.c.b16 %v1853, %v1851
    %v1874 = vpack.c.b16 %v1854, %v1852
    %v1875 = vpack.c.b16 %v1857, %v1855
    %v1876 = vpack.c.b16 %v1858, %v1856
    %v1877 = vpack.c.b16 %v1861, %v1859
    %v1878 = vpack.c.b16 %v1862, %v1860
    %v1879 = vpack.c.b16 %v1865, %v1863
    %v1880 = vpack.c.b16 %v1866, %v1864
    %v1881 = vpack.c.b16 %v1867, %v1867
    %v1882 = vpack.c.b16 %v1868, %v1868
    %v1896 = vsel %vm1399, %v1829, 0
    %v1899 = vand.u32 %v1881, %v1405
    %v1902 = vand.u32 %v1882, %v1405
    %1904 = vmatprep.subr.bf16.mxu0 %v1870
    %1905 = vmatpush1.bf16.msra.mxu0 %v1869
    %1906 = vmatprep.subr.bf16.mxu0 %v1872
    %1907 = vmatpush1.bf16.msra.mxu0 %v1871
    %1908 = vmatprep.subr.bf16.mxu0 %v1874
    %1909 = vmatpush1.bf16.msra.mxu0 %v1873
    %1910 = vmatprep.subr.bf16.mxu0 %v1876
    %1911 = vmatpush1.bf16.msra.mxu0 %v1875
    %1912 = vmatprep.subr.bf16.mxu0 %v1878
    %1913 = vmatpush1.bf16.msra.mxu0 %v1877
    %1914 = vmatprep.subr.bf16.mxu0 %v1880
    %1915 = vmatpush1.bf16.msra.mxu0 %v1879
    %1916 = vmatprep.subr.bf16.mxu0 %v1902
    %1917 = vmatpush1.bf16.msra.mxu0 %v1899
    %1918 = vmatprep.subr.bf16.mxu0 0
    %1919 = vmatpush1.bf16.msra.mxu0 0
    %1920 = vmatprep.subr.bf16.mxu0 0
    %1921 = vmatpush1.bf16.msra.mxu0 0
    %1922 = vmatprep.subr.bf16.mxu0 0
    %1923 = vmatpush1.bf16.msra.mxu0 0
    %1924 = vmatprep.subr.bf16.mxu0 0
    %1925 = vmatpush1.bf16.msra.mxu0 0
    %1926 = vmatprep.subr.bf16.mxu0 0
    %1927 = vmatpush1.bf16.msra.mxu0 0
    %1928 = vmatprep.subr.bf16.mxu0 0
    %1929 = vmatpush1.bf16.msra.mxu0 0
    %1930 = vmatprep.subr.bf16.mxu0 0
    %1931 = vmatpush1.bf16.msra.mxu0 0
    %1932 = vmatprep.subr.bf16.mxu0 0
    %1933 = vmatpush1.bf16.msra.mxu0 0
    %1934 = vmatprep.subr.bf16.mxu0 0
    %1935 = vmatpush1.bf16.msra.mxu0 0
    %1936 = vmatprep.mubr.bf16.mxu0 0
    %1937 = vmatmul.mubr.bf16.gmra.mrb[0].mxu0 %v1896
    %v1938 = vpop.f32.mrb[0].mxu0
    %v1939 = vadd.f32 0.0, %v1938
    %v1940 = vpop.f32.mrb[0].mxu0
    %v1941 = vadd.f32 0.0, %v1940
    %v1942 = vpop.f32.mrb[0].mxu0
    %v1943 = vpop.f32.mrb[0].mxu0
    %1944 = vdwg.mxu0
    %v1945 = vrot.slane %v1205, 1
    %v1959 = vunpack.c.l.b16 %v1235
    %v1960 = vunpack.c.h.b16 %v1235
    %v1961 = vunpack.c.l.b16 %v1236
    %v1962 = vunpack.c.h.b16 %v1236
    %v1963 = vunpack.c.l.b16 %v1237
    %v1964 = vunpack.c.h.b16 %v1237
    %v1965 = vunpack.c.l.b16 %v1238
    %v1966 = vunpack.c.h.b16 %v1238
    %v1967 = vunpack.c.l.b16 %v1239
    %v1968 = vunpack.c.h.b16 %v1239
    %v1969 = vunpack.c.l.b16 %v1240
    %v1970 = vunpack.c.h.b16 %v1240
    %v1971 = vunpack.c.l.b16 %v1241
    %v1972 = vunpack.c.h.b16 %v1241
    %v1973 = vunpack.c.l.b16 %v1242
    %v1974 = vunpack.c.h.b16 %v1242
    %v1975 = vunpack.c.l.b16 %v1243
    %v1976 = vunpack.c.h.b16 %v1243
    %v1977 = vunpack.c.l.b16 %v1244
    %v1978 = vunpack.c.h.b16 %v1244
    %v1979 = vunpack.c.l.b16 %v1245
    %v1980 = vunpack.c.h.b16 %v1245
    %v1981 = vunpack.c.l.b16 %v1246
    %v1982 = vunpack.c.h.b16 %v1246
    %v1983 = vunpack.c.l.b16 %v1247
    %v1984 = vunpack.c.h.b16 %v1247
    %v1985 = vpack.c.b16 %v1961, %v1959
    %v1986 = vpack.c.b16 %v1962, %v1960
    %v1987 = vpack.c.b16 %v1965, %v1963
    %v1988 = vpack.c.b16 %v1966, %v1964
    %v1989 = vpack.c.b16 %v1969, %v1967
    %v1990 = vpack.c.b16 %v1970, %v1968
    %v1991 = vpack.c.b16 %v1973, %v1971
    %v1992 = vpack.c.b16 %v1974, %v1972
    %v1993 = vpack.c.b16 %v1977, %v1975
    %v1994 = vpack.c.b16 %v1978, %v1976
    %v1995 = vpack.c.b16 %v1981, %v1979
    %v1996 = vpack.c.b16 %v1982, %v1980
    %v1997 = vpack.c.b16 %v1983, %v1983
    %v1998 = vpack.c.b16 %v1984, %v1984
    %v2012 = vsel %vm1399, %v1945, 0
    %v2015 = vand.u32 %v1997, %v1405
    %v2018 = vand.u32 %v1998, %v1405
    %2020 = vmatprep.subr.bf16.mxu0 %v1986
    %2021 = vmatpush1.bf16.msra.mxu0 %v1985
    %2022 = vmatprep.subr.bf16.mxu0 %v1988
    %2023 = vmatpush1.bf16.msra.mxu0 %v1987
    %2024 = vmatprep.subr.bf16.mxu0 %v1990
    %2025 = vmatpush1.bf16.msra.mxu0 %v1989
    %2026 = vmatprep.subr.bf16.mxu0 %v1992
    %2027 = vmatpush1.bf16.msra.mxu0 %v1991
    %2028 = vmatprep.subr.bf16.mxu0 %v1994
    %2029 = vmatpush1.bf16.msra.mxu0 %v1993
    %2030 = vmatprep.subr.bf16.mxu0 %v1996
    %2031 = vmatpush1.bf16.msra.mxu0 %v1995
    %2032 = vmatprep.subr.bf16.mxu0 %v2018
    %2033 = vmatpush1.bf16.msra.mxu0 %v2015
    %2034 = vmatprep.subr.bf16.mxu0 0
    %2035 = vmatpush1.bf16.msra.mxu0 0
    %2036 = vmatprep.subr.bf16.mxu0 0
    %2037 = vmatpush1.bf16.msra.mxu0 0
    %2038 = vmatprep.subr.bf16.mxu0 0
    %2039 = vmatpush1.bf16.msra.mxu0 0
    %2040 = vmatprep.subr.bf16.mxu0 0
    %2041 = vmatpush1.bf16.msra.mxu0 0
    %2042 = vmatprep.subr.bf16.mxu0 0
    %2043 = vmatpush1.bf16.msra.mxu0 0
    %2044 = vmatprep.subr.bf16.mxu0 0
    %2045 = vmatpush1.bf16.msra.mxu0 0
    %2046 = vmatprep.subr.bf16.mxu0 0
    %2047 = vmatpush1.bf16.msra.mxu0 0
    %2048 = vmatprep.subr.bf16.mxu0 0
    %2049 = vmatpush1.bf16.msra.mxu0 0
    %2050 = vmatprep.subr.bf16.mxu0 0
    %2051 = vmatpush1.bf16.msra.mxu0 0
    %2052 = vmatprep.mubr.bf16.mxu0 0
    %2053 = vmatmul.mubr.bf16.gmra.mrb[0].mxu0 %v2012
    %v2054 = vpop.f32.mrb[0].mxu0
    %v2055 = vadd.f32 %v1939, %v2054
    %v2056 = vpop.f32.mrb[0].mxu0
    %v2057 = vadd.f32 %v1941, %v2056
    %v2058 = vpop.f32.mrb[0].mxu0
    %v2059 = vpop.f32.mrb[0].mxu0
    %2060 = vdwg.mxu0
    %s2061 = scalar_lea.vmem %s5, 1144
    %v2062 = vld [vmem:[%s2061] sm:$0xff]
    %v2063 = vld [vmem:[%s2061 + $0x8] sm:$0xff]
    %v2064 = vld [vmem:[%s2061 + $0x10] sm:$0xff]
    %v2065 = vld [vmem:[%s2061 + $0x18] sm:$0xff]
    %v2066 = vld [vmem:[%s2061 + $0x20] sm:$0xff]
    %v2067 = vld [vmem:[%s2061 + $0x28] sm:$0xff]
    %v2068 = vld [vmem:[%s2061 + $0x30] sm:$0xff]
    %v2069 = vld [vmem:[%s2061 + $0x38] sm:$0xff]
    %v2070 = vld [vmem:[%s2061 + $0x40] sm:$0xff]
    %v2071 = vld [vmem:[%s2061 + $0x48] sm:$0xff]
    %v2072 = vld [vmem:[%s2061 + $0x50] sm:$0xff]
    %v2073 = vld [vmem:[%s2061 + $0x58] sm:$0xff]
    %v2074 = vld [vmem:[%s2061 + $0x60] sm:$0x11]
    %v2075 = vrot.slane %v1582, 5
    %v2089 = vunpack.c.l.b16 %v2062
    %v2090 = vunpack.c.h.b16 %v2062
    %v2091 = vunpack.c.l.b16 %v2063
    %v2092 = vunpack.c.h.b16 %v2063
    %v2093 = vunpack.c.l.b16 %v2064
    %v2094 = vunpack.c.h.b16 %v2064
    %v2095 = vunpack.c.l.b16 %v2065
    %v2096 = vunpack.c.h.b16 %v2065
    %v2097 = vunpack.c.l.b16 %v2066
    %v2098 = vunpack.c.h.b16 %v2066
    %v2099 = vunpack.c.l.b16 %v2067
    %v2100 = vunpack.c.h.b16 %v2067
    %v2101 = vunpack.c.l.b16 %v2068
    %v2102 = vunpack.c.h.b16 %v2068
    %v2103 = vunpack.c.l.b16 %v2069
    %v2104 = vunpack.c.h.b16 %v2069
    %v2105 = vunpack.c.l.b16 %v2070
    %v2106 = vunpack.c.h.b16 %v2070
    %v2107 = vunpack.c.l.b16 %v2071
    %v2108 = vunpack.c.h.b16 %v2071
    %v2109 = vunpack.c.l.b16 %v2072
    %v2110 = vunpack.c.h.b16 %v2072
    %v2111 = vunpack.c.l.b16 %v2073
    %v2112 = vunpack.c.h.b16 %v2073
    %v2113 = vunpack.c.l.b16 %v2074
    %v2114 = vunpack.c.h.b16 %v2074
    %v2115 = vpack.c.b16 %v2091, %v2089
    %v2116 = vpack.c.b16 %v2092, %v2090
    %v2117 = vpack.c.b16 %v2095, %v2093
    %v2118 = vpack.c.b16 %v2096, %v2094
    %v2119 = vpack.c.b16 %v2099, %v2097
    %v2120 = vpack.c.b16 %v2100, %v2098
    %v2121 = vpack.c.b16 %v2103, %v2101
    %v2122 = vpack.c.b16 %v2104, %v2102
    %v2123 = vpack.c.b16 %v2107, %v2105
    %v2124 = vpack.c.b16 %v2108, %v2106
    %v2125 = vpack.c.b16 %v2111, %v2109
    %v2126 = vpack.c.b16 %v2112, %v2110
    %v2127 = vpack.c.b16 %v2113, %v2113
    %v2128 = vpack.c.b16 %v2114, %v2114
    %v2142 = vsel %vm1399, %v2075, 0
    %v2145 = vand.u32 %v2127, %v1405
    %v2148 = vand.u32 %v2128, %v1405
    %2150 = vmatprep.subr.bf16.mxu0 %v2116
    %2151 = vmatpush1.bf16.msra.mxu0 %v2115
    %2152 = vmatprep.subr.bf16.mxu0 %v2118
    %2153 = vmatpush1.bf16.msra.mxu0 %v2117
    %2154 = vmatprep.subr.bf16.mxu0 %v2120
    %2155 = vmatpush1.bf16.msra.mxu0 %v2119
    %2156 = vmatprep.subr.bf16.mxu0 %v2122
    %2157 = vmatpush1.bf16.msra.mxu0 %v2121
    %2158 = vmatprep.subr.bf16.mxu0 %v2124
    %2159 = vmatpush1.bf16.msra.mxu0 %v2123
    %2160 = vmatprep.subr.bf16.mxu0 %v2126
    %2161 = vmatpush1.bf16.msra.mxu0 %v2125
    %2162 = vmatprep.subr.bf16.mxu0 %v2148
    %2163 = vmatpush1.bf16.msra.mxu0 %v2145
    %2164 = vmatprep.subr.bf16.mxu0 0
    %2165 = vmatpush1.bf16.msra.mxu0 0
    %2166 = vmatprep.subr.bf16.mxu0 0
    %2167 = vmatpush1.bf16.msra.mxu0 0
    %2168 = vmatprep.subr.bf16.mxu0 0
    %2169 = vmatpush1.bf16.msra.mxu0 0
    %2170 = vmatprep.subr.bf16.mxu0 0
    %2171 = vmatpush1.bf16.msra.mxu0 0
    %2172 = vmatprep.subr.bf16.mxu0 0
    %2173 = vmatpush1.bf16.msra.mxu0 0
    %2174 = vmatprep.subr.bf16.mxu0 0
    %2175 = vmatpush1.bf16.msra.mxu0 0
    %2176 = vmatprep.subr.bf16.mxu0 0
    %2177 = vmatpush1.bf16.msra.mxu0 0
    %2178 = vmatprep.subr.bf16.mxu0 0
    %2179 = vmatpush1.bf16.msra.mxu0 0
    %2180 = vmatprep.subr.bf16.mxu0 0
    %2181 = vmatpush1.bf16.msra.mxu0 0
    %2182 = vmatprep.mubr.bf16.mxu0 0
    %2183 = vmatmul.mubr.bf16.gmra.mrb[0].mxu0 %v2142
    %v2184 = vpop.f32.mrb[0].mxu0
    %v2185 = vadd.f32 0.0, %v2184
    %v2186 = vpop.f32.mrb[0].mxu0
    %v2187 = vadd.f32 0.0, %v2186
    %v2188 = vpop.f32.mrb[0].mxu0
    %v2189 = vpop.f32.mrb[0].mxu0
    %2190 = vdwg.mxu0
    %v2191 = vrot.slane %v1582, 1
    %v2205 = vunpack.c.l.b16 %v1249
    %v2206 = vunpack.c.h.b16 %v1249
    %v2207 = vunpack.c.l.b16 %v1250
    %v2208 = vunpack.c.h.b16 %v1250
    %v2209 = vunpack.c.l.b16 %v1251
    %v2210 = vunpack.c.h.b16 %v1251
    %v2211 = vunpack.c.l.b16 %v1252
    %v2212 = vunpack.c.h.b16 %v1252
    %v2213 = vunpack.c.l.b16 %v1253
    %v2214 = vunpack.c.h.b16 %v1253
    %v2215 = vunpack.c.l.b16 %v1254
    %v2216 = vunpack.c.h.b16 %v1254
    %v2217 = vunpack.c.l.b16 %v1255
    %v2218 = vunpack.c.h.b16 %v1255
    %v2219 = vunpack.c.l.b16 %v1256
    %v2220 = vunpack.c.h.b16 %v1256
    %v2221 = vunpack.c.l.b16 %v1257
    %v2222 = vunpack.c.h.b16 %v1257
    %v2223 = vunpack.c.l.b16 %v1258
    %v2224 = vunpack.c.h.b16 %v1258
    %v2225 = vunpack.c.l.b16 %v1259
    %v2226 = vunpack.c.h.b16 %v1259
    %v2227 = vunpack.c.l.b16 %v1260
    %v2228 = vunpack.c.h.b16 %v1260
    %v2229 = vunpack.c.l.b16 %v1261
    %v2230 = vunpack.c.h.b16 %v1261
    %v2231 = vpack.c.b16 %v2207, %v2205
    %v2232 = vpack.c.b16 %v2208, %v2206
    %v2233 = vpack.c.b16 %v2211, %v2209
    %v2234 = vpack.c.b16 %v2212, %v2210
    %v2235 = vpack.c.b16 %v2215, %v2213
    %v2236 = vpack.c.b16 %v2216, %v2214
    %v2237 = vpack.c.b16 %v2219, %v2217
    %v2238 = vpack.c.b16 %v2220, %v2218
    %v2239 = vpack.c.b16 %v2223, %v2221
    %v2240 = vpack.c.b16 %v2224, %v2222
    %v2241 = vpack.c.b16 %v2227, %v2225
    %v2242 = vpack.c.b16 %v2228, %v2226
    %v2243 = vpack.c.b16 %v2229, %v2229
    %v2244 = vpack.c.b16 %v2230, %v2230
    %v2258 = vsel %vm1399, %v2191, 0
    %v2261 = vand.u32 %v2243, %v1405
    %v2264 = vand.u32 %v2244, %v1405
    %2266 = vmatprep.subr.bf16.mxu0 %v2232
    %2267 = vmatpush1.bf16.msra.mxu0 %v2231
    %2268 = vmatprep.subr.bf16.mxu0 %v2234
    %2269 = vmatpush1.bf16.msra.mxu0 %v2233
    %2270 = vmatprep.subr.bf16.mxu0 %v2236
    %2271 = vmatpush1.bf16.msra.mxu0 %v2235
    %2272 = vmatprep.subr.bf16.mxu0 %v2238
    %2273 = vmatpush1.bf16.msra.mxu0 %v2237
    %2274 = vmatprep.subr.bf16.mxu0 %v2240
    %2275 = vmatpush1.bf16.msra.mxu0 %v2239
    %2276 = vmatprep.subr.bf16.mxu0 %v2242
    %2277 = vmatpush1.bf16.msra.mxu0 %v2241
    %2278 = vmatprep.subr.bf16.mxu0 %v2264
    %2279 = vmatpush1.bf16.msra.mxu0 %v2261
    %2280 = vmatprep.subr.bf16.mxu0 0
    %2281 = vmatpush1.bf16.msra.mxu0 0
    %2282 = vmatprep.subr.bf16.mxu0 0
    %2283 = vmatpush1.bf16.msra.mxu0 0
    %2284 = vmatprep.subr.bf16.mxu0 0
    %2285 = vmatpush1.bf16.msra.mxu0 0
    %2286 = vmatprep.subr.bf16.mxu0 0
    %2287 = vmatpush1.bf16.msra.mxu0 0
    %2288 = vmatprep.subr.bf16.mxu0 0
    %2289 = vmatpush1.bf16.msra.mxu0 0
    %2290 = vmatprep.subr.bf16.mxu0 0
    %2291 = vmatpush1.bf16.msra.mxu0 0
    %2292 = vmatprep.subr.bf16.mxu0 0
    %2293 = vmatpush1.bf16.msra.mxu0 0
    %2294 = vmatprep.subr.bf16.mxu0 0
    %2295 = vmatpush1.bf16.msra.mxu0 0
    %2296 = vmatprep.subr.bf16.mxu0 0
    %2297 = vmatpush1.bf16.msra.mxu0 0
    %2298 = vmatprep.mubr.bf16.mxu0 0
    %2299 = vmatmul.mubr.bf16.gmra.mrb[0].mxu0 %v2258
    %v2300 = vpop.f32.mrb[0].mxu0
    %v2301 = vadd.f32 %v2185, %v2300
    %v2302 = vpop.f32.mrb[0].mxu0
    %v2303 = vadd.f32 %v2187, %v2302
    %v2304 = vpop.f32.mrb[0].mxu0
    %v2305 = vpop.f32.mrb[0].mxu0
    %2306 = vdwg.mxu0
    %s2307 = scalar_lea.vmem %s5, 1248
    %v2308 = vld [vmem:[%s2307] sm:$0xff]
    %v2309 = vld [vmem:[%s2307 + $0x8] sm:$0xff]
    %v2310 = vld [vmem:[%s2307 + $0x10] sm:$0xff]
    %v2311 = vld [vmem:[%s2307 + $0x18] sm:$0xff]
    %v2312 = vld [vmem:[%s2307 + $0x20] sm:$0xff]
    %v2313 = vld [vmem:[%s2307 + $0x28] sm:$0xff]
    %v2314 = vld [vmem:[%s2307 + $0x30] sm:$0xff]
    %v2315 = vld [vmem:[%s2307 + $0x38] sm:$0xff]
    %v2316 = vld [vmem:[%s2307 + $0x40] sm:$0xff]
    %v2317 = vld [vmem:[%s2307 + $0x48] sm:$0xff]
    %v2318 = vld [vmem:[%s2307 + $0x50] sm:$0xff]
    %v2319 = vld [vmem:[%s2307 + $0x58] sm:$0xff]
    %v2320 = vld [vmem:[%s2307 + $0x60] sm:$0x11]
    %v2321 = vrot.slane %v1205, 6
    %v2335 = vunpack.c.l.b16 %v2308
    %v2336 = vunpack.c.h.b16 %v2308
    %v2337 = vunpack.c.l.b16 %v2309
    %v2338 = vunpack.c.h.b16 %v2309
    %v2339 = vunpack.c.l.b16 %v2310
    %v2340 = vunpack.c.h.b16 %v2310
    %v2341 = vunpack.c.l.b16 %v2311
    %v2342 = vunpack.c.h.b16 %v2311
    %v2343 = vunpack.c.l.b16 %v2312
    %v2344 = vunpack.c.h.b16 %v2312
    %v2345 = vunpack.c.l.b16 %v2313
    %v2346 = vunpack.c.h.b16 %v2313
    %v2347 = vunpack.c.l.b16 %v2314
    %v2348 = vunpack.c.h.b16 %v2314
    %v2349 = vunpack.c.l.b16 %v2315
    %v2350 = vunpack.c.h.b16 %v2315
    %v2351 = vunpack.c.l.b16 %v2316
    %v2352 = vunpack.c.h.b16 %v2316
    %v2353 = vunpack.c.l.b16 %v2317
    %v2354 = vunpack.c.h.b16 %v2317
    %v2355 = vunpack.c.l.b16 %v2318
    %v2356 = vunpack.c.h.b16 %v2318
    %v2357 = vunpack.c.l.b16 %v2319
    %v2358 = vunpack.c.h.b16 %v2319
    %v2359 = vunpack.c.l.b16 %v2320
    %v2360 = vunpack.c.h.b16 %v2320
    %v2361 = vpack.c.b16 %v2337, %v2335
    %v2362 = vpack.c.b16 %v2338, %v2336
    %v2363 = vpack.c.b16 %v2341, %v2339
    %v2364 = vpack.c.b16 %v2342, %v2340
    %v2365 = vpack.c.b16 %v2345, %v2343
    %v2366 = vpack.c.b16 %v2346, %v2344
    %v2367 = vpack.c.b16 %v2349, %v2347
    %v2368 = vpack.c.b16 %v2350, %v2348
    %v2369 = vpack.c.b16 %v2353, %v2351
    %v2370 = vpack.c.b16 %v2354, %v2352
    %v2371 = vpack.c.b16 %v2357, %v2355
    %v2372 = vpack.c.b16 %v2358, %v2356
    %v2373 = vpack.c.b16 %v2359, %v2359
    %v2374 = vpack.c.b16 %v2360, %v2360
    %v2388 = vsel %vm1399, %v2321, 0
    %v2391 = vand.u32 %v2373, %v1405
    %v2394 = vand.u32 %v2374, %v1405
    %2396 = vmatprep.subr.bf16.mxu0 %v2362
    %2397 = vmatpush1.bf16.msra.mxu0 %v2361
    %2398 = vmatprep.subr.bf16.mxu0 %v2364
    %2399 = vmatpush1.bf16.msra.mxu0 %v2363
    %2400 = vmatprep.subr.bf16.mxu0 %v2366
    %2401 = vmatpush1.bf16.msra.mxu0 %v2365
    %2402 = vmatprep.subr.bf16.mxu0 %v2368
    %2403 = vmatpush1.bf16.msra.mxu0 %v2367
    %2404 = vmatprep.subr.bf16.mxu0 %v2370
    %2405 = vmatpush1.bf16.msra.mxu0 %v2369
    %2406 = vmatprep.subr.bf16.mxu0 %v2372
    %2407 = vmatpush1.bf16.msra.mxu0 %v2371
    %2408 = vmatprep.subr.bf16.mxu0 %v2394
    %2409 = vmatpush1.bf16.msra.mxu0 %v2391
    %2410 = vmatprep.subr.bf16.mxu0 0
    %2411 = vmatpush1.bf16.msra.mxu0 0
    %2412 = vmatprep.subr.bf16.mxu0 0
    %2413 = vmatpush1.bf16.msra.mxu0 0
    %2414 = vmatprep.subr.bf16.mxu0 0
    %2415 = vmatpush1.bf16.msra.mxu0 0
    %2416 = vmatprep.subr.bf16.mxu0 0
    %2417 = vmatpush1.bf16.msra.mxu0 0
    %2418 = vmatprep.subr.bf16.mxu0 0
    %2419 = vmatpush1.bf16.msra.mxu0 0
    %2420 = vmatprep.subr.bf16.mxu0 0
    %2421 = vmatpush1.bf16.msra.mxu0 0
    %2422 = vmatprep.subr.bf16.mxu0 0
    %2423 = vmatpush1.bf16.msra.mxu0 0
    %2424 = vmatprep.subr.bf16.mxu0 0
    %2425 = vmatpush1.bf16.msra.mxu0 0
    %2426 = vmatprep.subr.bf16.mxu0 0
    %2427 = vmatpush1.bf16.msra.mxu0 0
    %2428 = vmatprep.mubr.bf16.mxu0 0
    %2429 = vmatmul.mubr.bf16.gmra.mrb[0].mxu0 %v2388
    %v2430 = vpop.f32.mrb[0].mxu0
    %v2431 = vadd.f32 0.0, %v2430
    %v2432 = vpop.f32.mrb[0].mxu0
    %v2433 = vadd.f32 0.0, %v2432
    %v2434 = vpop.f32.mrb[0].mxu0
    %v2435 = vpop.f32.mrb[0].mxu0
    %2436 = vdwg.mxu0
    %v2437 = vrot.slane %v1205, 2
    %v2451 = vunpack.c.l.b16 %v1263
    %v2452 = vunpack.c.h.b16 %v1263
    %v2453 = vunpack.c.l.b16 %v1264
    %v2454 = vunpack.c.h.b16 %v1264
    %v2455 = vunpack.c.l.b16 %v1265
    %v2456 = vunpack.c.h.b16 %v1265
    %v2457 = vunpack.c.l.b16 %v1266
    %v2458 = vunpack.c.h.b16 %v1266
    %v2459 = vunpack.c.l.b16 %v1267
    %v2460 = vunpack.c.h.b16 %v1267
    %v2461 = vunpack.c.l.b16 %v1268
    %v2462 = vunpack.c.h.b16 %v1268
    %v2463 = vunpack.c.l.b16 %v1269
    %v2464 = vunpack.c.h.b16 %v1269
    %v2465 = vunpack.c.l.b16 %v1270
    %v2466 = vunpack.c.h.b16 %v1270
    %v2467 = vunpack.c.l.b16 %v1271
    %v2468 = vunpack.c.h.b16 %v1271
    %v2469 = vunpack.c.l.b16 %v1272
    %v2470 = vunpack.c.h.b16 %v1272
    %v2471 = vunpack.c.l.b16 %v1273
    %v2472 = vunpack.c.h.b16 %v1273
    %v2473 = vunpack.c.l.b16 %v1274
    %v2474 = vunpack.c.h.b16 %v1274
    %v2475 = vunpack.c.l.b16 %v1275
    %v2476 = vunpack.c.h.b16 %v1275
    %v2477 = vpack.c.b16 %v2453, %v2451
    %v2478 = vpack.c.b16 %v2454, %v2452
    %v2479 = vpack.c.b16 %v2457, %v2455
    %v2480 = vpack.c.b16 %v2458, %v2456
    %v2481 = vpack.c.b16 %v2461, %v2459
    %v2482 = vpack.c.b16 %v2462, %v2460
    %v2483 = vpack.c.b16 %v2465, %v2463
    %v2484 = vpack.c.b16 %v2466, %v2464
    %v2485 = vpack.c.b16 %v2469, %v2467
    %v2486 = vpack.c.b16 %v2470, %v2468
    %v2487 = vpack.c.b16 %v2473, %v2471
    %v2488 = vpack.c.b16 %v2474, %v2472
    %v2489 = vpack.c.b16 %v2475, %v2475
    %v2490 = vpack.c.b16 %v2476, %v2476
    %v2504 = vsel %vm1399, %v2437, 0
    %v2507 = vand.u32 %v2489, %v1405
    %v2510 = vand.u32 %v2490, %v1405
    %2512 = vmatprep.subr.bf16.mxu0 %v2478
    %2513 = vmatpush1.bf16.msra.mxu0 %v2477
    %2514 = vmatprep.subr.bf16.mxu0 %v2480
    %2515 = vmatpush1.bf16.msra.mxu0 %v2479
    %2516 = vmatprep.subr.bf16.mxu0 %v2482
    %2517 = vmatpush1.bf16.msra.mxu0 %v2481
    %2518 = vmatprep.subr.bf16.mxu0 %v2484
    %2519 = vmatpush1.bf16.msra.mxu0 %v2483
    %2520 = vmatprep.subr.bf16.mxu0 %v2486
    %2521 = vmatpush1.bf16.msra.mxu0 %v2485
    %2522 = vmatprep.subr.bf16.mxu0 %v2488
    %2523 = vmatpush1.bf16.msra.mxu0 %v2487
    %2524 = vmatprep.subr.bf16.mxu0 %v2510
    %2525 = vmatpush1.bf16.msra.mxu0 %v2507
    %2526 = vmatprep.subr.bf16.mxu0 0
    %2527 = vmatpush1.bf16.msra.mxu0 0
    %2528 = vmatprep.subr.bf16.mxu0 0
    %2529 = vmatpush1.bf16.msra.mxu0 0
    %2530 = vmatprep.subr.bf16.mxu0 0
    %2531 = vmatpush1.bf16.msra.mxu0 0
    %2532 = vmatprep.subr.bf16.mxu0 0
    %2533 = vmatpush1.bf16.msra.mxu0 0
    %2534 = vmatprep.subr.bf16.mxu0 0
    %2535 = vmatpush1.bf16.msra.mxu0 0
    %2536 = vmatprep.subr.bf16.mxu0 0
    %2537 = vmatpush1.bf16.msra.mxu0 0
    %2538 = vmatprep.subr.bf16.mxu0 0
    %2539 = vmatpush1.bf16.msra.mxu0 0
    %2540 = vmatprep.subr.bf16.mxu0 0
    %2541 = vmatpush1.bf16.msra.mxu0 0
    %2542 = vmatprep.subr.bf16.mxu0 0
    %2543 = vmatpush1.bf16.msra.mxu0 0
    %2544 = vmatprep.mubr.bf16.mxu0 0
    %2545 = vmatmul.mubr.bf16.gmra.mrb[0].mxu0 %v2504
    %v2546 = vpop.f32.mrb[0].mxu0
    %v2547 = vadd.f32 %v2431, %v2546
    %v2548 = vpop.f32.mrb[0].mxu0
    %v2549 = vadd.f32 %v2433, %v2548
    %v2550 = vpop.f32.mrb[0].mxu0
    %v2551 = vpop.f32.mrb[0].mxu0
    %2552 = vdwg.mxu0
    %s2553 = scalar_lea.vmem %s5, 1352
    %v2554 = vld [vmem:[%s2553] sm:$0xff]
    %v2555 = vld [vmem:[%s2553 + $0x8] sm:$0xff]
    %v2556 = vld [vmem:[%s2553 + $0x10] sm:$0xff]
    %v2557 = vld [vmem:[%s2553 + $0x18] sm:$0xff]
    %v2558 = vld [vmem:[%s2553 + $0x20] sm:$0xff]
    %v2559 = vld [vmem:[%s2553 + $0x28] sm:$0xff]
    %v2560 = vld [vmem:[%s2553 + $0x30] sm:$0xff]
    %v2561 = vld [vmem:[%s2553 + $0x38] sm:$0xff]
    %v2562 = vld [vmem:[%s2553 + $0x40] sm:$0xff]
    %v2563 = vld [vmem:[%s2553 + $0x48] sm:$0xff]
    %v2564 = vld [vmem:[%s2553 + $0x50] sm:$0xff]
    %v2565 = vld [vmem:[%s2553 + $0x58] sm:$0xff]
    %v2566 = vld [vmem:[%s2553 + $0x60] sm:$0x11]
    %v2567 = vrot.slane %v1582, 6
    %v2581 = vunpack.c.l.b16 %v2554
    %v2582 = vunpack.c.h.b16 %v2554
    %v2583 = vunpack.c.l.b16 %v2555
    %v2584 = vunpack.c.h.b16 %v2555
    %v2585 = vunpack.c.l.b16 %v2556
    %v2586 = vunpack.c.h.b16 %v2556
    %v2587 = vunpack.c.l.b16 %v2557
    %v2588 = vunpack.c.h.b16 %v2557
    %v2589 = vunpack.c.l.b16 %v2558
    %v2590 = vunpack.c.h.b16 %v2558
    %v2591 = vunpack.c.l.b16 %v2559
    %v2592 = vunpack.c.h.b16 %v2559
    %v2593 = vunpack.c.l.b16 %v2560
    %v2594 = vunpack.c.h.b16 %v2560
    %v2595 = vunpack.c.l.b16 %v2561
    %v2596 = vunpack.c.h.b16 %v2561
    %v2597 = vunpack.c.l.b16 %v2562
    %v2598 = vunpack.c.h.b16 %v2562
    %v2599 = vunpack.c.l.b16 %v2563
    %v2600 = vunpack.c.h.b16 %v2563
    %v2601 = vunpack.c.l.b16 %v2564
    %v2602 = vunpack.c.h.b16 %v2564
    %v2603 = vunpack.c.l.b16 %v2565
    %v2604 = vunpack.c.h.b16 %v2565
    %v2605 = vunpack.c.l.b16 %v2566
    %v2606 = vunpack.c.h.b16 %v2566
    %v2607 = vpack.c.b16 %v2583, %v2581
    %v2608 = vpack.c.b16 %v2584, %v2582
    %v2609 = vpack.c.b16 %v2587, %v2585
    %v2610 = vpack.c.b16 %v2588, %v2586
    %v2611 = vpack.c.b16 %v2591, %v2589
    %v2612 = vpack.c.b16 %v2592, %v2590
    %v2613 = vpack.c.b16 %v2595, %v2593
    %v2614 = vpack.c.b16 %v2596, %v2594
    %v2615 = vpack.c.b16 %v2599, %v2597
    %v2616 = vpack.c.b16 %v2600, %v2598
    %v2617 = vpack.c.b16 %v2603, %v2601
    %v2618 = vpack.c.b16 %v2604, %v2602
    %v2619 = vpack.c.b16 %v2605, %v2605
    %v2620 = vpack.c.b16 %v2606, %v2606
    %v2634 = vsel %vm1399, %v2567, 0
    %v2637 = vand.u32 %v2619, %v1405
    %v2640 = vand.u32 %v2620, %v1405
    %2642 = vmatprep.subr.bf16.mxu0 %v2608
    %2643 = vmatpush1.bf16.msra.mxu0 %v2607
    %2644 = vmatprep.subr.bf16.mxu0 %v2610
    %2645 = vmatpush1.bf16.msra.mxu0 %v2609
    %2646 = vmatprep.subr.bf16.mxu0 %v2612
    %2647 = vmatpush1.bf16.msra.mxu0 %v2611
    %2648 = vmatprep.subr.bf16.mxu0 %v2614
    %2649 = vmatpush1.bf16.msra.mxu0 %v2613
    %2650 = vmatprep.subr.bf16.mxu0 %v2616
    %2651 = vmatpush1.bf16.msra.mxu0 %v2615
    %2652 = vmatprep.subr.bf16.mxu0 %v2618
    %2653 = vmatpush1.bf16.msra.mxu0 %v2617
    %2654 = vmatprep.subr.bf16.mxu0 %v2640
    %2655 = vmatpush1.bf16.msra.mxu0 %v2637
    %2656 = vmatprep.subr.bf16.mxu0 0
    %2657 = vmatpush1.bf16.msra.mxu0 0
    %2658 = vmatprep.subr.bf16.mxu0 0
    %2659 = vmatpush1.bf16.msra.mxu0 0
    %2660 = vmatprep.subr.bf16.mxu0 0
    %2661 = vmatpush1.bf16.msra.mxu0 0
    %2662 = vmatprep.subr.bf16.mxu0 0
    %2663 = vmatpush1.bf16.msra.mxu0 0
    %2664 = vmatprep.subr.bf16.mxu0 0
    %2665 = vmatpush1.bf16.msra.mxu0 0
    %2666 = vmatprep.subr.bf16.mxu0 0
    %2667 = vmatpush1.bf16.msra.mxu0 0
    %2668 = vmatprep.subr.bf16.mxu0 0
    %2669 = vmatpush1.bf16.msra.mxu0 0
    %2670 = vmatprep.subr.bf16.mxu0 0
    %2671 = vmatpush1.bf16.msra.mxu0 0
    %2672 = vmatprep.subr.bf16.mxu0 0
    %2673 = vmatpush1.bf16.msra.mxu0 0
    %2674 = vmatprep.mubr.bf16.mxu0 0
    %2675 = vmatmul.mubr.bf16.gmra.mrb[0].mxu0 %v2634
    %v2676 = vpop.f32.mrb[0].mxu0
    %v2677 = vadd.f32 0.0, %v2676
    %v2678 = vpop.f32.mrb[0].mxu0
    %v2679 = vadd.f32 0.0, %v2678
    %v2680 = vpop.f32.mrb[0].mxu0
    %v2681 = vpop.f32.mrb[0].mxu0
    %2682 = vdwg.mxu0
    %v2683 = vrot.slane %v1582, 2
    %v2697 = vunpack.c.l.b16 %v1277
    %v2698 = vunpack.c.h.b16 %v1277
    %v2699 = vunpack.c.l.b16 %v1278
    %v2700 = vunpack.c.h.b16 %v1278
    %v2701 = vunpack.c.l.b16 %v1279
    %v2702 = vunpack.c.h.b16 %v1279
    %v2703 = vunpack.c.l.b16 %v1280
    %v2704 = vunpack.c.h.b16 %v1280
    %v2705 = vunpack.c.l.b16 %v1281
    %v2706 = vunpack.c.h.b16 %v1281
    %v2707 = vunpack.c.l.b16 %v1282
    %v2708 = vunpack.c.h.b16 %v1282
    %v2709 = vunpack.c.l.b16 %v1283
    %v2710 = vunpack.c.h.b16 %v1283
    %v2711 = vunpack.c.l.b16 %v1284
    %v2712 = vunpack.c.h.b16 %v1284
    %v2713 = vunpack.c.l.b16 %v1285
    %v2714 = vunpack.c.h.b16 %v1285
    %v2715 = vunpack.c.l.b16 %v1286
    %v2716 = vunpack.c.h.b16 %v1286
    %v2717 = vunpack.c.l.b16 %v1287
    %v2718 = vunpack.c.h.b16 %v1287
    %v2719 = vunpack.c.l.b16 %v1288
    %v2720 = vunpack.c.h.b16 %v1288
    %v2721 = vunpack.c.l.b16 %v1289
    %v2722 = vunpack.c.h.b16 %v1289
    %v2723 = vpack.c.b16 %v2699, %v2697
    %v2724 = vpack.c.b16 %v2700, %v2698
    %v2725 = vpack.c.b16 %v2703, %v2701
    %v2726 = vpack.c.b16 %v2704, %v2702
    %v2727 = vpack.c.b16 %v2707, %v2705
    %v2728 = vpack.c.b16 %v2708, %v2706
    %v2729 = vpack.c.b16 %v2711, %v2709
    %v2730 = vpack.c.b16 %v2712, %v2710
    %v2731 = vpack.c.b16 %v2715, %v2713
    %v2732 = vpack.c.b16 %v2716, %v2714
    %v2733 = vpack.c.b16 %v2719, %v2717
    %v2734 = vpack.c.b16 %v2720, %v2718
    %v2735 = vpack.c.b16 %v2721, %v2721
    %v2736 = vpack.c.b16 %v2722, %v2722
    %v2750 = vsel %vm1399, %v2683, 0
    %v2753 = vand.u32 %v2735, %v1405
    %v2756 = vand.u32 %v2736, %v1405
    %2758 = vmatprep.subr.bf16.mxu0 %v2724
    %2759 = vmatpush1.bf16.msra.mxu0 %v2723
    %2760 = vmatprep.subr.bf16.mxu0 %v2726
    %2761 = vmatpush1.bf16.msra.mxu0 %v2725
    %2762 = vmatprep.subr.bf16.mxu0 %v2728
    %2763 = vmatpush1.bf16.msra.mxu0 %v2727
    %2764 = vmatprep.subr.bf16.mxu0 %v2730
    %2765 = vmatpush1.bf16.msra.mxu0 %v2729
    %2766 = vmatprep.subr.bf16.mxu0 %v2732
    %2767 = vmatpush1.bf16.msra.mxu0 %v2731
    %2768 = vmatprep.subr.bf16.mxu0 %v2734
    %2769 = vmatpush1.bf16.msra.mxu0 %v2733
    %2770 = vmatprep.subr.bf16.mxu0 %v2756
    %2771 = vmatpush1.bf16.msra.mxu0 %v2753
    %2772 = vmatprep.subr.bf16.mxu0 0
    %2773 = vmatpush1.bf16.msra.mxu0 0
    %2774 = vmatprep.subr.bf16.mxu0 0
    %2775 = vmatpush1.bf16.msra.mxu0 0
    %2776 = vmatprep.subr.bf16.mxu0 0
    %2777 = vmatpush1.bf16.msra.mxu0 0
    %2778 = vmatprep.subr.bf16.mxu0 0
    %2779 = vmatpush1.bf16.msra.mxu0 0
    %2780 = vmatprep.subr.bf16.mxu0 0
    %2781 = vmatpush1.bf16.msra.mxu0 0
    %2782 = vmatprep.subr.bf16.mxu0 0
    %2783 = vmatpush1.bf16.msra.mxu0 0
    %2784 = vmatprep.subr.bf16.mxu0 0
    %2785 = vmatpush1.bf16.msra.mxu0 0
    %2786 = vmatprep.subr.bf16.mxu0 0
    %2787 = vmatpush1.bf16.msra.mxu0 0
    %2788 = vmatprep.subr.bf16.mxu0 0
    %2789 = vmatpush1.bf16.msra.mxu0 0
    %2790 = vmatprep.mubr.bf16.mxu0 0
    %2791 = vmatmul.mubr.bf16.gmra.mrb[0].mxu0 %v2750
    %v2792 = vpop.f32.mrb[0].mxu0
    %v2793 = vadd.f32 %v2677, %v2792
    %v2794 = vpop.f32.mrb[0].mxu0
    %v2795 = vadd.f32 %v2679, %v2794
    %v2796 = vpop.f32.mrb[0].mxu0
    %v2797 = vpop.f32.mrb[0].mxu0
    %2798 = vdwg.mxu0
    %s2799 = scalar_lea.vmem %s5, 1456
    %v2800 = vld [vmem:[%s2799] sm:$0xff]
    %v2801 = vld [vmem:[%s2799 + $0x8] sm:$0xff]
    %v2802 = vld [vmem:[%s2799 + $0x10] sm:$0xff]
    %v2803 = vld [vmem:[%s2799 + $0x18] sm:$0xff]
    %v2804 = vld [vmem:[%s2799 + $0x20] sm:$0xff]
    %v2805 = vld [vmem:[%s2799 + $0x28] sm:$0xff]
    %v2806 = vld [vmem:[%s2799 + $0x30] sm:$0xff]
    %v2807 = vld [vmem:[%s2799 + $0x38] sm:$0xff]
    %v2808 = vld [vmem:[%s2799 + $0x40] sm:$0xff]
    %v2809 = vld [vmem:[%s2799 + $0x48] sm:$0xff]
    %v2810 = vld [vmem:[%s2799 + $0x50] sm:$0xff]
    %v2811 = vld [vmem:[%s2799 + $0x58] sm:$0xff]
    %v2812 = vld [vmem:[%s2799 + $0x60] sm:$0x11]
    %v2813 = vrot.slane %v1205, 7
    %v2827 = vunpack.c.l.b16 %v2800
    %v2828 = vunpack.c.h.b16 %v2800
    %v2829 = vunpack.c.l.b16 %v2801
    %v2830 = vunpack.c.h.b16 %v2801
    %v2831 = vunpack.c.l.b16 %v2802
    %v2832 = vunpack.c.h.b16 %v2802
    %v2833 = vunpack.c.l.b16 %v2803
    %v2834 = vunpack.c.h.b16 %v2803
    %v2835 = vunpack.c.l.b16 %v2804
    %v2836 = vunpack.c.h.b16 %v2804
    %v2837 = vunpack.c.l.b16 %v2805
    %v2838 = vunpack.c.h.b16 %v2805
    %v2839 = vunpack.c.l.b16 %v2806
    %v2840 = vunpack.c.h.b16 %v2806
    %v2841 = vunpack.c.l.b16 %v2807
    %v2842 = vunpack.c.h.b16 %v2807
    %v2843 = vunpack.c.l.b16 %v2808
    %v2844 = vunpack.c.h.b16 %v2808
    %v2845 = vunpack.c.l.b16 %v2809
    %v2846 = vunpack.c.h.b16 %v2809
    %v2847 = vunpack.c.l.b16 %v2810
    %v2848 = vunpack.c.h.b16 %v2810
    %v2849 = vunpack.c.l.b16 %v2811
    %v2850 = vunpack.c.h.b16 %v2811
    %v2851 = vunpack.c.l.b16 %v2812
    %v2852 = vunpack.c.h.b16 %v2812
    %v2853 = vpack.c.b16 %v2829, %v2827
    %v2854 = vpack.c.b16 %v2830, %v2828
    %v2855 = vpack.c.b16 %v2833, %v2831
    %v2856 = vpack.c.b16 %v2834, %v2832
    %v2857 = vpack.c.b16 %v2837, %v2835
    %v2858 = vpack.c.b16 %v2838, %v2836
    %v2859 = vpack.c.b16 %v2841, %v2839
    %v2860 = vpack.c.b16 %v2842, %v2840
    %v2861 = vpack.c.b16 %v2845, %v2843
    %v2862 = vpack.c.b16 %v2846, %v2844
    %v2863 = vpack.c.b16 %v2849, %v2847
    %v2864 = vpack.c.b16 %v2850, %v2848
    %v2865 = vpack.c.b16 %v2851, %v2851
    %v2866 = vpack.c.b16 %v2852, %v2852
    %v2880 = vsel %vm1399, %v2813, 0
    %v2883 = vand.u32 %v2865, %v1405
    %v2886 = vand.u32 %v2866, %v1405
    %2888 = vmatprep.subr.bf16.mxu0 %v2854
    %2889 = vmatpush1.bf16.msra.mxu0 %v2853
    %2890 = vmatprep.subr.bf16.mxu0 %v2856
    %2891 = vmatpush1.bf16.msra.mxu0 %v2855
    %2892 = vmatprep.subr.bf16.mxu0 %v2858
    %2893 = vmatpush1.bf16.msra.mxu0 %v2857
    %2894 = vmatprep.subr.bf16.mxu0 %v2860
    %2895 = vmatpush1.bf16.msra.mxu0 %v2859
    %2896 = vmatprep.subr.bf16.mxu0 %v2862
    %2897 = vmatpush1.bf16.msra.mxu0 %v2861
    %2898 = vmatprep.subr.bf16.mxu0 %v2864
    %2899 = vmatpush1.bf16.msra.mxu0 %v2863
    %2900 = vmatprep.subr.bf16.mxu0 %v2886
    %2901 = vmatpush1.bf16.msra.mxu0 %v2883
    %2902 = vmatprep.subr.bf16.mxu0 0
    %2903 = vmatpush1.bf16.msra.mxu0 0
    %2904 = vmatprep.subr.bf16.mxu0 0
    %2905 = vmatpush1.bf16.msra.mxu0 0
    %2906 = vmatprep.subr.bf16.mxu0 0
    %2907 = vmatpush1.bf16.msra.mxu0 0
    %2908 = vmatprep.subr.bf16.mxu0 0
    %2909 = vmatpush1.bf16.msra.mxu0 0
    %2910 = vmatprep.subr.bf16.mxu0 0
    %2911 = vmatpush1.bf16.msra.mxu0 0
    %2912 = vmatprep.subr.bf16.mxu0 0
    %2913 = vmatpush1.bf16.msra.mxu0 0
    %2914 = vmatprep.subr.bf16.mxu0 0
    %2915 = vmatpush1.bf16.msra.mxu0 0
    %2916 = vmatprep.subr.bf16.mxu0 0
    %2917 = vmatpush1.bf16.msra.mxu0 0
    %2918 = vmatprep.subr.bf16.mxu0 0
    %2919 = vmatpush1.bf16.msra.mxu0 0
    %2920 = vmatprep.mubr.bf16.mxu0 0
    %2921 = vmatmul.mubr.bf16.gmra.mrb[0].mxu0 %v2880
    %v2922 = vpop.f32.mrb[0].mxu0
    %v2923 = vadd.f32 0.0, %v2922
    %v2924 = vpop.f32.mrb[0].mxu0
    %v2925 = vadd.f32 0.0, %v2924
    %v2926 = vpop.f32.mrb[0].mxu0
    %v2927 = vpop.f32.mrb[0].mxu0
    %2928 = vdwg.mxu0
    %v2929 = vrot.slane %v1205, 3
    %v2943 = vunpack.c.l.b16 %v1291
    %v2944 = vunpack.c.h.b16 %v1291
    %v2945 = vunpack.c.l.b16 %v1292
    %v2946 = vunpack.c.h.b16 %v1292
    %v2947 = vunpack.c.l.b16 %v1293
    %v2948 = vunpack.c.h.b16 %v1293
    %v2949 = vunpack.c.l.b16 %v1294
    %v2950 = vunpack.c.h.b16 %v1294
    %v2951 = vunpack.c.l.b16 %v1295
    %v2952 = vunpack.c.h.b16 %v1295
    %v2953 = vunpack.c.l.b16 %v1296
    %v2954 = vunpack.c.h.b16 %v1296
    %v2955 = vunpack.c.l.b16 %v1297
    %v2956 = vunpack.c.h.b16 %v1297
    %v2957 = vunpack.c.l.b16 %v1298
    %v2958 = vunpack.c.h.b16 %v1298
    %v2959 = vunpack.c.l.b16 %v1299
    %v2960 = vunpack.c.h.b16 %v1299
    %v2961 = vunpack.c.l.b16 %v1300
    %v2962 = vunpack.c.h.b16 %v1300
    %v2963 = vunpack.c.l.b16 %v1301
    %v2964 = vunpack.c.h.b16 %v1301
    %v2965 = vunpack.c.l.b16 %v1302
    %v2966 = vunpack.c.h.b16 %v1302
    %v2967 = vunpack.c.l.b16 %v1303
    %v2968 = vunpack.c.h.b16 %v1303
    %v2969 = vpack.c.b16 %v2945, %v2943
    %v2970 = vpack.c.b16 %v2946, %v2944
    %v2971 = vpack.c.b16 %v2949, %v2947
    %v2972 = vpack.c.b16 %v2950, %v2948
    %v2973 = vpack.c.b16 %v2953, %v2951
    %v2974 = vpack.c.b16 %v2954, %v2952
    %v2975 = vpack.c.b16 %v2957, %v2955
    %v2976 = vpack.c.b16 %v2958, %v2956
    %v2977 = vpack.c.b16 %v2961, %v2959
    %v2978 = vpack.c.b16 %v2962, %v2960
    %v2979 = vpack.c.b16 %v2965, %v2963
    %v2980 = vpack.c.b16 %v2966, %v2964
    %v2981 = vpack.c.b16 %v2967, %v2967
    %v2982 = vpack.c.b16 %v2968, %v2968
    %v2996 = vsel %vm1399, %v2929, 0
    %v2999 = vand.u32 %v2981, %v1405
    %v3002 = vand.u32 %v2982, %v1405
    %3004 = vmatprep.subr.bf16.mxu0 %v2970
    %3005 = vmatpush1.bf16.msra.mxu0 %v2969
    %3006 = vmatprep.subr.bf16.mxu0 %v2972
    %3007 = vmatpush1.bf16.msra.mxu0 %v2971
    %3008 = vmatprep.subr.bf16.mxu0 %v2974
    %3009 = vmatpush1.bf16.msra.mxu0 %v2973
    %3010 = vmatprep.subr.bf16.mxu0 %v2976
    %3011 = vmatpush1.bf16.msra.mxu0 %v2975
    %3012 = vmatprep.subr.bf16.mxu0 %v2978
    %3013 = vmatpush1.bf16.msra.mxu0 %v2977
    %3014 = vmatprep.subr.bf16.mxu0 %v2980
    %3015 = vmatpush1.bf16.msra.mxu0 %v2979
    %3016 = vmatprep.subr.bf16.mxu0 %v3002
    %3017 = vmatpush1.bf16.msra.mxu0 %v2999
    %3018 = vmatprep.subr.bf16.mxu0 0
    %3019 = vmatpush1.bf16.msra.mxu0 0
    %3020 = vmatprep.subr.bf16.mxu0 0
    %3021 = vmatpush1.bf16.msra.mxu0 0
    %3022 = vmatprep.subr.bf16.mxu0 0
    %3023 = vmatpush1.bf16.msra.mxu0 0
    %3024 = vmatprep.subr.bf16.mxu0 0
    %3025 = vmatpush1.bf16.msra.mxu0 0
    %3026 = vmatprep.subr.bf16.mxu0 0
    %3027 = vmatpush1.bf16.msra.mxu0 0
    %3028 = vmatprep.subr.bf16.mxu0 0
    %3029 = vmatpush1.bf16.msra.mxu0 0
    %3030 = vmatprep.subr.bf16.mxu0 0
    %3031 = vmatpush1.bf16.msra.mxu0 0
    %3032 = vmatprep.subr.bf16.mxu0 0
    %3033 = vmatpush1.bf16.msra.mxu0 0
    %3034 = vmatprep.subr.bf16.mxu0 0
    %3035 = vmatpush1.bf16.msra.mxu0 0
    %3036 = vmatprep.mubr.bf16.mxu0 0
    %3037 = vmatmul.mubr.bf16.gmra.mrb[0].mxu0 %v2996
    %v3038 = vpop.f32.mrb[0].mxu0
    %v3039 = vadd.f32 %v2923, %v3038
    %v3040 = vpop.f32.mrb[0].mxu0
    %v3041 = vadd.f32 %v2925, %v3040
    %v3042 = vpop.f32.mrb[0].mxu0
    %v3043 = vpop.f32.mrb[0].mxu0
    %3044 = vdwg.mxu0
    %s3045 = scalar_lea.vmem %s5, 1560
    %v3046 = vld [vmem:[%s3045] sm:$0xff]
    %v3047 = vld [vmem:[%s3045 + $0x8] sm:$0xff]
    %v3048 = vld [vmem:[%s3045 + $0x10] sm:$0xff]
    %v3049 = vld [vmem:[%s3045 + $0x18] sm:$0xff]
    %v3050 = vld [vmem:[%s3045 + $0x20] sm:$0xff]
    %v3051 = vld [vmem:[%s3045 + $0x28] sm:$0xff]
    %v3052 = vld [vmem:[%s3045 + $0x30] sm:$0xff]
    %v3053 = vld [vmem:[%s3045 + $0x38] sm:$0xff]
    %v3054 = vld [vmem:[%s3045 + $0x40] sm:$0xff]
    %v3055 = vld [vmem:[%s3045 + $0x48] sm:$0xff]
    %v3056 = vld [vmem:[%s3045 + $0x50] sm:$0xff]
    %v3057 = vld [vmem:[%s3045 + $0x58] sm:$0xff]
    %v3058 = vld [vmem:[%s3045 + $0x60] sm:$0x11]
    %v3059 = vrot.slane %v1582, 7
    %v3073 = vunpack.c.l.b16 %v3046
    %v3074 = vunpack.c.h.b16 %v3046
    %v3075 = vunpack.c.l.b16 %v3047
    %v3076 = vunpack.c.h.b16 %v3047
    %v3077 = vunpack.c.l.b16 %v3048
    %v3078 = vunpack.c.h.b16 %v3048
    %v3079 = vunpack.c.l.b16 %v3049
    %v3080 = vunpack.c.h.b16 %v3049
    %v3081 = vunpack.c.l.b16 %v3050
    %v3082 = vunpack.c.h.b16 %v3050
    %v3083 = vunpack.c.l.b16 %v3051
    %v3084 = vunpack.c.h.b16 %v3051
    %v3085 = vunpack.c.l.b16 %v3052
    %v3086 = vunpack.c.h.b16 %v3052
    %v3087 = vunpack.c.l.b16 %v3053
    %v3088 = vunpack.c.h.b16 %v3053
    %v3089 = vunpack.c.l.b16 %v3054
    %v3090 = vunpack.c.h.b16 %v3054
    %v3091 = vunpack.c.l.b16 %v3055
    %v3092 = vunpack.c.h.b16 %v3055
    %v3093 = vunpack.c.l.b16 %v3056
    %v3094 = vunpack.c.h.b16 %v3056
    %v3095 = vunpack.c.l.b16 %v3057
    %v3096 = vunpack.c.h.b16 %v3057
    %v3097 = vunpack.c.l.b16 %v3058
    %v3098 = vunpack.c.h.b16 %v3058
    %v3099 = vpack.c.b16 %v3075, %v3073
    %v3100 = vpack.c.b16 %v3076, %v3074
    %v3101 = vpack.c.b16 %v3079, %v3077
    %v3102 = vpack.c.b16 %v3080, %v3078
    %v3103 = vpack.c.b16 %v3083, %v3081
    %v3104 = vpack.c.b16 %v3084, %v3082
    %v3105 = vpack.c.b16 %v3087, %v3085
    %v3106 = vpack.c.b16 %v3088, %v3086
    %v3107 = vpack.c.b16 %v3091, %v3089
    %v3108 = vpack.c.b16 %v3092, %v3090
    %v3109 = vpack.c.b16 %v3095, %v3093
    %v3110 = vpack.c.b16 %v3096, %v3094
    %v3111 = vpack.c.b16 %v3097, %v3097
    %v3112 = vpack.c.b16 %v3098, %v3098
    %v3126 = vsel %vm1399, %v3059, 0
    %v3129 = vand.u32 %v3111, %v1405
    %v3132 = vand.u32 %v3112, %v1405
    %3134 = vmatprep.subr.bf16.mxu0 %v3100
    %3135 = vmatpush1.bf16.msra.mxu0 %v3099
    %3136 = vmatprep.subr.bf16.mxu0 %v3102
    %3137 = vmatpush1.bf16.msra.mxu0 %v3101
    %3138 = vmatprep.subr.bf16.mxu0 %v3104
    %3139 = vmatpush1.bf16.msra.mxu0 %v3103
    %3140 = vmatprep.subr.bf16.mxu0 %v3106
    %3141 = vmatpush1.bf16.msra.mxu0 %v3105
    %3142 = vmatprep.subr.bf16.mxu0 %v3108
    %3143 = vmatpush1.bf16.msra.mxu0 %v3107
    %3144 = vmatprep.subr.bf16.mxu0 %v3110
    %3145 = vmatpush1.bf16.msra.mxu0 %v3109
    %3146 = vmatprep.subr.bf16.mxu0 %v3132
    %3147 = vmatpush1.bf16.msra.mxu0 %v3129
    %3148 = vmatprep.subr.bf16.mxu0 0
    %3149 = vmatpush1.bf16.msra.mxu0 0
    %3150 = vmatprep.subr.bf16.mxu0 0
    %3151 = vmatpush1.bf16.msra.mxu0 0
    %3152 = vmatprep.subr.bf16.mxu0 0
    %3153 = vmatpush1.bf16.msra.mxu0 0
    %3154 = vmatprep.subr.bf16.mxu0 0
    %3155 = vmatpush1.bf16.msra.mxu0 0
    %3156 = vmatprep.subr.bf16.mxu0 0
    %3157 = vmatpush1.bf16.msra.mxu0 0
    %3158 = vmatprep.subr.bf16.mxu0 0
    %3159 = vmatpush1.bf16.msra.mxu0 0
    %3160 = vmatprep.subr.bf16.mxu0 0
    %3161 = vmatpush1.bf16.msra.mxu0 0
    %3162 = vmatprep.subr.bf16.mxu0 0
    %3163 = vmatpush1.bf16.msra.mxu0 0
    %3164 = vmatprep.subr.bf16.mxu0 0
    %3165 = vmatpush1.bf16.msra.mxu0 0
    %3166 = vmatprep.mubr.bf16.mxu0 0
    %3167 = vmatmul.mubr.bf16.gmra.mrb[0].mxu0 %v3126
    %v3168 = vpop.f32.mrb[0].mxu0
    %v3169 = vadd.f32 0.0, %v3168
    %v3170 = vpop.f32.mrb[0].mxu0
    %v3171 = vadd.f32 0.0, %v3170
    %v3172 = vpop.f32.mrb[0].mxu0
    %v3173 = vpop.f32.mrb[0].mxu0
    %3174 = vdwg.mxu0
    %v3175 = vrot.slane %v1582, 3
    %v3189 = vunpack.c.l.b16 %v1305
    %v3190 = vunpack.c.h.b16 %v1305
    %v3191 = vunpack.c.l.b16 %v1306
    %v3192 = vunpack.c.h.b16 %v1306
    %v3193 = vunpack.c.l.b16 %v1307
    %v3194 = vunpack.c.h.b16 %v1307
    %v3195 = vunpack.c.l.b16 %v1308
    %v3196 = vunpack.c.h.b16 %v1308
    %v3197 = vunpack.c.l.b16 %v1309
    %v3198 = vunpack.c.h.b16 %v1309
    %v3199 = vunpack.c.l.b16 %v1310
    %v3200 = vunpack.c.h.b16 %v1310
    %v3201 = vunpack.c.l.b16 %v1311
    %v3202 = vunpack.c.h.b16 %v1311
    %v3203 = vunpack.c.l.b16 %v1312
    %v3204 = vunpack.c.h.b16 %v1312
    %v3205 = vunpack.c.l.b16 %v1313
    %v3206 = vunpack.c.h.b16 %v1313
    %v3207 = vunpack.c.l.b16 %v1314
    %v3208 = vunpack.c.h.b16 %v1314
    %v3209 = vunpack.c.l.b16 %v1315
    %v3210 = vunpack.c.h.b16 %v1315
    %v3211 = vunpack.c.l.b16 %v1316
    %v3212 = vunpack.c.h.b16 %v1316
    %v3213 = vunpack.c.l.b16 %v1317
    %v3214 = vunpack.c.h.b16 %v1317
    %v3215 = vpack.c.b16 %v3191, %v3189
    %v3216 = vpack.c.b16 %v3192, %v3190
    %v3217 = vpack.c.b16 %v3195, %v3193
    %v3218 = vpack.c.b16 %v3196, %v3194
    %v3219 = vpack.c.b16 %v3199, %v3197
    %v3220 = vpack.c.b16 %v3200, %v3198
    %v3221 = vpack.c.b16 %v3203, %v3201
    %v3222 = vpack.c.b16 %v3204, %v3202
    %v3223 = vpack.c.b16 %v3207, %v3205
    %v3224 = vpack.c.b16 %v3208, %v3206
    %v3225 = vpack.c.b16 %v3211, %v3209
    %v3226 = vpack.c.b16 %v3212, %v3210
    %v3227 = vpack.c.b16 %v3213, %v3213
    %v3228 = vpack.c.b16 %v3214, %v3214
    %v3242 = vsel %vm1399, %v3175, 0
    %v3245 = vand.u32 %v3227, %v1405
    %v3248 = vand.u32 %v3228, %v1405
    %3250 = vmatprep.subr.bf16.mxu0 %v3216
    %3251 = vmatpush1.bf16.msra.mxu0 %v3215
    %3252 = vmatprep.subr.bf16.mxu0 %v3218
    %3253 = vmatpush1.bf16.msra.mxu0 %v3217
    %3254 = vmatprep.subr.bf16.mxu0 %v3220
    %3255 = vmatpush1.bf16.msra.mxu0 %v3219
    %3256 = vmatprep.subr.bf16.mxu0 %v3222
    %3257 = vmatpush1.bf16.msra.mxu0 %v3221
    %3258 = vmatprep.subr.bf16.mxu0 %v3224
    %3259 = vmatpush1.bf16.msra.mxu0 %v3223
    %3260 = vmatprep.subr.bf16.mxu0 %v3226
    %3261 = vmatpush1.bf16.msra.mxu0 %v3225
    %3262 = vmatprep.subr.bf16.mxu0 %v3248
    %3263 = vmatpush1.bf16.msra.mxu0 %v3245
    %3264 = vmatprep.subr.bf16.mxu0 0
    %3265 = vmatpush1.bf16.msra.mxu0 0
    %3266 = vmatprep.subr.bf16.mxu0 0
    %3267 = vmatpush1.bf16.msra.mxu0 0
    %3268 = vmatprep.subr.bf16.mxu0 0
    %3269 = vmatpush1.bf16.msra.mxu0 0
    %3270 = vmatprep.subr.bf16.mxu0 0
    %3271 = vmatpush1.bf16.msra.mxu0 0
    %3272 = vmatprep.subr.bf16.mxu0 0
    %3273 = vmatpush1.bf16.msra.mxu0 0
    %3274 = vmatprep.subr.bf16.mxu0 0
    %3275 = vmatpush1.bf16.msra.mxu0 0
    %3276 = vmatprep.subr.bf16.mxu0 0
    %3277 = vmatpush1.bf16.msra.mxu0 0
    %3278 = vmatprep.subr.bf16.mxu0 0
    %3279 = vmatpush1.bf16.msra.mxu0 0
    %3280 = vmatprep.subr.bf16.mxu0 0
    %3281 = vmatpush1.bf16.msra.mxu0 0
    %3282 = vmatprep.mubr.bf16.mxu0 0
    %3283 = vmatmul.mubr.bf16.gmra.mrb[0].mxu0 %v3242
    %v3284 = vpop.f32.mrb[0].mxu0
    %v3285 = vadd.f32 %v3169, %v3284
    %v3286 = vpop.f32.mrb[0].mxu0
    %v3287 = vadd.f32 %v3171, %v3286
    %v3288 = vpop.f32.mrb[0].mxu0
    %v3289 = vpop.f32.mrb[0].mxu0
    %3290 = vdwg.mxu0
    %s3291 = scalar_lea.vmem %s5, 1664
    %v3292 = vld [vmem:[%s3291] sm:$0xff]
    %v3293 = vld [vmem:[%s3291 + $0x8] sm:$0xff]
    %v3294 = vld [vmem:[%s3291 + $0x10] sm:$0xff]
    %v3295 = vld [vmem:[%s3291 + $0x18] sm:$0xff]
    %v3296 = vld [vmem:[%s3291 + $0x20] sm:$0xff]
    %v3297 = vld [vmem:[%s3291 + $0x28] sm:$0xff]
    %v3298 = vld [vmem:[%s3291 + $0x30] sm:$0xff]
    %v3299 = vld [vmem:[%s3291 + $0x38] sm:$0xff]
    %v3300 = vld [vmem:[%s3291 + $0x40] sm:$0xff]
    %v3301 = vld [vmem:[%s3291 + $0x48] sm:$0xff]
    %v3302 = vld [vmem:[%s3291 + $0x50] sm:$0xff]
    %v3303 = vld [vmem:[%s3291 + $0x58] sm:$0xff]
    %v3304 = vld [vmem:[%s3291 + $0x60] sm:$0x11]
    %v3318 = vunpack.c.l.b16 %v3292
    %v3319 = vunpack.c.h.b16 %v3292
    %v3320 = vunpack.c.l.b16 %v3293
    %v3321 = vunpack.c.h.b16 %v3293
    %v3322 = vunpack.c.l.b16 %v3294
    %v3323 = vunpack.c.h.b16 %v3294
    %v3324 = vunpack.c.l.b16 %v3295
    %v3325 = vunpack.c.h.b16 %v3295
    %v3326 = vunpack.c.l.b16 %v3296
    %v3327 = vunpack.c.h.b16 %v3296
    %v3328 = vunpack.c.l.b16 %v3297
    %v3329 = vunpack.c.h.b16 %v3297
    %v3330 = vunpack.c.l.b16 %v3298
    %v3331 = vunpack.c.h.b16 %v3298
    %v3332 = vunpack.c.l.b16 %v3299
    %v3333 = vunpack.c.h.b16 %v3299
    %v3334 = vunpack.c.l.b16 %v3300
    %v3335 = vunpack.c.h.b16 %v3300
    %v3336 = vunpack.c.l.b16 %v3301
    %v3337 = vunpack.c.h.b16 %v3301
    %v3338 = vunpack.c.l.b16 %v3302
    %v3339 = vunpack.c.h.b16 %v3302
    %v3340 = vunpack.c.l.b16 %v3303
    %v3341 = vunpack.c.h.b16 %v3303
    %v3342 = vunpack.c.l.b16 %v3304
    %v3343 = vunpack.c.h.b16 %v3304
    %v3344 = vpack.c.b16 %v3320, %v3318
    %v3345 = vpack.c.b16 %v3321, %v3319
    %v3346 = vpack.c.b16 %v3324, %v3322
    %v3347 = vpack.c.b16 %v3325, %v3323
    %v3348 = vpack.c.b16 %v3328, %v3326
    %v3349 = vpack.c.b16 %v3329, %v3327
    %v3350 = vpack.c.b16 %v3332, %v3330
    %v3351 = vpack.c.b16 %v3333, %v3331
    %v3352 = vpack.c.b16 %v3336, %v3334
    %v3353 = vpack.c.b16 %v3337, %v3335
    %v3354 = vpack.c.b16 %v3340, %v3338
    %v3355 = vpack.c.b16 %v3341, %v3339
    %v3356 = vpack.c.b16 %v3342, %v3342
    %v3357 = vpack.c.b16 %v3343, %v3343
    %v3371 = vsel %vm1399, %v1206, 0
    %v3374 = vand.u32 %v3356, %v1405
    %v3377 = vand.u32 %v3357, %v1405
    %3379 = vmatprep.subr.bf16.mxu0 %v3345
    %3380 = vmatpush1.bf16.msra.mxu0 %v3344
    %3381 = vmatprep.subr.bf16.mxu0 %v3347
    %3382 = vmatpush1.bf16.msra.mxu0 %v3346
    %3383 = vmatprep.subr.bf16.mxu0 %v3349
    %3384 = vmatpush1.bf16.msra.mxu0 %v3348
    %3385 = vmatprep.subr.bf16.mxu0 %v3351
    %3386 = vmatpush1.bf16.msra.mxu0 %v3350
    %3387 = vmatprep.subr.bf16.mxu0 %v3353
    %3388 = vmatpush1.bf16.msra.mxu0 %v3352
    %3389 = vmatprep.subr.bf16.mxu0 %v3355
    %3390 = vmatpush1.bf16.msra.mxu0 %v3354
    %3391 = vmatprep.subr.bf16.mxu0 %v3377
    %3392 = vmatpush1.bf16.msra.mxu0 %v3374
    %3393 = vmatprep.subr.bf16.mxu0 0
    %3394 = vmatpush1.bf16.msra.mxu0 0
    %3395 = vmatprep.subr.bf16.mxu0 0
    %3396 = vmatpush1.bf16.msra.mxu0 0
    %3397 = vmatprep.subr.bf16.mxu0 0
    %3398 = vmatpush1.bf16.msra.mxu0 0
    %3399 = vmatprep.subr.bf16.mxu0 0
    %3400 = vmatpush1.bf16.msra.mxu0 0
    %3401 = vmatprep.subr.bf16.mxu0 0
    %3402 = vmatpush1.bf16.msra.mxu0 0
    %3403 = vmatprep.subr.bf16.mxu0 0
    %3404 = vmatpush1.bf16.msra.mxu0 0
    %3405 = vmatprep.subr.bf16.mxu0 0
    %3406 = vmatpush1.bf16.msra.mxu0 0
    %3407 = vmatprep.subr.bf16.mxu0 0
    %3408 = vmatpush1.bf16.msra.mxu0 0
    %3409 = vmatprep.subr.bf16.mxu0 0
    %3410 = vmatpush1.bf16.msra.mxu0 0
    %3411 = vmatprep.mubr.bf16.mxu0 0
    %3412 = vmatmul.mubr.bf16.gmra.mrb[0].mxu0 %v3371
    %v3413 = vpop.f32.mrb[0].mxu0
    %v3414 = vadd.f32 0.0, %v3413
    %v3415 = vpop.f32.mrb[0].mxu0
    %v3416 = vadd.f32 0.0, %v3415
    %v3417 = vpop.f32.mrb[0].mxu0
    %v3418 = vpop.f32.mrb[0].mxu0
    %3419 = vdwg.mxu0
    %v3420 = vadd.f32 %v1562, %v3414
    %v3421 = vadd.f32 %v1564, %v3416
    %s3422 = scalar_lea.vmem %s5, 1768
    %v3423 = vld [vmem:[%s3422] sm:$0xff]
    %v3424 = vld [vmem:[%s3422 + $0x8] sm:$0xff]
    %v3425 = vld [vmem:[%s3422 + $0x10] sm:$0xff]
    %v3426 = vld [vmem:[%s3422 + $0x18] sm:$0xff]
    %v3427 = vld [vmem:[%s3422 + $0x20] sm:$0xff]
    %v3428 = vld [vmem:[%s3422 + $0x28] sm:$0xff]
    %v3429 = vld [vmem:[%s3422 + $0x30] sm:$0xff]
    %v3430 = vld [vmem:[%s3422 + $0x38] sm:$0xff]
    %v3431 = vld [vmem:[%s3422 + $0x40] sm:$0xff]
    %v3432 = vld [vmem:[%s3422 + $0x48] sm:$0xff]
    %v3433 = vld [vmem:[%s3422 + $0x50] sm:$0xff]
    %v3434 = vld [vmem:[%s3422 + $0x58] sm:$0xff]
    %v3435 = vld [vmem:[%s3422 + $0x60] sm:$0x11]
    %v3436 = vshrl.u32 %v1206, 16
    %v3451 = vunpack.c.l.b16 %v3423
    %v3452 = vunpack.c.h.b16 %v3423
    %v3453 = vunpack.c.l.b16 %v3424
    %v3454 = vunpack.c.h.b16 %v3424
    %v3455 = vunpack.c.l.b16 %v3425
    %v3456 = vunpack.c.h.b16 %v3425
    %v3457 = vunpack.c.l.b16 %v3426
    %v3458 = vunpack.c.h.b16 %v3426
    %v3459 = vunpack.c.l.b16 %v3427
    %v3460 = vunpack.c.h.b16 %v3427
    %v3461 = vunpack.c.l.b16 %v3428
    %v3462 = vunpack.c.h.b16 %v3428
    %v3463 = vunpack.c.l.b16 %v3429
    %v3464 = vunpack.c.h.b16 %v3429
    %v3465 = vunpack.c.l.b16 %v3430
    %v3466 = vunpack.c.h.b16 %v3430
    %v3467 = vunpack.c.l.b16 %v3431
    %v3468 = vunpack.c.h.b16 %v3431
    %v3469 = vunpack.c.l.b16 %v3432
    %v3470 = vunpack.c.h.b16 %v3432
    %v3471 = vunpack.c.l.b16 %v3433
    %v3472 = vunpack.c.h.b16 %v3433
    %v3473 = vunpack.c.l.b16 %v3434
    %v3474 = vunpack.c.h.b16 %v3434
    %v3475 = vunpack.c.l.b16 %v3435
    %v3476 = vunpack.c.h.b16 %v3435
    %v3477 = vpack.c.b16 %v3453, %v3451
    %v3478 = vpack.c.b16 %v3454, %v3452
    %v3479 = vpack.c.b16 %v3457, %v3455
    %v3480 = vpack.c.b16 %v3458, %v3456
    %v3481 = vpack.c.b16 %v3461, %v3459
    %v3482 = vpack.c.b16 %v3462, %v3460
    %v3483 = vpack.c.b16 %v3465, %v3463
    %v3484 = vpack.c.b16 %v3466, %v3464
    %v3485 = vpack.c.b16 %v3469, %v3467
    %v3486 = vpack.c.b16 %v3470, %v3468
    %v3487 = vpack.c.b16 %v3473, %v3471
    %v3488 = vpack.c.b16 %v3474, %v3472
    %v3489 = vpack.c.b16 %v3475, %v3475
    %v3490 = vpack.c.b16 %v3476, %v3476
    %v3504 = vsel %vm1399, %v3436, 0
    %v3507 = vand.u32 %v3489, %v1405
    %v3510 = vand.u32 %v3490, %v1405
    %3512 = vmatprep.subr.bf16.mxu0 %v3478
    %3513 = vmatpush1.bf16.msra.mxu0 %v3477
    %3514 = vmatprep.subr.bf16.mxu0 %v3480
    %3515 = vmatpush1.bf16.msra.mxu0 %v3479
    %3516 = vmatprep.subr.bf16.mxu0 %v3482
    %3517 = vmatpush1.bf16.msra.mxu0 %v3481
    %3518 = vmatprep.subr.bf16.mxu0 %v3484
    %3519 = vmatpush1.bf16.msra.mxu0 %v3483
    %3520 = vmatprep.subr.bf16.mxu0 %v3486
    %3521 = vmatpush1.bf16.msra.mxu0 %v3485
    %3522 = vmatprep.subr.bf16.mxu0 %v3488
    %3523 = vmatpush1.bf16.msra.mxu0 %v3487
    %3524 = vmatprep.subr.bf16.mxu0 %v3510
    %3525 = vmatpush1.bf16.msra.mxu0 %v3507
    %3526 = vmatprep.subr.bf16.mxu0 0
    %3527 = vmatpush1.bf16.msra.mxu0 0
    %3528 = vmatprep.subr.bf16.mxu0 0
    %3529 = vmatpush1.bf16.msra.mxu0 0
    %3530 = vmatprep.subr.bf16.mxu0 0
    %3531 = vmatpush1.bf16.msra.mxu0 0
    %3532 = vmatprep.subr.bf16.mxu0 0
    %3533 = vmatpush1.bf16.msra.mxu0 0
    %3534 = vmatprep.subr.bf16.mxu0 0
    %3535 = vmatpush1.bf16.msra.mxu0 0
    %3536 = vmatprep.subr.bf16.mxu0 0
    %3537 = vmatpush1.bf16.msra.mxu0 0
    %3538 = vmatprep.subr.bf16.mxu0 0
    %3539 = vmatpush1.bf16.msra.mxu0 0
    %3540 = vmatprep.subr.bf16.mxu0 0
    %3541 = vmatpush1.bf16.msra.mxu0 0
    %3542 = vmatprep.subr.bf16.mxu0 0
    %3543 = vmatpush1.bf16.msra.mxu0 0
    %3544 = vmatprep.mubr.bf16.mxu0 0
    %3545 = vmatmul.mubr.bf16.gmra.mrb[0].mxu0 %v3504
    %v3546 = vpop.f32.mrb[0].mxu0
    %v3547 = vadd.f32 0.0, %v3546
    %v3548 = vpop.f32.mrb[0].mxu0
    %v3549 = vadd.f32 0.0, %v3548
    %v3550 = vpop.f32.mrb[0].mxu0
    %v3551 = vpop.f32.mrb[0].mxu0
    %3552 = vdwg.mxu0
    %v3553 = vadd.f32 %v1809, %v3547
    %v3554 = vadd.f32 %v1811, %v3549
    %s3555 = scalar_lea.vmem %s5, 1872
    %v3556 = vld [vmem:[%s3555] sm:$0xff]
    %v3557 = vld [vmem:[%s3555 + $0x8] sm:$0xff]
    %v3558 = vld [vmem:[%s3555 + $0x10] sm:$0xff]
    %v3559 = vld [vmem:[%s3555 + $0x18] sm:$0xff]
    %v3560 = vld [vmem:[%s3555 + $0x20] sm:$0xff]
    %v3561 = vld [vmem:[%s3555 + $0x28] sm:$0xff]
    %v3562 = vld [vmem:[%s3555 + $0x30] sm:$0xff]
    %v3563 = vld [vmem:[%s3555 + $0x38] sm:$0xff]
    %v3564 = vld [vmem:[%s3555 + $0x40] sm:$0xff]
    %v3565 = vld [vmem:[%s3555 + $0x48] sm:$0xff]
    %v3566 = vld [vmem:[%s3555 + $0x50] sm:$0xff]
    %v3567 = vld [vmem:[%s3555 + $0x58] sm:$0xff]
    %v3568 = vld [vmem:[%s3555 + $0x60] sm:$0x11]
    %v3570 = vrot.slane %v1206, 1
    %v3584 = vunpack.c.l.b16 %v3556
    %v3585 = vunpack.c.h.b16 %v3556
    %v3586 = vunpack.c.l.b16 %v3557
    %v3587 = vunpack.c.h.b16 %v3557
    %v3588 = vunpack.c.l.b16 %v3558
    %v3589 = vunpack.c.h.b16 %v3558
    %v3590 = vunpack.c.l.b16 %v3559
    %v3591 = vunpack.c.h.b16 %v3559
    %v3592 = vunpack.c.l.b16 %v3560
    %v3593 = vunpack.c.h.b16 %v3560
    %v3594 = vunpack.c.l.b16 %v3561
    %v3595 = vunpack.c.h.b16 %v3561
    %v3596 = vunpack.c.l.b16 %v3562
    %v3597 = vunpack.c.h.b16 %v3562
    %v3598 = vunpack.c.l.b16 %v3563
    %v3599 = vunpack.c.h.b16 %v3563
    %v3600 = vunpack.c.l.b16 %v3564
    %v3601 = vunpack.c.h.b16 %v3564
    %v3602 = vunpack.c.l.b16 %v3565
    %v3603 = vunpack.c.h.b16 %v3565
    %v3604 = vunpack.c.l.b16 %v3566
    %v3605 = vunpack.c.h.b16 %v3566
    %v3606 = vunpack.c.l.b16 %v3567
    %v3607 = vunpack.c.h.b16 %v3567
    %v3608 = vunpack.c.l.b16 %v3568
    %v3609 = vunpack.c.h.b16 %v3568
    %v3610 = vpack.c.b16 %v3586, %v3584
    %v3611 = vpack.c.b16 %v3587, %v3585
    %v3612 = vpack.c.b16 %v3590, %v3588
    %v3613 = vpack.c.b16 %v3591, %v3589
    %v3614 = vpack.c.b16 %v3594, %v3592
    %v3615 = vpack.c.b16 %v3595, %v3593
    %v3616 = vpack.c.b16 %v3598, %v3596
    %v3617 = vpack.c.b16 %v3599, %v3597
    %v3618 = vpack.c.b16 %v3602, %v3600
    %v3619 = vpack.c.b16 %v3603, %v3601
    %v3620 = vpack.c.b16 %v3606, %v3604
    %v3621 = vpack.c.b16 %v3607, %v3605
    %v3622 = vpack.c.b16 %v3608, %v3608
    %v3623 = vpack.c.b16 %v3609, %v3609
    %v3637 = vsel %vm1399, %v3570, 0
    %v3640 = vand.u32 %v3622, %v1405
    %v3643 = vand.u32 %v3623, %v1405
    %3645 = vmatprep.subr.bf16.mxu0 %v3611
    %3646 = vmatpush1.bf16.msra.mxu0 %v3610
    %3647 = vmatprep.subr.bf16.mxu0 %v3613
    %3648 = vmatpush1.bf16.msra.mxu0 %v3612
    %3649 = vmatprep.subr.bf16.mxu0 %v3615
    %3650 = vmatpush1.bf16.msra.mxu0 %v3614
    %3651 = vmatprep.subr.bf16.mxu0 %v3617
    %3652 = vmatpush1.bf16.msra.mxu0 %v3616
    %3653 = vmatprep.subr.bf16.mxu0 %v3619
    %3654 = vmatpush1.bf16.msra.mxu0 %v3618
    %3655 = vmatprep.subr.bf16.mxu0 %v3621
    %3656 = vmatpush1.bf16.msra.mxu0 %v3620
    %3657 = vmatprep.subr.bf16.mxu0 %v3643
    %3658 = vmatpush1.bf16.msra.mxu0 %v3640
    %3659 = vmatprep.subr.bf16.mxu0 0
    %3660 = vmatpush1.bf16.msra.mxu0 0
    %3661 = vmatprep.subr.bf16.mxu0 0
    %3662 = vmatpush1.bf16.msra.mxu0 0
    %3663 = vmatprep.subr.bf16.mxu0 0
    %3664 = vmatpush1.bf16.msra.mxu0 0
    %3665 = vmatprep.subr.bf16.mxu0 0
    %3666 = vmatpush1.bf16.msra.mxu0 0
    %3667 = vmatprep.subr.bf16.mxu0 0
    %3668 = vmatpush1.bf16.msra.mxu0 0
    %3669 = vmatprep.subr.bf16.mxu0 0
    %3670 = vmatpush1.bf16.msra.mxu0 0
    %3671 = vmatprep.subr.bf16.mxu0 0
    %3672 = vmatpush1.bf16.msra.mxu0 0
    %3673 = vmatprep.subr.bf16.mxu0 0
    %3674 = vmatpush1.bf16.msra.mxu0 0
    %3675 = vmatprep.subr.bf16.mxu0 0
    %3676 = vmatpush1.bf16.msra.mxu0 0
    %3677 = vmatprep.mubr.bf16.mxu0 0
    %3678 = vmatmul.mubr.bf16.gmra.mrb[0].mxu0 %v3637
    %v3679 = vpop.f32.mrb[0].mxu0
    %v3680 = vadd.f32 0.0, %v3679
    %v3681 = vpop.f32.mrb[0].mxu0
    %v3682 = vadd.f32 0.0, %v3681
    %v3683 = vpop.f32.mrb[0].mxu0
    %v3684 = vpop.f32.mrb[0].mxu0
    %3685 = vdwg.mxu0
    %v3686 = vadd.f32 %v2055, %v3680
    %v3687 = vadd.f32 %v2057, %v3682
    %s3688 = scalar_lea.vmem %s5, 1976
    %v3689 = vld [vmem:[%s3688] sm:$0xff]
    %v3690 = vld [vmem:[%s3688 + $0x8] sm:$0xff]
    %v3691 = vld [vmem:[%s3688 + $0x10] sm:$0xff]
    %v3692 = vld [vmem:[%s3688 + $0x18] sm:$0xff]
    %v3693 = vld [vmem:[%s3688 + $0x20] sm:$0xff]
    %v3694 = vld [vmem:[%s3688 + $0x28] sm:$0xff]
    %v3695 = vld [vmem:[%s3688 + $0x30] sm:$0xff]
    %v3696 = vld [vmem:[%s3688 + $0x38] sm:$0xff]
    %v3697 = vld [vmem:[%s3688 + $0x40] sm:$0xff]
    %v3698 = vld [vmem:[%s3688 + $0x48] sm:$0xff]
    %v3699 = vld [vmem:[%s3688 + $0x50] sm:$0xff]
    %v3700 = vld [vmem:[%s3688 + $0x58] sm:$0xff]
    %v3701 = vld [vmem:[%s3688 + $0x60] sm:$0x11]
    %v3702 = vrot.slane %v3436, 1
    %v3716 = vunpack.c.l.b16 %v3689
    %v3717 = vunpack.c.h.b16 %v3689
    %v3718 = vunpack.c.l.b16 %v3690
    %v3719 = vunpack.c.h.b16 %v3690
    %v3720 = vunpack.c.l.b16 %v3691
    %v3721 = vunpack.c.h.b16 %v3691
    %v3722 = vunpack.c.l.b16 %v3692
    %v3723 = vunpack.c.h.b16 %v3692
    %v3724 = vunpack.c.l.b16 %v3693
    %v3725 = vunpack.c.h.b16 %v3693
    %v3726 = vunpack.c.l.b16 %v3694
    %v3727 = vunpack.c.h.b16 %v3694
    %v3728 = vunpack.c.l.b16 %v3695
    %v3729 = vunpack.c.h.b16 %v3695
    %v3730 = vunpack.c.l.b16 %v3696
    %v3731 = vunpack.c.h.b16 %v3696
    %v3732 = vunpack.c.l.b16 %v3697
    %v3733 = vunpack.c.h.b16 %v3697
    %v3734 = vunpack.c.l.b16 %v3698
    %v3735 = vunpack.c.h.b16 %v3698
    %v3736 = vunpack.c.l.b16 %v3699
    %v3737 = vunpack.c.h.b16 %v3699
    %v3738 = vunpack.c.l.b16 %v3700
    %v3739 = vunpack.c.h.b16 %v3700
    %v3740 = vunpack.c.l.b16 %v3701
    %v3741 = vunpack.c.h.b16 %v3701
    %v3742 = vpack.c.b16 %v3718, %v3716
    %v3743 = vpack.c.b16 %v3719, %v3717
    %v3744 = vpack.c.b16 %v3722, %v3720
    %v3745 = vpack.c.b16 %v3723, %v3721
    %v3746 = vpack.c.b16 %v3726, %v3724
    %v3747 = vpack.c.b16 %v3727, %v3725
    %v3748 = vpack.c.b16 %v3730, %v3728
    %v3749 = vpack.c.b16 %v3731, %v3729
    %v3750 = vpack.c.b16 %v3734, %v3732
    %v3751 = vpack.c.b16 %v3735, %v3733
    %v3752 = vpack.c.b16 %v3738, %v3736
    %v3753 = vpack.c.b16 %v3739, %v3737
    %v3754 = vpack.c.b16 %v3740, %v3740
    %v3755 = vpack.c.b16 %v3741, %v3741
    %v3769 = vsel %vm1399, %v3702, 0
    %v3772 = vand.u32 %v3754, %v1405
    %v3775 = vand.u32 %v3755, %v1405
    %3777 = vmatprep.subr.bf16.mxu0 %v3743
    %3778 = vmatpush1.bf16.msra.mxu0 %v3742
    %3779 = vmatprep.subr.bf16.mxu0 %v3745
    %3780 = vmatpush1.bf16.msra.mxu0 %v3744
    %3781 = vmatprep.subr.bf16.mxu0 %v3747
    %3782 = vmatpush1.bf16.msra.mxu0 %v3746
    %3783 = vmatprep.subr.bf16.mxu0 %v3749
    %3784 = vmatpush1.bf16.msra.mxu0 %v3748
    %3785 = vmatprep.subr.bf16.mxu0 %v3751
    %3786 = vmatpush1.bf16.msra.mxu0 %v3750
    %3787 = vmatprep.subr.bf16.mxu0 %v3753
    %3788 = vmatpush1.bf16.msra.mxu0 %v3752
    %3789 = vmatprep.subr.bf16.mxu0 %v3775
    %3790 = vmatpush1.bf16.msra.mxu0 %v3772
    %3791 = vmatprep.subr.bf16.mxu0 0
    %3792 = vmatpush1.bf16.msra.mxu0 0
    %3793 = vmatprep.subr.bf16.mxu0 0
    %3794 = vmatpush1.bf16.msra.mxu0 0
    %3795 = vmatprep.subr.bf16.mxu0 0
    %3796 = vmatpush1.bf16.msra.mxu0 0
    %3797 = vmatprep.subr.bf16.mxu0 0
    %3798 = vmatpush1.bf16.msra.mxu0 0
    %3799 = vmatprep.subr.bf16.mxu0 0
    %3800 = vmatpush1.bf16.msra.mxu0 0
    %3801 = vmatprep.subr.bf16.mxu0 0
    %3802 = vmatpush1.bf16.msra.mxu0 0
    %3803 = vmatprep.subr.bf16.mxu0 0
    %3804 = vmatpush1.bf16.msra.mxu0 0
    %3805 = vmatprep.subr.bf16.mxu0 0
    %3806 = vmatpush1.bf16.msra.mxu0 0
    %3807 = vmatprep.subr.bf16.mxu0 0
    %3808 = vmatpush1.bf16.msra.mxu0 0
    %3809 = vmatprep.mubr.bf16.mxu0 0
    %3810 = vmatmul.mubr.bf16.gmra.mrb[0].mxu0 %v3769
    %v3811 = vpop.f32.mrb[0].mxu0
    %v3812 = vadd.f32 0.0, %v3811
    %v3813 = vpop.f32.mrb[0].mxu0
    %v3814 = vadd.f32 0.0, %v3813
    %v3815 = vpop.f32.mrb[0].mxu0
    %v3816 = vpop.f32.mrb[0].mxu0
    %3817 = vdwg.mxu0
    %v3818 = vadd.f32 %v2301, %v3812
    %v3819 = vadd.f32 %v2303, %v3814
    %s3820 = scalar_lea.vmem %s5, 2080
    %v3821 = vld [vmem:[%s3820] sm:$0xff]
    %v3822 = vld [vmem:[%s3820 + $0x8] sm:$0xff]
    %v3823 = vld [vmem:[%s3820 + $0x10] sm:$0xff]
    %v3824 = vld [vmem:[%s3820 + $0x18] sm:$0xff]
    %v3825 = vld [vmem:[%s3820 + $0x20] sm:$0xff]
    %v3826 = vld [vmem:[%s3820 + $0x28] sm:$0xff]
    %v3827 = vld [vmem:[%s3820 + $0x30] sm:$0xff]
    %v3828 = vld [vmem:[%s3820 + $0x38] sm:$0xff]
    %v3829 = vld [vmem:[%s3820 + $0x40] sm:$0xff]
    %v3830 = vld [vmem:[%s3820 + $0x48] sm:$0xff]
    %v3831 = vld [vmem:[%s3820 + $0x50] sm:$0xff]
    %v3832 = vld [vmem:[%s3820 + $0x58] sm:$0xff]
    %v3833 = vld [vmem:[%s3820 + $0x60] sm:$0x11]
    %v3834 = vrot.slane %v1206, 2
    %v3848 = vunpack.c.l.b16 %v3821
    %v3849 = vunpack.c.h.b16 %v3821
    %v3850 = vunpack.c.l.b16 %v3822
    %v3851 = vunpack.c.h.b16 %v3822
    %v3852 = vunpack.c.l.b16 %v3823
    %v3853 = vunpack.c.h.b16 %v3823
    %v3854 = vunpack.c.l.b16 %v3824
    %v3855 = vunpack.c.h.b16 %v3824
    %v3856 = vunpack.c.l.b16 %v3825
    %v3857 = vunpack.c.h.b16 %v3825
    %v3858 = vunpack.c.l.b16 %v3826
    %v3859 = vunpack.c.h.b16 %v3826
    %v3860 = vunpack.c.l.b16 %v3827
    %v3861 = vunpack.c.h.b16 %v3827
    %v3862 = vunpack.c.l.b16 %v3828
    %v3863 = vunpack.c.h.b16 %v3828
    %v3864 = vunpack.c.l.b16 %v3829
    %v3865 = vunpack.c.h.b16 %v3829
    %v3866 = vunpack.c.l.b16 %v3830
    %v3867 = vunpack.c.h.b16 %v3830
    %v3868 = vunpack.c.l.b16 %v3831
    %v3869 = vunpack.c.h.b16 %v3831
    %v3870 = vunpack.c.l.b16 %v3832
    %v3871 = vunpack.c.h.b16 %v3832
    %v3872 = vunpack.c.l.b16 %v3833
    %v3873 = vunpack.c.h.b16 %v3833
    %v3874 = vpack.c.b16 %v3850, %v3848
    %v3875 = vpack.c.b16 %v3851, %v3849
    %v3876 = vpack.c.b16 %v3854, %v3852
    %v3877 = vpack.c.b16 %v3855, %v3853
    %v3878 = vpack.c.b16 %v3858, %v3856
    %v3879 = vpack.c.b16 %v3859, %v3857
    %v3880 = vpack.c.b16 %v3862, %v3860
    %v3881 = vpack.c.b16 %v3863, %v3861
    %v3882 = vpack.c.b16 %v3866, %v3864
    %v3883 = vpack.c.b16 %v3867, %v3865
    %v3884 = vpack.c.b16 %v3870, %v3868
    %v3885 = vpack.c.b16 %v3871, %v3869
    %v3886 = vpack.c.b16 %v3872, %v3872
    %v3887 = vpack.c.b16 %v3873, %v3873
    %v3901 = vsel %vm1399, %v3834, 0
    %v3904 = vand.u32 %v3886, %v1405
    %v3907 = vand.u32 %v3887, %v1405
    %3909 = vmatprep.subr.bf16.mxu0 %v3875
    %3910 = vmatpush1.bf16.msra.mxu0 %v3874
    %3911 = vmatprep.subr.bf16.mxu0 %v3877
    %3912 = vmatpush1.bf16.msra.mxu0 %v3876
    %3913 = vmatprep.subr.bf16.mxu0 %v3879
    %3914 = vmatpush1.bf16.msra.mxu0 %v3878
    %3915 = vmatprep.subr.bf16.mxu0 %v3881
    %3916 = vmatpush1.bf16.msra.mxu0 %v3880
    %3917 = vmatprep.subr.bf16.mxu0 %v3883
    %3918 = vmatpush1.bf16.msra.mxu0 %v3882
    %3919 = vmatprep.subr.bf16.mxu0 %v3885
    %3920 = vmatpush1.bf16.msra.mxu0 %v3884
    %3921 = vmatprep.subr.bf16.mxu0 %v3907
    %3922 = vmatpush1.bf16.msra.mxu0 %v3904
    %3923 = vmatprep.subr.bf16.mxu0 0
    %3924 = vmatpush1.bf16.msra.mxu0 0
    %3925 = vmatprep.subr.bf16.mxu0 0
    %3926 = vmatpush1.bf16.msra.mxu0 0
    %3927 = vmatprep.subr.bf16.mxu0 0
    %3928 = vmatpush1.bf16.msra.mxu0 0
    %3929 = vmatprep.subr.bf16.mxu0 0
    %3930 = vmatpush1.bf16.msra.mxu0 0
    %3931 = vmatprep.subr.bf16.mxu0 0
    %3932 = vmatpush1.bf16.msra.mxu0 0
    %3933 = vmatprep.subr.bf16.mxu0 0
    %3934 = vmatpush1.bf16.msra.mxu0 0
    %3935 = vmatprep.subr.bf16.mxu0 0
    %3936 = vmatpush1.bf16.msra.mxu0 0
    %3937 = vmatprep.subr.bf16.mxu0 0
    %3938 = vmatpush1.bf16.msra.mxu0 0
    %3939 = vmatprep.subr.bf16.mxu0 0
    %3940 = vmatpush1.bf16.msra.mxu0 0
    %3941 = vmatprep.mubr.bf16.mxu0 0
    %3942 = vmatmul.mubr.bf16.gmra.mrb[0].mxu0 %v3901
    %v3943 = vpop.f32.mrb[0].mxu0
    %v3944 = vadd.f32 0.0, %v3943
    %v3945 = vpop.f32.mrb[0].mxu0
    %v3946 = vadd.f32 0.0, %v3945
    %v3947 = vpop.f32.mrb[0].mxu0
    %v3948 = vpop.f32.mrb[0].mxu0
    %3949 = vdwg.mxu0
    %v3950 = vadd.f32 %v2547, %v3944
    %v3951 = vadd.f32 %v2549, %v3946
    %s3952 = scalar_lea.vmem %s5, 2184
    %v3953 = vld [vmem:[%s3952] sm:$0xff]
    %v3954 = vld [vmem:[%s3952 + $0x8] sm:$0xff]
    %v3955 = vld [vmem:[%s3952 + $0x10] sm:$0xff]
    %v3956 = vld [vmem:[%s3952 + $0x18] sm:$0xff]
    %v3957 = vld [vmem:[%s3952 + $0x20] sm:$0xff]
    %v3958 = vld [vmem:[%s3952 + $0x28] sm:$0xff]
    %v3959 = vld [vmem:[%s3952 + $0x30] sm:$0xff]
    %v3960 = vld [vmem:[%s3952 + $0x38] sm:$0xff]
    %v3961 = vld [vmem:[%s3952 + $0x40] sm:$0xff]
    %v3962 = vld [vmem:[%s3952 + $0x48] sm:$0xff]
    %v3963 = vld [vmem:[%s3952 + $0x50] sm:$0xff]
    %v3964 = vld [vmem:[%s3952 + $0x58] sm:$0xff]
    %v3965 = vld [vmem:[%s3952 + $0x60] sm:$0x11]
    %v3966 = vrot.slane %v3436, 2
    %v3980 = vunpack.c.l.b16 %v3953
    %v3981 = vunpack.c.h.b16 %v3953
    %v3982 = vunpack.c.l.b16 %v3954
    %v3983 = vunpack.c.h.b16 %v3954
    %v3984 = vunpack.c.l.b16 %v3955
    %v3985 = vunpack.c.h.b16 %v3955
    %v3986 = vunpack.c.l.b16 %v3956
    %v3987 = vunpack.c.h.b16 %v3956
    %v3988 = vunpack.c.l.b16 %v3957
    %v3989 = vunpack.c.h.b16 %v3957
    %v3990 = vunpack.c.l.b16 %v3958
    %v3991 = vunpack.c.h.b16 %v3958
    %v3992 = vunpack.c.l.b16 %v3959
    %v3993 = vunpack.c.h.b16 %v3959
    %v3994 = vunpack.c.l.b16 %v3960
    %v3995 = vunpack.c.h.b16 %v3960
    %v3996 = vunpack.c.l.b16 %v3961
    %v3997 = vunpack.c.h.b16 %v3961
    %v3998 = vunpack.c.l.b16 %v3962
    %v3999 = vunpack.c.h.b16 %v3962
    %v4000 = vunpack.c.l.b16 %v3963
    %v4001 = vunpack.c.h.b16 %v3963
    %v4002 = vunpack.c.l.b16 %v3964
    %v4003 = vunpack.c.h.b16 %v3964
    %v4004 = vunpack.c.l.b16 %v3965
    %v4005 = vunpack.c.h.b16 %v3965
    %v4006 = vpack.c.b16 %v3982, %v3980
    %v4007 = vpack.c.b16 %v3983, %v3981
    %v4008 = vpack.c.b16 %v3986, %v3984
    %v4009 = vpack.c.b16 %v3987, %v3985
    %v4010 = vpack.c.b16 %v3990, %v3988
    %v4011 = vpack.c.b16 %v3991, %v3989
    %v4012 = vpack.c.b16 %v3994, %v3992
    %v4013 = vpack.c.b16 %v3995, %v3993
    %v4014 = vpack.c.b16 %v3998, %v3996
    %v4015 = vpack.c.b16 %v3999, %v3997
    %v4016 = vpack.c.b16 %v4002, %v4000
    %v4017 = vpack.c.b16 %v4003, %v4001
    %v4018 = vpack.c.b16 %v4004, %v4004
    %v4019 = vpack.c.b16 %v4005, %v4005
    %v4033 = vsel %vm1399, %v3966, 0
    %v4036 = vand.u32 %v4018, %v1405
    %v4039 = vand.u32 %v4019, %v1405
    %4041 = vmatprep.subr.bf16.mxu0 %v4007
    %4042 = vmatpush1.bf16.msra.mxu0 %v4006
    %4043 = vmatprep.subr.bf16.mxu0 %v4009
    %4044 = vmatpush1.bf16.msra.mxu0 %v4008
    %4045 = vmatprep.subr.bf16.mxu0 %v4011
    %4046 = vmatpush1.bf16.msra.mxu0 %v4010
    %4047 = vmatprep.subr.bf16.mxu0 %v4013
    %4048 = vmatpush1.bf16.msra.mxu0 %v4012
    %4049 = vmatprep.subr.bf16.mxu0 %v4015
    %4050 = vmatpush1.bf16.msra.mxu0 %v4014
    %4051 = vmatprep.subr.bf16.mxu0 %v4017
    %4052 = vmatpush1.bf16.msra.mxu0 %v4016
    %4053 = vmatprep.subr.bf16.mxu0 %v4039
    %4054 = vmatpush1.bf16.msra.mxu0 %v4036
    %4055 = vmatprep.subr.bf16.mxu0 0
    %4056 = vmatpush1.bf16.msra.mxu0 0
    %4057 = vmatprep.subr.bf16.mxu0 0
    %4058 = vmatpush1.bf16.msra.mxu0 0
    %4059 = vmatprep.subr.bf16.mxu0 0
    %4060 = vmatpush1.bf16.msra.mxu0 0
    %4061 = vmatprep.subr.bf16.mxu0 0
    %4062 = vmatpush1.bf16.msra.mxu0 0
    %4063 = vmatprep.subr.bf16.mxu0 0
    %4064 = vmatpush1.bf16.msra.mxu0 0
    %4065 = vmatprep.subr.bf16.mxu0 0
    %4066 = vmatpush1.bf16.msra.mxu0 0
    %4067 = vmatprep.subr.bf16.mxu0 0
    %4068 = vmatpush1.bf16.msra.mxu0 0
    %4069 = vmatprep.subr.bf16.mxu0 0
    %4070 = vmatpush1.bf16.msra.mxu0 0
    %4071 = vmatprep.subr.bf16.mxu0 0
    %4072 = vmatpush1.bf16.msra.mxu0 0
    %4073 = vmatprep.mubr.bf16.mxu0 0
    %4074 = vmatmul.mubr.bf16.gmra.mrb[0].mxu0 %v4033
    %v4075 = vpop.f32.mrb[0].mxu0
    %v4076 = vadd.f32 0.0, %v4075
    %v4077 = vpop.f32.mrb[0].mxu0
    %v4078 = vadd.f32 0.0, %v4077
    %v4079 = vpop.f32.mrb[0].mxu0
    %v4080 = vpop.f32.mrb[0].mxu0
    %4081 = vdwg.mxu0
    %v4082 = vadd.f32 %v2793, %v4076
    %v4083 = vadd.f32 %v2795, %v4078
    %s4084 = scalar_lea.vmem %s5, 2288
    %v4085 = vld [vmem:[%s4084] sm:$0xff]
    %v4086 = vld [vmem:[%s4084 + $0x8] sm:$0xff]
    %v4087 = vld [vmem:[%s4084 + $0x10] sm:$0xff]
    %v4088 = vld [vmem:[%s4084 + $0x18] sm:$0xff]
    %v4089 = vld [vmem:[%s4084 + $0x20] sm:$0xff]
    %v4090 = vld [vmem:[%s4084 + $0x28] sm:$0xff]
    %v4091 = vld [vmem:[%s4084 + $0x30] sm:$0xff]
    %v4092 = vld [vmem:[%s4084 + $0x38] sm:$0xff]
    %v4093 = vld [vmem:[%s4084 + $0x40] sm:$0xff]
    %v4094 = vld [vmem:[%s4084 + $0x48] sm:$0xff]
    %v4095 = vld [vmem:[%s4084 + $0x50] sm:$0xff]
    %v4096 = vld [vmem:[%s4084 + $0x58] sm:$0xff]
    %v4097 = vld [vmem:[%s4084 + $0x60] sm:$0x11]
    %v4098 = vrot.slane %v1206, 3
    %v4112 = vunpack.c.l.b16 %v4085
    %v4113 = vunpack.c.h.b16 %v4085
    %v4114 = vunpack.c.l.b16 %v4086
    %v4115 = vunpack.c.h.b16 %v4086
    %v4116 = vunpack.c.l.b16 %v4087
    %v4117 = vunpack.c.h.b16 %v4087
    %v4118 = vunpack.c.l.b16 %v4088
    %v4119 = vunpack.c.h.b16 %v4088
    %v4120 = vunpack.c.l.b16 %v4089
    %v4121 = vunpack.c.h.b16 %v4089
    %v4122 = vunpack.c.l.b16 %v4090
    %v4123 = vunpack.c.h.b16 %v4090
    %v4124 = vunpack.c.l.b16 %v4091
    %v4125 = vunpack.c.h.b16 %v4091
    %v4126 = vunpack.c.l.b16 %v4092
    %v4127 = vunpack.c.h.b16 %v4092
    %v4128 = vunpack.c.l.b16 %v4093
    %v4129 = vunpack.c.h.b16 %v4093
    %v4130 = vunpack.c.l.b16 %v4094
    %v4131 = vunpack.c.h.b16 %v4094
    %v4132 = vunpack.c.l.b16 %v4095
    %v4133 = vunpack.c.h.b16 %v4095
    %v4134 = vunpack.c.l.b16 %v4096
    %v4135 = vunpack.c.h.b16 %v4096
    %v4136 = vunpack.c.l.b16 %v4097
    %v4137 = vunpack.c.h.b16 %v4097
    %v4138 = vpack.c.b16 %v4114, %v4112
    %v4139 = vpack.c.b16 %v4115, %v4113
    %v4140 = vpack.c.b16 %v4118, %v4116
    %v4141 = vpack.c.b16 %v4119, %v4117
    %v4142 = vpack.c.b16 %v4122, %v4120
    %v4143 = vpack.c.b16 %v4123, %v4121
    %v4144 = vpack.c.b16 %v4126, %v4124
    %v4145 = vpack.c.b16 %v4127, %v4125
    %v4146 = vpack.c.b16 %v4130, %v4128
    %v4147 = vpack.c.b16 %v4131, %v4129
    %v4148 = vpack.c.b16 %v4134, %v4132
    %v4149 = vpack.c.b16 %v4135, %v4133
    %v4150 = vpack.c.b16 %v4136, %v4136
    %v4151 = vpack.c.b16 %v4137, %v4137
    %v4165 = vsel %vm1399, %v4098, 0
    %v4168 = vand.u32 %v4150, %v1405
    %v4171 = vand.u32 %v4151, %v1405
    %4173 = vmatprep.subr.bf16.mxu0 %v4139
    %4174 = vmatpush1.bf16.msra.mxu0 %v4138
    %4175 = vmatprep.subr.bf16.mxu0 %v4141
    %4176 = vmatpush1.bf16.msra.mxu0 %v4140
    %4177 = vmatprep.subr.bf16.mxu0 %v4143
    %4178 = vmatpush1.bf16.msra.mxu0 %v4142
    %4179 = vmatprep.subr.bf16.mxu0 %v4145
    %4180 = vmatpush1.bf16.msra.mxu0 %v4144
    %4181 = vmatprep.subr.bf16.mxu0 %v4147
    %4182 = vmatpush1.bf16.msra.mxu0 %v4146
    %4183 = vmatprep.subr.bf16.mxu0 %v4149
    %4184 = vmatpush1.bf16.msra.mxu0 %v4148
    %4185 = vmatprep.subr.bf16.mxu0 %v4171
    %4186 = vmatpush1.bf16.msra.mxu0 %v4168
    %4187 = vmatprep.subr.bf16.mxu0 0
    %4188 = vmatpush1.bf16.msra.mxu0 0
    %4189 = vmatprep.subr.bf16.mxu0 0
    %4190 = vmatpush1.bf16.msra.mxu0 0
    %4191 = vmatprep.subr.bf16.mxu0 0
    %4192 = vmatpush1.bf16.msra.mxu0 0
    %4193 = vmatprep.subr.bf16.mxu0 0
    %4194 = vmatpush1.bf16.msra.mxu0 0
    %4195 = vmatprep.subr.bf16.mxu0 0
    %4196 = vmatpush1.bf16.msra.mxu0 0
    %4197 = vmatprep.subr.bf16.mxu0 0
    %4198 = vmatpush1.bf16.msra.mxu0 0
    %4199 = vmatprep.subr.bf16.mxu0 0
    %4200 = vmatpush1.bf16.msra.mxu0 0
    %4201 = vmatprep.subr.bf16.mxu0 0
    %4202 = vmatpush1.bf16.msra.mxu0 0
    %4203 = vmatprep.subr.bf16.mxu0 0
    %4204 = vmatpush1.bf16.msra.mxu0 0
    %4205 = vmatprep.mubr.bf16.mxu0 0
    %4206 = vmatmul.mubr.bf16.gmra.mrb[0].mxu0 %v4165
    %v4207 = vpop.f32.mrb[0].mxu0
    %v4208 = vadd.f32 0.0, %v4207
    %v4209 = vpop.f32.mrb[0].mxu0
    %v4210 = vadd.f32 0.0, %v4209
    %v4211 = vpop.f32.mrb[0].mxu0
    %v4212 = vpop.f32.mrb[0].mxu0
    %4213 = vdwg.mxu0
    %v4214 = vadd.f32 %v3039, %v4208
    %v4215 = vadd.f32 %v3041, %v4210
    %s4216 = scalar_lea.vmem %s5, 2392
    %v4217 = vld [vmem:[%s4216] sm:$0xff]
    %v4218 = vld [vmem:[%s4216 + $0x8] sm:$0xff]
    %v4219 = vld [vmem:[%s4216 + $0x10] sm:$0xff]
    %v4220 = vld [vmem:[%s4216 + $0x18] sm:$0xff]
    %v4221 = vld [vmem:[%s4216 + $0x20] sm:$0xff]
    %v4222 = vld [vmem:[%s4216 + $0x28] sm:$0xff]
    %v4223 = vld [vmem:[%s4216 + $0x30] sm:$0xff]
    %v4224 = vld [vmem:[%s4216 + $0x38] sm:$0xff]
    %v4225 = vld [vmem:[%s4216 + $0x40] sm:$0xff]
    %v4226 = vld [vmem:[%s4216 + $0x48] sm:$0xff]
    %v4227 = vld [vmem:[%s4216 + $0x50] sm:$0xff]
    %v4228 = vld [vmem:[%s4216 + $0x58] sm:$0xff]
    %v4229 = vld [vmem:[%s4216 + $0x60] sm:$0x11]
    %v4230 = vrot.slane %v3436, 3
    %v4244 = vunpack.c.l.b16 %v4217
    %v4245 = vunpack.c.h.b16 %v4217
    %v4246 = vunpack.c.l.b16 %v4218
    %v4247 = vunpack.c.h.b16 %v4218
    %v4248 = vunpack.c.l.b16 %v4219
    %v4249 = vunpack.c.h.b16 %v4219
    %v4250 = vunpack.c.l.b16 %v4220
    %v4251 = vunpack.c.h.b16 %v4220
    %v4252 = vunpack.c.l.b16 %v4221
    %v4253 = vunpack.c.h.b16 %v4221
    %v4254 = vunpack.c.l.b16 %v4222
    %v4255 = vunpack.c.h.b16 %v4222
    %v4256 = vunpack.c.l.b16 %v4223
    %v4257 = vunpack.c.h.b16 %v4223
    %v4258 = vunpack.c.l.b16 %v4224
    %v4259 = vunpack.c.h.b16 %v4224
    %v4260 = vunpack.c.l.b16 %v4225
    %v4261 = vunpack.c.h.b16 %v4225
    %v4262 = vunpack.c.l.b16 %v4226
    %v4263 = vunpack.c.h.b16 %v4226
    %v4264 = vunpack.c.l.b16 %v4227
    %v4265 = vunpack.c.h.b16 %v4227
    %v4266 = vunpack.c.l.b16 %v4228
    %v4267 = vunpack.c.h.b16 %v4228
    %v4268 = vunpack.c.l.b16 %v4229
    %v4269 = vunpack.c.h.b16 %v4229
    %v4270 = vpack.c.b16 %v4246, %v4244
    %v4271 = vpack.c.b16 %v4247, %v4245
    %v4272 = vpack.c.b16 %v4250, %v4248
    %v4273 = vpack.c.b16 %v4251, %v4249
    %v4274 = vpack.c.b16 %v4254, %v4252
    %v4275 = vpack.c.b16 %v4255, %v4253
    %v4276 = vpack.c.b16 %v4258, %v4256
    %v4277 = vpack.c.b16 %v4259, %v4257
    %v4278 = vpack.c.b16 %v4262, %v4260
    %v4279 = vpack.c.b16 %v4263, %v4261
    %v4280 = vpack.c.b16 %v4266, %v4264
    %v4281 = vpack.c.b16 %v4267, %v4265
    %v4282 = vpack.c.b16 %v4268, %v4268
    %v4283 = vpack.c.b16 %v4269, %v4269
    %v4297 = vsel %vm1399, %v4230, 0
    %v4300 = vand.u32 %v4282, %v1405
    %v4303 = vand.u32 %v4283, %v1405
    %4305 = vmatprep.subr.bf16.mxu0 %v4271
    %4306 = vmatpush1.bf16.msra.mxu0 %v4270
    %4307 = vmatprep.subr.bf16.mxu0 %v4273
    %4308 = vmatpush1.bf16.msra.mxu0 %v4272
    %4309 = vmatprep.subr.bf16.mxu0 %v4275
    %4310 = vmatpush1.bf16.msra.mxu0 %v4274
    %4311 = vmatprep.subr.bf16.mxu0 %v4277
    %4312 = vmatpush1.bf16.msra.mxu0 %v4276
    %4313 = vmatprep.subr.bf16.mxu0 %v4279
    %4314 = vmatpush1.bf16.msra.mxu0 %v4278
    %4315 = vmatprep.subr.bf16.mxu0 %v4281
    %4316 = vmatpush1.bf16.msra.mxu0 %v4280
    %4317 = vmatprep.subr.bf16.mxu0 %v4303
    %4318 = vmatpush1.bf16.msra.mxu0 %v4300
    %4319 = vmatprep.subr.bf16.mxu0 0
    %4320 = vmatpush1.bf16.msra.mxu0 0
    %4321 = vmatprep.subr.bf16.mxu0 0
    %4322 = vmatpush1.bf16.msra.mxu0 0
    %4323 = vmatprep.subr.bf16.mxu0 0
    %4324 = vmatpush1.bf16.msra.mxu0 0
    %4325 = vmatprep.subr.bf16.mxu0 0
    %4326 = vmatpush1.bf16.msra.mxu0 0
    %4327 = vmatprep.subr.bf16.mxu0 0
    %4328 = vmatpush1.bf16.msra.mxu0 0
    %4329 = vmatprep.subr.bf16.mxu0 0
    %4330 = vmatpush1.bf16.msra.mxu0 0
    %4331 = vmatprep.subr.bf16.mxu0 0
    %4332 = vmatpush1.bf16.msra.mxu0 0
    %4333 = vmatprep.subr.bf16.mxu0 0
    %4334 = vmatpush1.bf16.msra.mxu0 0
    %4335 = vmatprep.subr.bf16.mxu0 0
    %4336 = vmatpush1.bf16.msra.mxu0 0
    %4337 = vmatprep.mubr.bf16.mxu0 0
    %4338 = vmatmul.mubr.bf16.gmra.mrb[0].mxu0 %v4297
    %v4339 = vpop.f32.mrb[0].mxu0
    %v4340 = vadd.f32 0.0, %v4339
    %v4341 = vpop.f32.mrb[0].mxu0
    %v4342 = vadd.f32 0.0, %v4341
    %v4343 = vpop.f32.mrb[0].mxu0
    %v4344 = vpop.f32.mrb[0].mxu0
    %4345 = vdwg.mxu0
    %v4346 = vadd.f32 %v3285, %v4340
    %v4347 = vadd.f32 %v3287, %v4342
    %s4348 = scalar_lea.vmem %s5, 2496
    %v4349 = vld [vmem:[%s4348] sm:$0xff]
    %v4350 = vld [vmem:[%s4348 + $0x8] sm:$0xff]
    %v4351 = vld [vmem:[%s4348 + $0x10] sm:$0xff]
    %v4352 = vld [vmem:[%s4348 + $0x18] sm:$0xff]
    %v4353 = vld [vmem:[%s4348 + $0x20] sm:$0xff]
    %v4354 = vld [vmem:[%s4348 + $0x28] sm:$0xff]
    %v4355 = vld [vmem:[%s4348 + $0x30] sm:$0xff]
    %v4356 = vld [vmem:[%s4348 + $0x38] sm:$0xff]
    %v4357 = vld [vmem:[%s4348 + $0x40] sm:$0xff]
    %v4358 = vld [vmem:[%s4348 + $0x48] sm:$0xff]
    %v4359 = vld [vmem:[%s4348 + $0x50] sm:$0xff]
    %v4360 = vld [vmem:[%s4348 + $0x58] sm:$0xff]
    %v4361 = vld [vmem:[%s4348 + $0x60] sm:$0x11]
    %v4362 = vrot.slane %v1206, 4
    %v4376 = vunpack.c.l.b16 %v4349
    %v4377 = vunpack.c.h.b16 %v4349
    %v4378 = vunpack.c.l.b16 %v4350
    %v4379 = vunpack.c.h.b16 %v4350
    %v4380 = vunpack.c.l.b16 %v4351
    %v4381 = vunpack.c.h.b16 %v4351
    %v4382 = vunpack.c.l.b16 %v4352
    %v4383 = vunpack.c.h.b16 %v4352
    %v4384 = vunpack.c.l.b16 %v4353
    %v4385 = vunpack.c.h.b16 %v4353
    %v4386 = vunpack.c.l.b16 %v4354
    %v4387 = vunpack.c.h.b16 %v4354
    %v4388 = vunpack.c.l.b16 %v4355
    %v4389 = vunpack.c.h.b16 %v4355
    %v4390 = vunpack.c.l.b16 %v4356
    %v4391 = vunpack.c.h.b16 %v4356
    %v4392 = vunpack.c.l.b16 %v4357
    %v4393 = vunpack.c.h.b16 %v4357
    %v4394 = vunpack.c.l.b16 %v4358
    %v4395 = vunpack.c.h.b16 %v4358
    %v4396 = vunpack.c.l.b16 %v4359
    %v4397 = vunpack.c.h.b16 %v4359
    %v4398 = vunpack.c.l.b16 %v4360
    %v4399 = vunpack.c.h.b16 %v4360
    %v4400 = vunpack.c.l.b16 %v4361
    %v4401 = vunpack.c.h.b16 %v4361
    %v4402 = vpack.c.b16 %v4378, %v4376
    %v4403 = vpack.c.b16 %v4379, %v4377
    %v4404 = vpack.c.b16 %v4382, %v4380
    %v4405 = vpack.c.b16 %v4383, %v4381
    %v4406 = vpack.c.b16 %v4386, %v4384
    %v4407 = vpack.c.b16 %v4387, %v4385
    %v4408 = vpack.c.b16 %v4390, %v4388
    %v4409 = vpack.c.b16 %v4391, %v4389
    %v4410 = vpack.c.b16 %v4394, %v4392
    %v4411 = vpack.c.b16 %v4395, %v4393
    %v4412 = vpack.c.b16 %v4398, %v4396
    %v4413 = vpack.c.b16 %v4399, %v4397
    %v4414 = vpack.c.b16 %v4400, %v4400
    %v4415 = vpack.c.b16 %v4401, %v4401
    %v4429 = vsel %vm1399, %v4362, 0
    %v4432 = vand.u32 %v4414, %v1405
    %v4435 = vand.u32 %v4415, %v1405
    %4437 = vmatprep.subr.bf16.mxu0 %v4403
    %4438 = vmatpush1.bf16.msra.mxu0 %v4402
    %4439 = vmatprep.subr.bf16.mxu0 %v4405
    %4440 = vmatpush1.bf16.msra.mxu0 %v4404
    %4441 = vmatprep.subr.bf16.mxu0 %v4407
    %4442 = vmatpush1.bf16.msra.mxu0 %v4406
    %4443 = vmatprep.subr.bf16.mxu0 %v4409
    %4444 = vmatpush1.bf16.msra.mxu0 %v4408
    %4445 = vmatprep.subr.bf16.mxu0 %v4411
    %4446 = vmatpush1.bf16.msra.mxu0 %v4410
    %4447 = vmatprep.subr.bf16.mxu0 %v4413
    %4448 = vmatpush1.bf16.msra.mxu0 %v4412
    %4449 = vmatprep.subr.bf16.mxu0 %v4435
    %4450 = vmatpush1.bf16.msra.mxu0 %v4432
    %4451 = vmatprep.subr.bf16.mxu0 0
    %4452 = vmatpush1.bf16.msra.mxu0 0
    %4453 = vmatprep.subr.bf16.mxu0 0
    %4454 = vmatpush1.bf16.msra.mxu0 0
    %4455 = vmatprep.subr.bf16.mxu0 0
    %4456 = vmatpush1.bf16.msra.mxu0 0
    %4457 = vmatprep.subr.bf16.mxu0 0
    %4458 = vmatpush1.bf16.msra.mxu0 0
    %4459 = vmatprep.subr.bf16.mxu0 0
    %4460 = vmatpush1.bf16.msra.mxu0 0
    %4461 = vmatprep.subr.bf16.mxu0 0
    %4462 = vmatpush1.bf16.msra.mxu0 0
    %4463 = vmatprep.subr.bf16.mxu0 0
    %4464 = vmatpush1.bf16.msra.mxu0 0
    %4465 = vmatprep.subr.bf16.mxu0 0
    %4466 = vmatpush1.bf16.msra.mxu0 0
    %4467 = vmatprep.subr.bf16.mxu0 0
    %4468 = vmatpush1.bf16.msra.mxu0 0
    %4469 = vmatprep.mubr.bf16.mxu0 0
    %4470 = vmatmul.mubr.bf16.gmra.mrb[0].mxu0 %v4429
    %v4471 = vpop.f32.mrb[0].mxu0
    %v4472 = vadd.f32 0.0, %v4471
    %v4473 = vpop.f32.mrb[0].mxu0
    %v4474 = vadd.f32 0.0, %v4473
    %v4475 = vpop.f32.mrb[0].mxu0
    %v4476 = vpop.f32.mrb[0].mxu0
    %4477 = vdwg.mxu0
    %v4478 = vadd.f32 %v3420, %v4472
    %v4479 = vadd.f32 %v3421, %v4474
    %s4480 = scalar_lea.vmem %s5, 2600
    %v4481 = vld [vmem:[%s4480] sm:$0xff]
    %v4482 = vld [vmem:[%s4480 + $0x8] sm:$0xff]
    %v4483 = vld [vmem:[%s4480 + $0x10] sm:$0xff]
    %v4484 = vld [vmem:[%s4480 + $0x18] sm:$0xff]
    %v4485 = vld [vmem:[%s4480 + $0x20] sm:$0xff]
    %v4486 = vld [vmem:[%s4480 + $0x28] sm:$0xff]
    %v4487 = vld [vmem:[%s4480 + $0x30] sm:$0xff]
    %v4488 = vld [vmem:[%s4480 + $0x38] sm:$0xff]
    %v4489 = vld [vmem:[%s4480 + $0x40] sm:$0xff]
    %v4490 = vld [vmem:[%s4480 + $0x48] sm:$0xff]
    %v4491 = vld [vmem:[%s4480 + $0x50] sm:$0xff]
    %v4492 = vld [vmem:[%s4480 + $0x58] sm:$0xff]
    %v4493 = vld [vmem:[%s4480 + $0x60] sm:$0x11]
    %v4494 = vrot.slane %v3436, 4
    %v4508 = vunpack.c.l.b16 %v4481
    %v4509 = vunpack.c.h.b16 %v4481
    %v4510 = vunpack.c.l.b16 %v4482
    %v4511 = vunpack.c.h.b16 %v4482
    %v4512 = vunpack.c.l.b16 %v4483
    %v4513 = vunpack.c.h.b16 %v4483
    %v4514 = vunpack.c.l.b16 %v4484
    %v4515 = vunpack.c.h.b16 %v4484
    %v4516 = vunpack.c.l.b16 %v4485
    %v4517 = vunpack.c.h.b16 %v4485
    %v4518 = vunpack.c.l.b16 %v4486
    %v4519 = vunpack.c.h.b16 %v4486
    %v4520 = vunpack.c.l.b16 %v4487
    %v4521 = vunpack.c.h.b16 %v4487
    %v4522 = vunpack.c.l.b16 %v4488
    %v4523 = vunpack.c.h.b16 %v4488
    %v4524 = vunpack.c.l.b16 %v4489
    %v4525 = vunpack.c.h.b16 %v4489
    %v4526 = vunpack.c.l.b16 %v4490
    %v4527 = vunpack.c.h.b16 %v4490
    %v4528 = vunpack.c.l.b16 %v4491
    %v4529 = vunpack.c.h.b16 %v4491
    %v4530 = vunpack.c.l.b16 %v4492
    %v4531 = vunpack.c.h.b16 %v4492
    %v4532 = vunpack.c.l.b16 %v4493
    %v4533 = vunpack.c.h.b16 %v4493
    %v4534 = vpack.c.b16 %v4510, %v4508
    %v4535 = vpack.c.b16 %v4511, %v4509
    %v4536 = vpack.c.b16 %v4514, %v4512
    %v4537 = vpack.c.b16 %v4515, %v4513
    %v4538 = vpack.c.b16 %v4518, %v4516
    %v4539 = vpack.c.b16 %v4519, %v4517
    %v4540 = vpack.c.b16 %v4522, %v4520
    %v4541 = vpack.c.b16 %v4523, %v4521
    %v4542 = vpack.c.b16 %v4526, %v4524
    %v4543 = vpack.c.b16 %v4527, %v4525
    %v4544 = vpack.c.b16 %v4530, %v4528
    %v4545 = vpack.c.b16 %v4531, %v4529
    %v4546 = vpack.c.b16 %v4532, %v4532
    %v4547 = vpack.c.b16 %v4533, %v4533
    %v4561 = vsel %vm1399, %v4494, 0
    %v4564 = vand.u32 %v4546, %v1405
    %v4567 = vand.u32 %v4547, %v1405
    %4569 = vmatprep.subr.bf16.mxu0 %v4535
    %4570 = vmatpush1.bf16.msra.mxu0 %v4534
    %4571 = vmatprep.subr.bf16.mxu0 %v4537
    %4572 = vmatpush1.bf16.msra.mxu0 %v4536
    %4573 = vmatprep.subr.bf16.mxu0 %v4539
    %4574 = vmatpush1.bf16.msra.mxu0 %v4538
    %4575 = vmatprep.subr.bf16.mxu0 %v4541
    %4576 = vmatpush1.bf16.msra.mxu0 %v4540
    %4577 = vmatprep.subr.bf16.mxu0 %v4543
    %4578 = vmatpush1.bf16.msra.mxu0 %v4542
    %4579 = vmatprep.subr.bf16.mxu0 %v4545
    %4580 = vmatpush1.bf16.msra.mxu0 %v4544
    %4581 = vmatprep.subr.bf16.mxu0 %v4567
    %4582 = vmatpush1.bf16.msra.mxu0 %v4564
    %4583 = vmatprep.subr.bf16.mxu0 0
    %4584 = vmatpush1.bf16.msra.mxu0 0
    %4585 = vmatprep.subr.bf16.mxu0 0
    %4586 = vmatpush1.bf16.msra.mxu0 0
    %4587 = vmatprep.subr.bf16.mxu0 0
    %4588 = vmatpush1.bf16.msra.mxu0 0
    %4589 = vmatprep.subr.bf16.mxu0 0
    %4590 = vmatpush1.bf16.msra.mxu0 0
    %4591 = vmatprep.subr.bf16.mxu0 0
    %4592 = vmatpush1.bf16.msra.mxu0 0
    %4593 = vmatprep.subr.bf16.mxu0 0
    %4594 = vmatpush1.bf16.msra.mxu0 0
    %4595 = vmatprep.subr.bf16.mxu0 0
    %4596 = vmatpush1.bf16.msra.mxu0 0
    %4597 = vmatprep.subr.bf16.mxu0 0
    %4598 = vmatpush1.bf16.msra.mxu0 0
    %4599 = vmatprep.subr.bf16.mxu0 0
    %4600 = vmatpush1.bf16.msra.mxu0 0
    %4601 = vmatprep.mubr.bf16.mxu0 0
    %4602 = vmatmul.mubr.bf16.gmra.mrb[0].mxu0 %v4561
    %v4603 = vpop.f32.mrb[0].mxu0
    %v4604 = vadd.f32 0.0, %v4603
    %v4605 = vpop.f32.mrb[0].mxu0
    %v4606 = vadd.f32 0.0, %v4605
    %v4607 = vpop.f32.mrb[0].mxu0
    %v4608 = vpop.f32.mrb[0].mxu0
    %4609 = vdwg.mxu0
    %v4610 = vadd.f32 %v3553, %v4604
    %v4611 = vadd.f32 %v3554, %v4606
    %s4612 = scalar_lea.vmem %s5, 2704
    %v4613 = vld [vmem:[%s4612] sm:$0xff]
    %v4614 = vld [vmem:[%s4612 + $0x8] sm:$0xff]
    %v4615 = vld [vmem:[%s4612 + $0x10] sm:$0xff]
    %v4616 = vld [vmem:[%s4612 + $0x18] sm:$0xff]
    %v4617 = vld [vmem:[%s4612 + $0x20] sm:$0xff]
    %v4618 = vld [vmem:[%s4612 + $0x28] sm:$0xff]
    %v4619 = vld [vmem:[%s4612 + $0x30] sm:$0xff]
    %v4620 = vld [vmem:[%s4612 + $0x38] sm:$0xff]
    %v4621 = vld [vmem:[%s4612 + $0x40] sm:$0xff]
    %v4622 = vld [vmem:[%s4612 + $0x48] sm:$0xff]
    %v4623 = vld [vmem:[%s4612 + $0x50] sm:$0xff]
    %v4624 = vld [vmem:[%s4612 + $0x58] sm:$0xff]
    %v4625 = vld [vmem:[%s4612 + $0x60] sm:$0x11]
    %v4626 = vrot.slane %v1206, 5
    %v4640 = vunpack.c.l.b16 %v4613
    %v4641 = vunpack.c.h.b16 %v4613
    %v4642 = vunpack.c.l.b16 %v4614
    %v4643 = vunpack.c.h.b16 %v4614
    %v4644 = vunpack.c.l.b16 %v4615
    %v4645 = vunpack.c.h.b16 %v4615
    %v4646 = vunpack.c.l.b16 %v4616
    %v4647 = vunpack.c.h.b16 %v4616
    %v4648 = vunpack.c.l.b16 %v4617
    %v4649 = vunpack.c.h.b16 %v4617
    %v4650 = vunpack.c.l.b16 %v4618
    %v4651 = vunpack.c.h.b16 %v4618
    %v4652 = vunpack.c.l.b16 %v4619
    %v4653 = vunpack.c.h.b16 %v4619
    %v4654 = vunpack.c.l.b16 %v4620
    %v4655 = vunpack.c.h.b16 %v4620
    %v4656 = vunpack.c.l.b16 %v4621
    %v4657 = vunpack.c.h.b16 %v4621
    %v4658 = vunpack.c.l.b16 %v4622
    %v4659 = vunpack.c.h.b16 %v4622
    %v4660 = vunpack.c.l.b16 %v4623
    %v4661 = vunpack.c.h.b16 %v4623
    %v4662 = vunpack.c.l.b16 %v4624
    %v4663 = vunpack.c.h.b16 %v4624
    %v4664 = vunpack.c.l.b16 %v4625
    %v4665 = vunpack.c.h.b16 %v4625
    %v4666 = vpack.c.b16 %v4642, %v4640
    %v4667 = vpack.c.b16 %v4643, %v4641
    %v4668 = vpack.c.b16 %v4646, %v4644
    %v4669 = vpack.c.b16 %v4647, %v4645
    %v4670 = vpack.c.b16 %v4650, %v4648
    %v4671 = vpack.c.b16 %v4651, %v4649
    %v4672 = vpack.c.b16 %v4654, %v4652
    %v4673 = vpack.c.b16 %v4655, %v4653
    %v4674 = vpack.c.b16 %v4658, %v4656
    %v4675 = vpack.c.b16 %v4659, %v4657
    %v4676 = vpack.c.b16 %v4662, %v4660
    %v4677 = vpack.c.b16 %v4663, %v4661
    %v4678 = vpack.c.b16 %v4664, %v4664
    %v4679 = vpack.c.b16 %v4665, %v4665
    %v4693 = vsel %vm1399, %v4626, 0
    %v4696 = vand.u32 %v4678, %v1405
    %v4699 = vand.u32 %v4679, %v1405
    %4701 = vmatprep.subr.bf16.mxu0 %v4667
    %4702 = vmatpush1.bf16.msra.mxu0 %v4666
    %4703 = vmatprep.subr.bf16.mxu0 %v4669
    %4704 = vmatpush1.bf16.msra.mxu0 %v4668
    %4705 = vmatprep.subr.bf16.mxu0 %v4671
    %4706 = vmatpush1.bf16.msra.mxu0 %v4670
    %4707 = vmatprep.subr.bf16.mxu0 %v4673
    %4708 = vmatpush1.bf16.msra.mxu0 %v4672
    %4709 = vmatprep.subr.bf16.mxu0 %v4675
    %4710 = vmatpush1.bf16.msra.mxu0 %v4674
    %4711 = vmatprep.subr.bf16.mxu0 %v4677
    %4712 = vmatpush1.bf16.msra.mxu0 %v4676
    %4713 = vmatprep.subr.bf16.mxu0 %v4699
    %4714 = vmatpush1.bf16.msra.mxu0 %v4696
    %4715 = vmatprep.subr.bf16.mxu0 0
    %4716 = vmatpush1.bf16.msra.mxu0 0
    %4717 = vmatprep.subr.bf16.mxu0 0
    %4718 = vmatpush1.bf16.msra.mxu0 0
    %4719 = vmatprep.subr.bf16.mxu0 0
    %4720 = vmatpush1.bf16.msra.mxu0 0
    %4721 = vmatprep.subr.bf16.mxu0 0
    %4722 = vmatpush1.bf16.msra.mxu0 0
    %4723 = vmatprep.subr.bf16.mxu0 0
    %4724 = vmatpush1.bf16.msra.mxu0 0
    %4725 = vmatprep.subr.bf16.mxu0 0
    %4726 = vmatpush1.bf16.msra.mxu0 0
    %4727 = vmatprep.subr.bf16.mxu0 0
    %4728 = vmatpush1.bf16.msra.mxu0 0
    %4729 = vmatprep.subr.bf16.mxu0 0
    %4730 = vmatpush1.bf16.msra.mxu0 0
    %4731 = vmatprep.subr.bf16.mxu0 0
    %4732 = vmatpush1.bf16.msra.mxu0 0
    %4733 = vmatprep.mubr.bf16.mxu0 0
    %4734 = vmatmul.mubr.bf16.gmra.mrb[0].mxu0 %v4693
    %v4735 = vpop.f32.mrb[0].mxu0
    %v4736 = vadd.f32 0.0, %v4735
    %v4737 = vpop.f32.mrb[0].mxu0
    %v4738 = vadd.f32 0.0, %v4737
    %v4739 = vpop.f32.mrb[0].mxu0
    %v4740 = vpop.f32.mrb[0].mxu0
    %4741 = vdwg.mxu0
    %v4742 = vadd.f32 %v3686, %v4736
    %v4743 = vadd.f32 %v3687, %v4738
    %s4744 = scalar_lea.vmem %s5, 2808
    %v4745 = vld [vmem:[%s4744] sm:$0xff]
    %v4746 = vld [vmem:[%s4744 + $0x8] sm:$0xff]
    %v4747 = vld [vmem:[%s4744 + $0x10] sm:$0xff]
    %v4748 = vld [vmem:[%s4744 + $0x18] sm:$0xff]
    %v4749 = vld [vmem:[%s4744 + $0x20] sm:$0xff]
    %v4750 = vld [vmem:[%s4744 + $0x28] sm:$0xff]
    %v4751 = vld [vmem:[%s4744 + $0x30] sm:$0xff]
    %v4752 = vld [vmem:[%s4744 + $0x38] sm:$0xff]
    %v4753 = vld [vmem:[%s4744 + $0x40] sm:$0xff]
    %v4754 = vld [vmem:[%s4744 + $0x48] sm:$0xff]
    %v4755 = vld [vmem:[%s4744 + $0x50] sm:$0xff]
    %v4756 = vld [vmem:[%s4744 + $0x58] sm:$0xff]
    %v4757 = vld [vmem:[%s4744 + $0x60] sm:$0x11]
    %v4758 = vrot.slane %v3436, 5
    %v4772 = vunpack.c.l.b16 %v4745
    %v4773 = vunpack.c.h.b16 %v4745
    %v4774 = vunpack.c.l.b16 %v4746
    %v4775 = vunpack.c.h.b16 %v4746
    %v4776 = vunpack.c.l.b16 %v4747
    %v4777 = vunpack.c.h.b16 %v4747
    %v4778 = vunpack.c.l.b16 %v4748
    %v4779 = vunpack.c.h.b16 %v4748
    %v4780 = vunpack.c.l.b16 %v4749
    %v4781 = vunpack.c.h.b16 %v4749
    %v4782 = vunpack.c.l.b16 %v4750
    %v4783 = vunpack.c.h.b16 %v4750
    %v4784 = vunpack.c.l.b16 %v4751
    %v4785 = vunpack.c.h.b16 %v4751
    %v4786 = vunpack.c.l.b16 %v4752
    %v4787 = vunpack.c.h.b16 %v4752
    %v4788 = vunpack.c.l.b16 %v4753
    %v4789 = vunpack.c.h.b16 %v4753
    %v4790 = vunpack.c.l.b16 %v4754
    %v4791 = vunpack.c.h.b16 %v4754
    %v4792 = vunpack.c.l.b16 %v4755
    %v4793 = vunpack.c.h.b16 %v4755
    %v4794 = vunpack.c.l.b16 %v4756
    %v4795 = vunpack.c.h.b16 %v4756
    %v4796 = vunpack.c.l.b16 %v4757
    %v4797 = vunpack.c.h.b16 %v4757
    %v4798 = vpack.c.b16 %v4774, %v4772
    %v4799 = vpack.c.b16 %v4775, %v4773
    %v4800 = vpack.c.b16 %v4778, %v4776
    %v4801 = vpack.c.b16 %v4779, %v4777
    %v4802 = vpack.c.b16 %v4782, %v4780
    %v4803 = vpack.c.b16 %v4783, %v4781
    %v4804 = vpack.c.b16 %v4786, %v4784
    %v4805 = vpack.c.b16 %v4787, %v4785
    %v4806 = vpack.c.b16 %v4790, %v4788
    %v4807 = vpack.c.b16 %v4791, %v4789
    %v4808 = vpack.c.b16 %v4794, %v4792
    %v4809 = vpack.c.b16 %v4795, %v4793
    %v4810 = vpack.c.b16 %v4796, %v4796
    %v4811 = vpack.c.b16 %v4797, %v4797
    %v4825 = vsel %vm1399, %v4758, 0
    %v4828 = vand.u32 %v4810, %v1405
    %v4831 = vand.u32 %v4811, %v1405
    %4833 = vmatprep.subr.bf16.mxu0 %v4799
    %4834 = vmatpush1.bf16.msra.mxu0 %v4798
    %4835 = vmatprep.subr.bf16.mxu0 %v4801
    %4836 = vmatpush1.bf16.msra.mxu0 %v4800
    %4837 = vmatprep.subr.bf16.mxu0 %v4803
    %4838 = vmatpush1.bf16.msra.mxu0 %v4802
    %4839 = vmatprep.subr.bf16.mxu0 %v4805
    %4840 = vmatpush1.bf16.msra.mxu0 %v4804
    %4841 = vmatprep.subr.bf16.mxu0 %v4807
    %4842 = vmatpush1.bf16.msra.mxu0 %v4806
    %4843 = vmatprep.subr.bf16.mxu0 %v4809
    %4844 = vmatpush1.bf16.msra.mxu0 %v4808
    %4845 = vmatprep.subr.bf16.mxu0 %v4831
    %4846 = vmatpush1.bf16.msra.mxu0 %v4828
    %4847 = vmatprep.subr.bf16.mxu0 0
    %4848 = vmatpush1.bf16.msra.mxu0 0
    %4849 = vmatprep.subr.bf16.mxu0 0
    %4850 = vmatpush1.bf16.msra.mxu0 0
    %4851 = vmatprep.subr.bf16.mxu0 0
    %4852 = vmatpush1.bf16.msra.mxu0 0
    %4853 = vmatprep.subr.bf16.mxu0 0
    %4854 = vmatpush1.bf16.msra.mxu0 0
    %4855 = vmatprep.subr.bf16.mxu0 0
    %4856 = vmatpush1.bf16.msra.mxu0 0
    %4857 = vmatprep.subr.bf16.mxu0 0
    %4858 = vmatpush1.bf16.msra.mxu0 0
    %4859 = vmatprep.subr.bf16.mxu0 0
    %4860 = vmatpush1.bf16.msra.mxu0 0
    %4861 = vmatprep.subr.bf16.mxu0 0
    %4862 = vmatpush1.bf16.msra.mxu0 0
    %4863 = vmatprep.subr.bf16.mxu0 0
    %4864 = vmatpush1.bf16.msra.mxu0 0
    %4865 = vmatprep.mubr.bf16.mxu0 0
    %4866 = vmatmul.mubr.bf16.gmra.mrb[0].mxu0 %v4825
    %v4867 = vpop.f32.mrb[0].mxu0
    %v4868 = vadd.f32 0.0, %v4867
    %v4869 = vpop.f32.mrb[0].mxu0
    %v4870 = vadd.f32 0.0, %v4869
    %v4871 = vpop.f32.mrb[0].mxu0
    %v4872 = vpop.f32.mrb[0].mxu0
    %4873 = vdwg.mxu0
    %v4874 = vadd.f32 %v3818, %v4868
    %v4875 = vadd.f32 %v3819, %v4870
    %s4876 = scalar_lea.vmem %s5, 2912
    %v4877 = vld [vmem:[%s4876] sm:$0xff]
    %v4878 = vld [vmem:[%s4876 + $0x8] sm:$0xff]
    %v4879 = vld [vmem:[%s4876 + $0x10] sm:$0xff]
    %v4880 = vld [vmem:[%s4876 + $0x18] sm:$0xff]
    %v4881 = vld [vmem:[%s4876 + $0x20] sm:$0xff]
    %v4882 = vld [vmem:[%s4876 + $0x28] sm:$0xff]
    %v4883 = vld [vmem:[%s4876 + $0x30] sm:$0xff]
    %v4884 = vld [vmem:[%s4876 + $0x38] sm:$0xff]
    %v4885 = vld [vmem:[%s4876 + $0x40] sm:$0xff]
    %v4886 = vld [vmem:[%s4876 + $0x48] sm:$0xff]
    %v4887 = vld [vmem:[%s4876 + $0x50] sm:$0xff]
    %v4888 = vld [vmem:[%s4876 + $0x58] sm:$0xff]
    %v4889 = vld [vmem:[%s4876 + $0x60] sm:$0x11]
    %v4890 = vrot.slane %v1206, 6
    %v4904 = vunpack.c.l.b16 %v4877
    %v4905 = vunpack.c.h.b16 %v4877
    %v4906 = vunpack.c.l.b16 %v4878
    %v4907 = vunpack.c.h.b16 %v4878
    %v4908 = vunpack.c.l.b16 %v4879
    %v4909 = vunpack.c.h.b16 %v4879
    %v4910 = vunpack.c.l.b16 %v4880
    %v4911 = vunpack.c.h.b16 %v4880
    %v4912 = vunpack.c.l.b16 %v4881
    %v4913 = vunpack.c.h.b16 %v4881
    %v4914 = vunpack.c.l.b16 %v4882
    %v4915 = vunpack.c.h.b16 %v4882
    %v4916 = vunpack.c.l.b16 %v4883
    %v4917 = vunpack.c.h.b16 %v4883
    %v4918 = vunpack.c.l.b16 %v4884
    %v4919 = vunpack.c.h.b16 %v4884
    %v4920 = vunpack.c.l.b16 %v4885
    %v4921 = vunpack.c.h.b16 %v4885
    %v4922 = vunpack.c.l.b16 %v4886
    %v4923 = vunpack.c.h.b16 %v4886
    %v4924 = vunpack.c.l.b16 %v4887
    %v4925 = vunpack.c.h.b16 %v4887
    %v4926 = vunpack.c.l.b16 %v4888
    %v4927 = vunpack.c.h.b16 %v4888
    %v4928 = vunpack.c.l.b16 %v4889
    %v4929 = vunpack.c.h.b16 %v4889
    %v4930 = vpack.c.b16 %v4906, %v4904
    %v4931 = vpack.c.b16 %v4907, %v4905
    %v4932 = vpack.c.b16 %v4910, %v4908
    %v4933 = vpack.c.b16 %v4911, %v4909
    %v4934 = vpack.c.b16 %v4914, %v4912
    %v4935 = vpack.c.b16 %v4915, %v4913
    %v4936 = vpack.c.b16 %v4918, %v4916
    %v4937 = vpack.c.b16 %v4919, %v4917
    %v4938 = vpack.c.b16 %v4922, %v4920
    %v4939 = vpack.c.b16 %v4923, %v4921
    %v4940 = vpack.c.b16 %v4926, %v4924
    %v4941 = vpack.c.b16 %v4927, %v4925
    %v4942 = vpack.c.b16 %v4928, %v4928
    %v4943 = vpack.c.b16 %v4929, %v4929
    %v4957 = vsel %vm1399, %v4890, 0
    %v4960 = vand.u32 %v4942, %v1405
    %v4963 = vand.u32 %v4943, %v1405
    %4965 = vmatprep.subr.bf16.mxu0 %v4931
    %4966 = vmatpush1.bf16.msra.mxu0 %v4930
    %4967 = vmatprep.subr.bf16.mxu0 %v4933
    %4968 = vmatpush1.bf16.msra.mxu0 %v4932
    %4969 = vmatprep.subr.bf16.mxu0 %v4935
    %4970 = vmatpush1.bf16.msra.mxu0 %v4934
    %4971 = vmatprep.subr.bf16.mxu0 %v4937
    %4972 = vmatpush1.bf16.msra.mxu0 %v4936
    %4973 = vmatprep.subr.bf16.mxu0 %v4939
    %4974 = vmatpush1.bf16.msra.mxu0 %v4938
    %4975 = vmatprep.subr.bf16.mxu0 %v4941
    %4976 = vmatpush1.bf16.msra.mxu0 %v4940
    %4977 = vmatprep.subr.bf16.mxu0 %v4963
    %4978 = vmatpush1.bf16.msra.mxu0 %v4960
    %4979 = vmatprep.subr.bf16.mxu0 0
    %4980 = vmatpush1.bf16.msra.mxu0 0
    %4981 = vmatprep.subr.bf16.mxu0 0
    %4982 = vmatpush1.bf16.msra.mxu0 0
    %4983 = vmatprep.subr.bf16.mxu0 0
    %4984 = vmatpush1.bf16.msra.mxu0 0
    %4985 = vmatprep.subr.bf16.mxu0 0
    %4986 = vmatpush1.bf16.msra.mxu0 0
    %4987 = vmatprep.subr.bf16.mxu0 0
    %4988 = vmatpush1.bf16.msra.mxu0 0
    %4989 = vmatprep.subr.bf16.mxu0 0
    %4990 = vmatpush1.bf16.msra.mxu0 0
    %4991 = vmatprep.subr.bf16.mxu0 0
    %4992 = vmatpush1.bf16.msra.mxu0 0
    %4993 = vmatprep.subr.bf16.mxu0 0
    %4994 = vmatpush1.bf16.msra.mxu0 0
    %4995 = vmatprep.subr.bf16.mxu0 0
    %4996 = vmatpush1.bf16.msra.mxu0 0
    %4997 = vmatprep.mubr.bf16.mxu0 0
    %4998 = vmatmul.mubr.bf16.gmra.mrb[0].mxu0 %v4957
    %v4999 = vpop.f32.mrb[0].mxu0
    %v5000 = vadd.f32 0.0, %v4999
    %v5001 = vpop.f32.mrb[0].mxu0
    %v5002 = vadd.f32 0.0, %v5001
    %v5003 = vpop.f32.mrb[0].mxu0
    %v5004 = vpop.f32.mrb[0].mxu0
    %5005 = vdwg.mxu0
    %v5006 = vadd.f32 %v3950, %v5000
    %v5007 = vadd.f32 %v3951, %v5002
    %s5008 = scalar_lea.vmem %s5, 3016
    %v5009 = vld [vmem:[%s5008] sm:$0xff]
    %v5010 = vld [vmem:[%s5008 + $0x8] sm:$0xff]
    %v5011 = vld [vmem:[%s5008 + $0x10] sm:$0xff]
    %v5012 = vld [vmem:[%s5008 + $0x18] sm:$0xff]
    %v5013 = vld [vmem:[%s5008 + $0x20] sm:$0xff]
    %v5014 = vld [vmem:[%s5008 + $0x28] sm:$0xff]
    %v5015 = vld [vmem:[%s5008 + $0x30] sm:$0xff]
    %v5016 = vld [vmem:[%s5008 + $0x38] sm:$0xff]
    %v5017 = vld [vmem:[%s5008 + $0x40] sm:$0xff]
    %v5018 = vld [vmem:[%s5008 + $0x48] sm:$0xff]
    %v5019 = vld [vmem:[%s5008 + $0x50] sm:$0xff]
    %v5020 = vld [vmem:[%s5008 + $0x58] sm:$0xff]
    %v5021 = vld [vmem:[%s5008 + $0x60] sm:$0x11]
    %v5022 = vrot.slane %v3436, 6
    %v5036 = vunpack.c.l.b16 %v5009
    %v5037 = vunpack.c.h.b16 %v5009
    %v5038 = vunpack.c.l.b16 %v5010
    %v5039 = vunpack.c.h.b16 %v5010
    %v5040 = vunpack.c.l.b16 %v5011
    %v5041 = vunpack.c.h.b16 %v5011
    %v5042 = vunpack.c.l.b16 %v5012
    %v5043 = vunpack.c.h.b16 %v5012
    %v5044 = vunpack.c.l.b16 %v5013
    %v5045 = vunpack.c.h.b16 %v5013
    %v5046 = vunpack.c.l.b16 %v5014
    %v5047 = vunpack.c.h.b16 %v5014
    %v5048 = vunpack.c.l.b16 %v5015
    %v5049 = vunpack.c.h.b16 %v5015
    %v5050 = vunpack.c.l.b16 %v5016
    %v5051 = vunpack.c.h.b16 %v5016
    %v5052 = vunpack.c.l.b16 %v5017
    %v5053 = vunpack.c.h.b16 %v5017
    %v5054 = vunpack.c.l.b16 %v5018
    %v5055 = vunpack.c.h.b16 %v5018
    %v5056 = vunpack.c.l.b16 %v5019
    %v5057 = vunpack.c.h.b16 %v5019
    %v5058 = vunpack.c.l.b16 %v5020
    %v5059 = vunpack.c.h.b16 %v5020
    %v5060 = vunpack.c.l.b16 %v5021
    %v5061 = vunpack.c.h.b16 %v5021
    %v5062 = vpack.c.b16 %v5038, %v5036
    %v5063 = vpack.c.b16 %v5039, %v5037
    %v5064 = vpack.c.b16 %v5042, %v5040
    %v5065 = vpack.c.b16 %v5043, %v5041
    %v5066 = vpack.c.b16 %v5046, %v5044
    %v5067 = vpack.c.b16 %v5047, %v5045
    %v5068 = vpack.c.b16 %v5050, %v5048
    %v5069 = vpack.c.b16 %v5051, %v5049
    %v5070 = vpack.c.b16 %v5054, %v5052
    %v5071 = vpack.c.b16 %v5055, %v5053
    %v5072 = vpack.c.b16 %v5058, %v5056
    %v5073 = vpack.c.b16 %v5059, %v5057
    %v5074 = vpack.c.b16 %v5060, %v5060
    %v5075 = vpack.c.b16 %v5061, %v5061
    %v5089 = vsel %vm1399, %v5022, 0
    %v5092 = vand.u32 %v5074, %v1405
    %v5095 = vand.u32 %v5075, %v1405
    %5097 = vmatprep.subr.bf16.mxu0 %v5063
    %5098 = vmatpush1.bf16.msra.mxu0 %v5062
    %5099 = vmatprep.subr.bf16.mxu0 %v5065
    %5100 = vmatpush1.bf16.msra.mxu0 %v5064
    %5101 = vmatprep.subr.bf16.mxu0 %v5067
    %5102 = vmatpush1.bf16.msra.mxu0 %v5066
    %5103 = vmatprep.subr.bf16.mxu0 %v5069
    %5104 = vmatpush1.bf16.msra.mxu0 %v5068
    %5105 = vmatprep.subr.bf16.mxu0 %v5071
    %5106 = vmatpush1.bf16.msra.mxu0 %v5070
    %5107 = vmatprep.subr.bf16.mxu0 %v5073
    %5108 = vmatpush1.bf16.msra.mxu0 %v5072
    %5109 = vmatprep.subr.bf16.mxu0 %v5095
    %5110 = vmatpush1.bf16.msra.mxu0 %v5092
    %5111 = vmatprep.subr.bf16.mxu0 0
    %5112 = vmatpush1.bf16.msra.mxu0 0
    %5113 = vmatprep.subr.bf16.mxu0 0
    %5114 = vmatpush1.bf16.msra.mxu0 0
    %5115 = vmatprep.subr.bf16.mxu0 0
    %5116 = vmatpush1.bf16.msra.mxu0 0
    %5117 = vmatprep.subr.bf16.mxu0 0
    %5118 = vmatpush1.bf16.msra.mxu0 0
    %5119 = vmatprep.subr.bf16.mxu0 0
    %5120 = vmatpush1.bf16.msra.mxu0 0
    %5121 = vmatprep.subr.bf16.mxu0 0
    %5122 = vmatpush1.bf16.msra.mxu0 0
    %5123 = vmatprep.subr.bf16.mxu0 0
    %5124 = vmatpush1.bf16.msra.mxu0 0
    %5125 = vmatprep.subr.bf16.mxu0 0
    %5126 = vmatpush1.bf16.msra.mxu0 0
    %5127 = vmatprep.subr.bf16.mxu0 0
    %5128 = vmatpush1.bf16.msra.mxu0 0
    %5129 = vmatprep.mubr.bf16.mxu0 0
    %5130 = vmatmul.mubr.bf16.gmra.mrb[0].mxu0 %v5089
    %v5131 = vpop.f32.mrb[0].mxu0
    %v5132 = vadd.f32 0.0, %v5131
    %v5133 = vpop.f32.mrb[0].mxu0
    %v5134 = vadd.f32 0.0, %v5133
    %v5135 = vpop.f32.mrb[0].mxu0
    %v5136 = vpop.f32.mrb[0].mxu0
    %5137 = vdwg.mxu0
    %v5138 = vadd.f32 %v4082, %v5132
    %v5139 = vadd.f32 %v4083, %v5134
    %s5140 = scalar_lea.vmem %s5, 3120
    %v5141 = vld [vmem:[%s5140] sm:$0xff]
    %v5142 = vld [vmem:[%s5140 + $0x8] sm:$0xff]
    %v5143 = vld [vmem:[%s5140 + $0x10] sm:$0xff]
    %v5144 = vld [vmem:[%s5140 + $0x18] sm:$0xff]
    %v5145 = vld [vmem:[%s5140 + $0x20] sm:$0xff]
    %v5146 = vld [vmem:[%s5140 + $0x28] sm:$0xff]
    %v5147 = vld [vmem:[%s5140 + $0x30] sm:$0xff]
    %v5148 = vld [vmem:[%s5140 + $0x38] sm:$0xff]
    %v5149 = vld [vmem:[%s5140 + $0x40] sm:$0xff]
    %v5150 = vld [vmem:[%s5140 + $0x48] sm:$0xff]
    %v5151 = vld [vmem:[%s5140 + $0x50] sm:$0xff]
    %v5152 = vld [vmem:[%s5140 + $0x58] sm:$0xff]
    %v5153 = vld [vmem:[%s5140 + $0x60] sm:$0x11]
    %v5154 = vrot.slane %v1206, 7
    %v5168 = vunpack.c.l.b16 %v5141
    %v5169 = vunpack.c.h.b16 %v5141
    %v5170 = vunpack.c.l.b16 %v5142
    %v5171 = vunpack.c.h.b16 %v5142
    %v5172 = vunpack.c.l.b16 %v5143
    %v5173 = vunpack.c.h.b16 %v5143
    %v5174 = vunpack.c.l.b16 %v5144
    %v5175 = vunpack.c.h.b16 %v5144
    %v5176 = vunpack.c.l.b16 %v5145
    %v5177 = vunpack.c.h.b16 %v5145
    %v5178 = vunpack.c.l.b16 %v5146
    %v5179 = vunpack.c.h.b16 %v5146
    %v5180 = vunpack.c.l.b16 %v5147
    %v5181 = vunpack.c.h.b16 %v5147
    %v5182 = vunpack.c.l.b16 %v5148
    %v5183 = vunpack.c.h.b16 %v5148
    %v5184 = vunpack.c.l.b16 %v5149
    %v5185 = vunpack.c.h.b16 %v5149
    %v5186 = vunpack.c.l.b16 %v5150
    %v5187 = vunpack.c.h.b16 %v5150
    %v5188 = vunpack.c.l.b16 %v5151
    %v5189 = vunpack.c.h.b16 %v5151
    %v5190 = vunpack.c.l.b16 %v5152
    %v5191 = vunpack.c.h.b16 %v5152
    %v5192 = vunpack.c.l.b16 %v5153
    %v5193 = vunpack.c.h.b16 %v5153
    %v5194 = vpack.c.b16 %v5170, %v5168
    %v5195 = vpack.c.b16 %v5171, %v5169
    %v5196 = vpack.c.b16 %v5174, %v5172
    %v5197 = vpack.c.b16 %v5175, %v5173
    %v5198 = vpack.c.b16 %v5178, %v5176
    %v5199 = vpack.c.b16 %v5179, %v5177
    %v5200 = vpack.c.b16 %v5182, %v5180
    %v5201 = vpack.c.b16 %v5183, %v5181
    %v5202 = vpack.c.b16 %v5186, %v5184
    %v5203 = vpack.c.b16 %v5187, %v5185
    %v5204 = vpack.c.b16 %v5190, %v5188
    %v5205 = vpack.c.b16 %v5191, %v5189
    %v5206 = vpack.c.b16 %v5192, %v5192
    %v5207 = vpack.c.b16 %v5193, %v5193
    %v5221 = vsel %vm1399, %v5154, 0
    %v5224 = vand.u32 %v5206, %v1405
    %v5227 = vand.u32 %v5207, %v1405
    %5229 = vmatprep.subr.bf16.mxu0 %v5195
    %5230 = vmatpush1.bf16.msra.mxu0 %v5194
    %5231 = vmatprep.subr.bf16.mxu0 %v5197
    %5232 = vmatpush1.bf16.msra.mxu0 %v5196
    %5233 = vmatprep.subr.bf16.mxu0 %v5199
    %5234 = vmatpush1.bf16.msra.mxu0 %v5198
    %5235 = vmatprep.subr.bf16.mxu0 %v5201
    %5236 = vmatpush1.bf16.msra.mxu0 %v5200
    %5237 = vmatprep.subr.bf16.mxu0 %v5203
    %5238 = vmatpush1.bf16.msra.mxu0 %v5202
    %5239 = vmatprep.subr.bf16.mxu0 %v5205
    %5240 = vmatpush1.bf16.msra.mxu0 %v5204
    %5241 = vmatprep.subr.bf16.mxu0 %v5227
    %5242 = vmatpush1.bf16.msra.mxu0 %v5224
    %5243 = vmatprep.subr.bf16.mxu0 0
    %5244 = vmatpush1.bf16.msra.mxu0 0
    %5245 = vmatprep.subr.bf16.mxu0 0
    %5246 = vmatpush1.bf16.msra.mxu0 0
    %5247 = vmatprep.subr.bf16.mxu0 0
    %5248 = vmatpush1.bf16.msra.mxu0 0
    %5249 = vmatprep.subr.bf16.mxu0 0
    %5250 = vmatpush1.bf16.msra.mxu0 0
    %5251 = vmatprep.subr.bf16.mxu0 0
    %5252 = vmatpush1.bf16.msra.mxu0 0
    %5253 = vmatprep.subr.bf16.mxu0 0
    %5254 = vmatpush1.bf16.msra.mxu0 0
    %5255 = vmatprep.subr.bf16.mxu0 0
    %5256 = vmatpush1.bf16.msra.mxu0 0
    %5257 = vmatprep.subr.bf16.mxu0 0
    %5258 = vmatpush1.bf16.msra.mxu0 0
    %5259 = vmatprep.subr.bf16.mxu0 0
    %5260 = vmatpush1.bf16.msra.mxu0 0
    %5261 = vmatprep.mubr.bf16.mxu0 0
    %5262 = vmatmul.mubr.bf16.gmra.mrb[0].mxu0 %v5221
    %v5263 = vpop.f32.mrb[0].mxu0
    %v5264 = vadd.f32 0.0, %v5263
    %v5265 = vpop.f32.mrb[0].mxu0
    %v5266 = vadd.f32 0.0, %v5265
    %v5267 = vpop.f32.mrb[0].mxu0
    %v5268 = vpop.f32.mrb[0].mxu0
    %5269 = vdwg.mxu0
    %v5270 = vadd.f32 %v4214, %v5264
    %v5271 = vadd.f32 %v4215, %v5266
    %s5272 = scalar_lea.vmem %s5, 3224
    %v5273 = vld [vmem:[%s5272] sm:$0xff]
    %v5274 = vld [vmem:[%s5272 + $0x8] sm:$0xff]
    %v5275 = vld [vmem:[%s5272 + $0x10] sm:$0xff]
    %v5276 = vld [vmem:[%s5272 + $0x18] sm:$0xff]
    %v5277 = vld [vmem:[%s5272 + $0x20] sm:$0xff]
    %v5278 = vld [vmem:[%s5272 + $0x28] sm:$0xff]
    %v5279 = vld [vmem:[%s5272 + $0x30] sm:$0xff]
    %v5280 = vld [vmem:[%s5272 + $0x38] sm:$0xff]
    %v5281 = vld [vmem:[%s5272 + $0x40] sm:$0xff]
    %v5282 = vld [vmem:[%s5272 + $0x48] sm:$0xff]
    %v5283 = vld [vmem:[%s5272 + $0x50] sm:$0xff]
    %v5284 = vld [vmem:[%s5272 + $0x58] sm:$0xff]
    %v5285 = vld [vmem:[%s5272 + $0x60] sm:$0x11]
    %v5286 = vrot.slane %v3436, 7
    %v5300 = vunpack.c.l.b16 %v5273
    %v5301 = vunpack.c.h.b16 %v5273
    %v5302 = vunpack.c.l.b16 %v5274
    %v5303 = vunpack.c.h.b16 %v5274
    %v5304 = vunpack.c.l.b16 %v5275
    %v5305 = vunpack.c.h.b16 %v5275
    %v5306 = vunpack.c.l.b16 %v5276
    %v5307 = vunpack.c.h.b16 %v5276
    %v5308 = vunpack.c.l.b16 %v5277
    %v5309 = vunpack.c.h.b16 %v5277
    %v5310 = vunpack.c.l.b16 %v5278
    %v5311 = vunpack.c.h.b16 %v5278
    %v5312 = vunpack.c.l.b16 %v5279
    %v5313 = vunpack.c.h.b16 %v5279
    %v5314 = vunpack.c.l.b16 %v5280
    %v5315 = vunpack.c.h.b16 %v5280
    %v5316 = vunpack.c.l.b16 %v5281
    %v5317 = vunpack.c.h.b16 %v5281
    %v5318 = vunpack.c.l.b16 %v5282
    %v5319 = vunpack.c.h.b16 %v5282
    %v5320 = vunpack.c.l.b16 %v5283
    %v5321 = vunpack.c.h.b16 %v5283
    %v5322 = vunpack.c.l.b16 %v5284
    %v5323 = vunpack.c.h.b16 %v5284
    %v5324 = vunpack.c.l.b16 %v5285
    %v5325 = vunpack.c.h.b16 %v5285
    %v5326 = vpack.c.b16 %v5302, %v5300
    %v5327 = vpack.c.b16 %v5303, %v5301
    %v5328 = vpack.c.b16 %v5306, %v5304
    %v5329 = vpack.c.b16 %v5307, %v5305
    %v5330 = vpack.c.b16 %v5310, %v5308
    %v5331 = vpack.c.b16 %v5311, %v5309
    %v5332 = vpack.c.b16 %v5314, %v5312
    %v5333 = vpack.c.b16 %v5315, %v5313
    %v5334 = vpack.c.b16 %v5318, %v5316
    %v5335 = vpack.c.b16 %v5319, %v5317
    %v5336 = vpack.c.b16 %v5322, %v5320
    %v5337 = vpack.c.b16 %v5323, %v5321
    %v5338 = vpack.c.b16 %v5324, %v5324
    %v5339 = vpack.c.b16 %v5325, %v5325
    %v5353 = vsel %vm1399, %v5286, 0
    %v5356 = vand.u32 %v5338, %v1405
    %v5359 = vand.u32 %v5339, %v1405
    %5361 = vmatprep.subr.bf16.mxu0 %v5327
    %5362 = vmatpush1.bf16.msra.mxu0 %v5326
    %5363 = vmatprep.subr.bf16.mxu0 %v5329
    %5364 = vmatpush1.bf16.msra.mxu0 %v5328
    %5365 = vmatprep.subr.bf16.mxu0 %v5331
    %5366 = vmatpush1.bf16.msra.mxu0 %v5330
    %5367 = vmatprep.subr.bf16.mxu0 %v5333
    %5368 = vmatpush1.bf16.msra.mxu0 %v5332
    %5369 = vmatprep.subr.bf16.mxu0 %v5335
    %5370 = vmatpush1.bf16.msra.mxu0 %v5334
    %5371 = vmatprep.subr.bf16.mxu0 %v5337
    %5372 = vmatpush1.bf16.msra.mxu0 %v5336
    %5373 = vmatprep.subr.bf16.mxu0 %v5359
    %5374 = vmatpush1.bf16.msra.mxu0 %v5356
    %5375 = vmatprep.subr.bf16.mxu0 0
    %5376 = vmatpush1.bf16.msra.mxu0 0
    %5377 = vmatprep.subr.bf16.mxu0 0
    %5378 = vmatpush1.bf16.msra.mxu0 0
    %5379 = vmatprep.subr.bf16.mxu0 0
    %5380 = vmatpush1.bf16.msra.mxu0 0
    %5381 = vmatprep.subr.bf16.mxu0 0
    %5382 = vmatpush1.bf16.msra.mxu0 0
    %5383 = vmatprep.subr.bf16.mxu0 0
    %5384 = vmatpush1.bf16.msra.mxu0 0
    %5385 = vmatprep.subr.bf16.mxu0 0
    %5386 = vmatpush1.bf16.msra.mxu0 0
    %5387 = vmatprep.subr.bf16.mxu0 0
    %5388 = vmatpush1.bf16.msra.mxu0 0
    %5389 = vmatprep.subr.bf16.mxu0 0
    %5390 = vmatpush1.bf16.msra.mxu0 0
    %5391 = vmatprep.subr.bf16.mxu0 0
    %5392 = vmatpush1.bf16.msra.mxu0 0
    %5393 = vmatprep.mubr.bf16.mxu0 0
    %5394 = vmatmul.mubr.bf16.gmra.mrb[0].mxu0 %v5353
    %v5395 = vpop.f32.mrb[0].mxu0
    %v5396 = vadd.f32 0.0, %v5395
    %v5397 = vpop.f32.mrb[0].mxu0
    %v5398 = vadd.f32 0.0, %v5397
    %v5399 = vpop.f32.mrb[0].mxu0
    %v5400 = vpop.f32.mrb[0].mxu0
    %5401 = vdwg.mxu0
    %v5402 = vadd.f32 %v4346, %v5396
    %v5403 = vadd.f32 %v4347, %v5398
    %v5404 = vadd.f32 %v4478, %v4610
    %v5405 = vadd.f32 %v4479, %v4611
    %v5406 = vadd.f32 %v4742, %v4874
    %v5407 = vadd.f32 %v4743, %v4875
    %v5408 = vadd.f32 %v5006, %v5138
    %v5409 = vadd.f32 %v5007, %v5139
    %v5410 = vadd.f32 %v5270, %v5402
    %v5411 = vadd.f32 %v5271, %v5403
    %v5412 = vadd.f32 %v5404, %v5406
    %v5413 = vadd.f32 %v5405, %v5407
    %v5414 = vadd.f32 %v5408, %v5410
    %v5415 = vadd.f32 %v5409, %v5411
    %v5416 = vadd.f32 %v5412, %v5414
    %v5417 = vadd.f32 %v5413, %v5415
    %v5418 = vld [vmem:[%s6] sm:$0x3]
    %v5420 = vlaneseq
    %v5421 = vshrl.u32 %v5420, 7
    %v5422 = vsub.s32 0, %v5421
    %v5423 = vrot.slane %v5418, %v5422
    %v5424 = vlaneseq
    %v5425 = vshrl.u32 %v5424, 7
    %v5426 = vsub.s32 1, %v5425
    %v5427 = vrot.slane %v5418, %v5426
    %v5430 = vadd.f32 %v5416, %v5423
    %v5431 = vadd.f32 %v5417, %v5427
    %v5432 = vmax.f32 %v5430, 0.0
    %v5433 = vmax.f32 %v5431, 0.0
    %v5434 = vpack.c.bf16 %v5432, %v5432
    %v5435 = vpack.c.bf16 %v5433, %v5433
    %v5436 = vld [vmem:[%s7] sm:$0xf]
    %v5437 = vld [vmem:[%s7 + $0x4] sm:$0xf]
    %v5438 = vld [vmem:[%s7 + $0x8] sm:$0xf]
    %v5439 = vld [vmem:[%s7 + $0xc] sm:$0xf]
    %v5440 = vld [vmem:[%s7 + $0x10] sm:$0xf]
    %v5441 = vld [vmem:[%s7 + $0x14] sm:$0xf]
    %v5442 = vld [vmem:[%s7 + $0x18] sm:$0xf]
    %v5443 = vld [vmem:[%s7 + $0x1c] sm:$0xf]
    %v5444 = vld [vmem:[%s7 + $0x20] sm:$0xf]
    %v5445 = vld [vmem:[%s7 + $0x24] sm:$0xf]
    %v5446 = vld [vmem:[%s7 + $0x28] sm:$0xf]
    %v5447 = vld [vmem:[%s7 + $0x2c] sm:$0xf]
    %v5448 = vld [vmem:[%s7 + $0x30] sm:$0xf]
    %v5449 = vld [vmem:[%s7 + $0x34] sm:$0xf]
    %v5450 = vld [vmem:[%s7 + $0x38] sm:$0xf]
    %v5451 = vld [vmem:[%s7 + $0x3c] sm:$0xf]
    %v5452 = vld [vmem:[%s7 + $0x40] sm:$0xf]
    %v5453 = vld [vmem:[%s7 + $0x44] sm:$0xf]
    %v5454 = vld [vmem:[%s7 + $0x48] sm:$0xf]
    %v5455 = vld [vmem:[%s7 + $0x4c] sm:$0xf]
    %v5456 = vld [vmem:[%s7 + $0x50] sm:$0xf]
    %v5457 = vld [vmem:[%s7 + $0x54] sm:$0xf]
    %v5458 = vld [vmem:[%s7 + $0x58] sm:$0xf]
    %v5459 = vld [vmem:[%s7 + $0x5c] sm:$0xf]
    %v5460 = vld [vmem:[%s7 + $0x60] sm:$0xf]
    %v5461 = vld [vmem:[%s7 + $0x64] sm:$0xf]
    %v5462 = vld [vmem:[%s7 + $0x68] sm:$0xf]
    %v5463 = vld [vmem:[%s7 + $0x6c] sm:$0xf]
    %v5464 = vld [vmem:[%s7 + $0x70] sm:$0xf]
    %v5465 = vld [vmem:[%s7 + $0x74] sm:$0xf]
    %v5466 = vld [vmem:[%s7 + $0x78] sm:$0xf]
    %v5467 = vld [vmem:[%s7 + $0x7c] sm:$0xf]
    %v5468 = vld [vmem:[%s8] sm:$0x1]
    %v5501 = vunpack.c.l.b16 %v5436
    %v5502 = vunpack.c.l.b16 %v5437
    %v5503 = vunpack.c.l.b16 %v5438
    %v5504 = vunpack.c.l.b16 %v5439
    %v5505 = vunpack.c.l.b16 %v5440
    %v5506 = vunpack.c.l.b16 %v5441
    %v5507 = vunpack.c.l.b16 %v5442
    %v5508 = vunpack.c.l.b16 %v5443
    %v5509 = vunpack.c.l.b16 %v5444
    %v5510 = vunpack.c.l.b16 %v5445
    %v5511 = vunpack.c.l.b16 %v5446
    %v5512 = vunpack.c.l.b16 %v5447
    %v5513 = vunpack.c.l.b16 %v5448
    %v5514 = vunpack.c.l.b16 %v5449
    %v5515 = vunpack.c.l.b16 %v5450
    %v5516 = vunpack.c.l.b16 %v5451
    %v5517 = vunpack.c.l.b16 %v5452
    %v5518 = vunpack.c.l.b16 %v5453
    %v5519 = vunpack.c.l.b16 %v5454
    %v5520 = vunpack.c.l.b16 %v5455
    %v5521 = vunpack.c.l.b16 %v5456
    %v5522 = vunpack.c.l.b16 %v5457
    %v5523 = vunpack.c.l.b16 %v5458
    %v5524 = vunpack.c.l.b16 %v5459
    %v5525 = vunpack.c.l.b16 %v5460
    %v5526 = vunpack.c.l.b16 %v5461
    %v5527 = vunpack.c.l.b16 %v5462
    %v5528 = vunpack.c.l.b16 %v5463
    %v5529 = vunpack.c.l.b16 %v5464
    %v5530 = vunpack.c.l.b16 %v5465
    %v5531 = vunpack.c.l.b16 %v5466
    %v5532 = vunpack.c.l.b16 %v5467
    %v5533 = vpack.c.b16 %v5502, %v5501
    %v5534 = vpack.c.b16 %v5504, %v5503
    %v5535 = vpack.c.b16 %v5506, %v5505
    %v5536 = vpack.c.b16 %v5508, %v5507
    %v5537 = vpack.c.b16 %v5510, %v5509
    %v5538 = vpack.c.b16 %v5512, %v5511
    %v5539 = vpack.c.b16 %v5514, %v5513
    %v5540 = vpack.c.b16 %v5516, %v5515
    %v5541 = vpack.c.b16 %v5518, %v5517
    %v5542 = vpack.c.b16 %v5520, %v5519
    %v5543 = vpack.c.b16 %v5522, %v5521
    %v5544 = vpack.c.b16 %v5524, %v5523
    %v5545 = vpack.c.b16 %v5526, %v5525
    %v5546 = vpack.c.b16 %v5528, %v5527
    %v5547 = vpack.c.b16 %v5530, %v5529
    %v5548 = vpack.c.b16 %v5532, %v5531
    %5565 = vmatprep.subr.bf16.mxu0 0
    %5566 = vmatpush1.bf16.msra.mxu0 %v5533
    %5567 = vmatprep.subr.bf16.mxu0 0
    %5568 = vmatpush1.bf16.msra.mxu0 %v5534
    %5569 = vmatprep.subr.bf16.mxu0 0
    %5570 = vmatpush1.bf16.msra.mxu0 %v5535
    %5571 = vmatprep.subr.bf16.mxu0 0
    %5572 = vmatpush1.bf16.msra.mxu0 %v5536
    %5573 = vmatprep.subr.bf16.mxu0 0
    %5574 = vmatpush1.bf16.msra.mxu0 %v5537
    %5575 = vmatprep.subr.bf16.mxu0 0
    %5576 = vmatpush1.bf16.msra.mxu0 %v5538
    %5577 = vmatprep.subr.bf16.mxu0 0
    %5578 = vmatpush1.bf16.msra.mxu0 %v5539
    %5579 = vmatprep.subr.bf16.mxu0 0
    %5580 = vmatpush1.bf16.msra.mxu0 %v5540
    %5581 = vmatprep.subr.bf16.mxu0 0
    %5582 = vmatpush1.bf16.msra.mxu0 %v5541
    %5583 = vmatprep.subr.bf16.mxu0 0
    %5584 = vmatpush1.bf16.msra.mxu0 %v5542
    %5585 = vmatprep.subr.bf16.mxu0 0
    %5586 = vmatpush1.bf16.msra.mxu0 %v5543
    %5587 = vmatprep.subr.bf16.mxu0 0
    %5588 = vmatpush1.bf16.msra.mxu0 %v5544
    %5589 = vmatprep.subr.bf16.mxu0 0
    %5590 = vmatpush1.bf16.msra.mxu0 %v5545
    %5591 = vmatprep.subr.bf16.mxu0 0
    %5592 = vmatpush1.bf16.msra.mxu0 %v5546
    %5593 = vmatprep.subr.bf16.mxu0 0
    %5594 = vmatpush1.bf16.msra.mxu0 %v5547
    %5595 = vmatprep.subr.bf16.mxu0 0
    %5596 = vmatpush1.bf16.msra.mxu0 %v5548
    %5597 = vmatprep.mubr.bf16.mxu0 %v5435
    %5598 = vmatmul.mubr.bf16.gmra.mrb[0].mxu0 %v5434
    %v5599 = vpop.f32.mrb[0].mxu0
    %v5600 = vadd.f32 %v5468, %v5599
    %v5601 = vpop.f32.mrb[0].mxu0
    %v5602 = vpop.f32.mrb[0].mxu0
    %v5603 = vpop.f32.mrb[0].mxu0
    %5604 = vdwg.mxu0
    %5605 = vst [vmem:[#allocation2] sm:$0x1] %v5600
    // Predicated region
    $region38: #{_dqn_forward.1} parent=1 // pred_check
      _
    $region39: #{_dqn_forward.1} parent=1 // pred_check_branch
      %5607 = sbr.rel (0) target = $region41
    $region40: #{_dqn_forward.1} parent=1 // pred_region
      %s5609 = ssub.s32 16, 16
      %5610 = vsyncadd [#allocation3], %s5609
      %s5612 = sshll.u32 [#allocation2], 4
      %s5613 = int_to_ptr.vmem [resolvable:$true] %s5612
      %5615 = dma.vmem_to_hbm [thread:$0]  %s5613, 16, %s9, [#allocation3]
    $region41: #{_dqn_forward.1} parent=1 // pred_fallthru
      _
    // Predicated region
    $region42: #{_dqn_forward.1} parent=1 // pred_check
      _
    $region43: #{_dqn_forward.1} parent=1 // pred_check_branch
      %5617 = sbr.rel (0) target = $region45
    $region44: #{_dqn_forward.1} parent=1 // pred_region
      %5618 = dma.done [#allocation3], 16
    $region45: #{_dqn_forward.1} parent=1 // pred_fallthru
      _
    %5619 = vsyncpa [#allocation3], 1

</llo_original>
